<compile_context>
chip_gen: v7x
topology: tpu7x:2x2x1
jax: 0.10.0
libtpu: 0.0.40
codegen_flags: <defaults>
</compile_context>

<pallas_src>
import functools
import math

import jax
import jax.numpy as jnp
from jax.experimental import pallas as pl
from jax.experimental.pallas import tpu as pltpu

EMBED_DIM = 32
NUM_HEADS = 4
NUM_LAYERS = 2
SEQ = 8          # <= PositionalEncoding max_len (10)
BATCH = 2
HEAD_DIM = EMBED_DIM // NUM_HEADS
EPS = 1e-5       # PyTorch LayerNorm default eps
NEG_INF = -1e9   # additive key-padding mask value
LANE = 128       # lane width of the parameter slab


# ----------------------------- shared math helpers -----------------------------

def _layernorm(y, w, b):
    # single-pass: var = E[x^2] - mean^2 (one fewer cross-lane reduction)
    mean = jnp.mean(y, axis=-1, keepdims=True)
    mean_sq = jnp.mean(y * y, axis=-1, keepdims=True)
    var = mean_sq - mean * mean
    return (y - mean) * jax.lax.rsqrt(var + EPS) * w + b


def _softmax_last(s, approx):
    m = jnp.max(s, axis=-1, keepdims=True)
    e = jnp.exp(s - m)
    denom = jnp.sum(e, axis=-1, keepdims=True)
    if approx:
        return e * pl.reciprocal(denom, approx=True)
    return e / denom


def _forward_math(x2, mask_b, slab, offsets, *, batch, seq, approx):
    """Shared math for the Pallas kernel body and the pure-JAX reference.

    x2:      (B*S, E) f32 rows (batch folded into the row/sublane dim)
    mask_b:  (B, 1, S) f32 additive key-padding bias (0 keep / -1e9 ignore)
    slab:    sliceable (rows, 128) parameter slab (Ref in-kernel, jnp array in ref path)
    offsets: static dict name -> (row_offset, rows, cols)
    """
    E, H, D = EMBED_DIM, NUM_HEADS, HEAD_DIM

    def getp(name):
        r0, r, c = offsets[name]
        return slab[r0:r0 + r, :c]

    pe = getp("pe")                                                     # (S, E)
    x = x2 * math.sqrt(E) + jnp.concatenate([pe] * batch, axis=0)       # dropout = identity

    inv_sqrt_d = 1.0 / math.sqrt(D)
    for li in range(NUM_LAYERS):
        w_in, b_in = getp(f"l{li}_in_w"), getp(f"l{li}_in_b")           # (E,3E), (1,3E)
        w_out, b_out = getp(f"l{li}_out_w"), getp(f"l{li}_out_b")       # (E,E), (1,E)
        ln_w, ln_b = getp(f"l{li}_ln_w"), getp(f"l{li}_ln_b")

        qkv = jnp.dot(x, w_in, preferred_element_type=jnp.float32) + b_in   # (B*S, 3E)
        q, k, v = qkv[:, :E], qkv[:, E:2 * E], qkv[:, 2 * E:]

        per_batch = []
        for b in range(batch):
            rows = slice(b * seq, (b + 1) * seq)
            bias_b = mask_b[b]                                          # (1, S)
            acc = None
            for h in range(H):
                cols = slice(h * D, (h + 1) * D)
                qh, kh, vh = q[rows, cols], k[rows, cols], v[rows, cols]
                scores = jnp.einsum("qd,kd->qk", qh, kh,
                                    preferred_element_type=jnp.float32) * inv_sqrt_d
                attn = _softmax_last(scores + bias_b, approx)           # (S, S)
                ctx = jnp.dot(attn, vh, preferred_element_type=jnp.float32)   # (S, D)
                # fold head output directly through its slice of the out-proj
                contrib = jnp.dot(ctx, w_out[cols, :],
                                  preferred_element_type=jnp.float32)   # (S, E)
                acc = contrib if acc is None else acc + contrib
            per_batch.append(acc)
        attn_out = jnp.concatenate(per_batch, axis=0) + b_out           # (B*S, E)
        x = _layernorm(x + attn_out, ln_w, ln_b)

    fc_out = jnp.dot(x, getp("fc_w"), preferred_element_type=jnp.float32) + getp("fc_b")
    x = _layernorm(x + fc_out, getp("n2_w"), getp("n2_b"))

    # dynamic pooling: softmax over the sequence dim per batch element
    hdn = jnp.tanh(jnp.dot(x, getp("dp_w1"), preferred_element_type=jnp.float32)
                   + getp("dp_b1"))                                     # (B*S, E)
    logits = (jnp.dot(hdn, getp("dp_w2"), preferred_element_type=jnp.float32)
              + getp("dp_b2"))                                          # (B*S, 1)

    pooled = []
    for b in range(batch):
        rows = slice(b * seq, (b + 1) * seq)
        lb = logits[rows, :]                                            # (S, 1)
        m = jnp.max(lb, axis=0, keepdims=True)
        e = jnp.exp(lb - m)
        denom = jnp.sum(e, axis=0, keepdims=True)
        wts = e * (pl.reciprocal(denom, approx=True) if approx else 1.0 / denom)
        pooled.append(jnp.sum(wts * x[rows, :], axis=0, keepdims=True))  # (1, E)
    global_repr = jnp.concatenate(pooled, axis=0)                        # (B, E)

    # global pool MLP: E -> E/2 -> E
    g = jnp.maximum(jnp.dot(global_repr, getp("gp_w1"),
                            preferred_element_type=jnp.float32) + getp("gp_b1"), 0.0)
    return jnp.dot(g, getp("gp_w2"), preferred_element_type=jnp.float32) + getp("gp_b2")


# ------------------------------ Pallas kernel ------------------------------

def optimized_mha_kernel(x_ref, mask_ref, slab_ref, o_ref, *, offsets, batch, seq):
    out = _forward_math(x_ref[...], mask_ref[...], slab_ref, offsets,
                        batch=batch, seq=seq, approx=True)
    o_ref[...] = out.astype(o_ref.dtype)


def optimized_mha(x, key_padding_mask, slab, offsets):
    """x: (B, S, E) f32; key_padding_mask: (B, S) bool (True = ignore key)."""
    B, S, E = x.shape
    x2 = x.reshape(B * S, E).astype(jnp.float32)                  # fold batch into rows (host-side)
    mask_b = jnp.where(key_padding_mask, NEG_INF, 0.0).astype(jnp.float32)[:, None, :]  # (B,1,S)

    kernel = functools.partial(optimized_mha_kernel, offsets=offsets, batch=B, seq=S)
    return pl.pallas_call(
        kernel,
        out_shape=jax.ShapeDtypeStruct((B, E), jnp.float32),
        grid=(1,),                                                # single program: no per-batch grid overhead
        in_specs=[
            pl.BlockSpec((B * S, E), lambda i: (0, 0)),           # activations, batch folded
            pl.BlockSpec((B, 1, S), lambda i: (0, 0, 0)),         # key-padding bias
            pl.BlockSpec(slab.shape, lambda i: (0, 0)),           # one parameter slab = one DMA
        ],
        out_specs=pl.BlockSpec((B, E), lambda i: (0, 0)),         # single full (B, E) store
        compiler_params=pltpu.CompilerParams(
            dimension_semantics=("arbitrary",)),
    )(x2, mask_b, slab)


# ------------------------- parameter / input setup --------------------------

def _positional_encoding(seq, d_model):
    position = jnp.arange(seq, dtype=jnp.float32)[:, None]
    div_term = jnp.exp(jnp.arange(0, d_model, 2, dtype=jnp.float32)
                       * (-math.log(10000.0) / d_model))
    pe = jnp.zeros((seq, d_model), jnp.float32)
    pe = pe.at[:, 0::2].set(jnp.sin(position * div_term))
    pe = pe.at[:, 1::2].set(jnp.cos(position * div_term))
    return pe


def _make_param_entries(key):
    """All weights stored pre-transposed (in_dim, out_dim) so the kernel never transposes."""
    E, H2 = EMBED_DIM, EMBED_DIM // 2
    keys = iter(jax.random.split(key, 64))

    def w(shape, scale=0.1):
        return (scale * jax.random.normal(next(keys), shape)).astype(jnp.float32)

    entries = [("pe", _positional_encoding(SEQ, EMBED_DIM))]
    for li in range(NUM_LAYERS):
        entries += [
            (f"l{li}_in_w", w((E, 3 * E))),        # in_proj weight (pre-transposed)
            (f"l{li}_in_b", w((3 * E,))),          # in_proj bias
            (f"l{li}_out_w", w((E, E))),           # out_proj weight (pre-transposed)
            (f"l{li}_out_b", w((E,))),             # out_proj bias
            (f"l{li}_ln_w", jnp.ones((E,), jnp.float32)),   # LayerNorm gamma
            (f"l{li}_ln_b", jnp.zeros((E,), jnp.float32)),  # LayerNorm beta
        ]
    entries += [
        ("fc_w", w((E, E))), ("fc_b", w((E,))),                              # fc Linear
        ("n2_w", jnp.ones((E,), jnp.float32)), ("n2_b", jnp.zeros((E,), jnp.float32)),  # norm2
        ("dp_w1", w((E, E))), ("dp_b1", w((E,))),                            # dynamic_pooling Linear 1
        ("dp_w2", w((E, 1))), ("dp_b2", w((1,))),                            # dynamic_pooling Linear 2 (E -> 1)
        ("gp_w1", w((E, H2))), ("gp_b1", w((H2,))),                          # global_pool Linear 1 (E -> E/2)
        ("gp_w2", w((H2, E))), ("gp_b2", w((E,))),                           # global_pool Linear 2 (E/2 -> E)
    ]
    return entries


def _pack_slab(entries):
    """Pack every parameter into one lane-padded (rows, 128) f32 slab (single DMA)."""
    offsets, blocks, row = {}, [], 0
    for name, arr in entries:
        arr = jnp.asarray(arr, jnp.float32)
        if arr.ndim == 1:
            arr = arr[None, :]
        r, c = arr.shape
        assert c <= LANE
        rpad = -(-r // 8) * 8                     # 8-sublane-aligned start per param
        block = jnp.zeros((rpad, LANE), jnp.float32).at[:r, :c].set(arr)
        offsets[name] = (row, r, c)
        blocks.append(block)
        row += rpad
    return jnp.concatenate(blocks, axis=0), offsets


def _reference(x, key_padding_mask, slab, offsets):
    B, S, E = x.shape
    mask_b = jnp.where(key_padding_mask, NEG_INF, 0.0).astype(jnp.float32)[:, None, :]
    return _forward_math(x.reshape(B * S, E).astype(jnp.float32), mask_b, slab, offsets,
                         batch=B, seq=S, approx=False)


if __name__ == "__main__":
    root = jax.random.PRNGKey(0)
    k_x, k_p = jax.random.split(root)

    x = jax.random.normal(k_x, (BATCH, SEQ, EMBED_DIM), jnp.float32)
    # key_padding_mask: True = ignore that key position
    key_padding_mask = jnp.array(
        [[False] * SEQ,
         [False] * (SEQ - 2) + [True] * 2], dtype=bool)

    slab, offsets = _pack_slab(_make_param_entries(k_p))

    out = optimized_mha(x, key_padding_mask, slab, offsets)
    out = jax.block_until_ready(out)

    ref = _reference(x, key_padding_mask, slab, offsets)
    assert out.shape == (BATCH, EMBED_DIM)
    # tolerance covers the approx-reciprocal softmax in the kernel vs exact divide in the reference
    assert jnp.allclose(out, ref, atol=2e-3, rtol=2e-3), "mismatch vs JAX reference"

    print("KERNEL_OK")
</pallas_src>

<mosaic_0001>
module attributes {stable_mosaic.version = 11 : i64} {
  func.func @optimized_mha_kernel(%arg0: i32, %arg1: memref<16x32xf32, #tpu.memory_space<vmem>>, %arg2: memref<2x1x8xf32, #tpu.memory_space<vmem>>, %arg3: memref<400x128xf32, #tpu.memory_space<vmem>>, %arg4: memref<2x32xf32, #tpu.memory_space<vmem>>) attributes {dimension_semantics = [#tpu.dimension_semantics<arbitrary>], iteration_bounds = array<i64: 1>, scalar_prefetch = 0 : i64, scratch_operands = 0 : i64, tpu.core_type = #tpu.core_type<tc>, window_params = [{pipeline_mode = #tpu.pipeline_mode<synchronous>, transform_indices = @transform_0, window_bounds = array<i64: 16, 32>}, {pipeline_mode = #tpu.pipeline_mode<synchronous>, transform_indices = @transform_1, window_bounds = array<i64: 2, 1, 8>}, {pipeline_mode = #tpu.pipeline_mode<synchronous>, transform_indices = @transform_2, window_bounds = array<i64: 400, 128>}, {pipeline_mode = #tpu.pipeline_mode<synchronous>, transform_indices = @transform_3, window_bounds = array<i64: 2, 32>}]} {
    %c0 = arith.constant 0 : index
    %c0_0 = arith.constant 0 : index
    %0 = vector.load %arg1[%c0, %c0_0] : memref<16x32xf32, #tpu.memory_space<vmem>>, vector<16x32xf32>
    %c0_1 = arith.constant 0 : index
    %c0_2 = arith.constant 0 : index
    %c0_3 = arith.constant 0 : index
    %1 = vector.load %arg2[%c0_1, %c0_2, %c0_3] : memref<2x1x8xf32, #tpu.memory_space<vmem>>, vector<2x1x8xf32>
    %c0_4 = arith.constant 0 : index
    %c0_5 = arith.constant 0 : index
    %2 = vector.load %arg3[%c0_4, %c0_5] : memref<400x128xf32, #tpu.memory_space<vmem>>, vector<8x32xf32>
    %cst = arith.constant 5.65685415 : f32
    %3 = vector.broadcast %cst : f32 to vector<16x32xf32>
    %4 = arith.mulf %0, %3 : vector<16x32xf32>
    %5 = tpu.concatenate %2, %2 in 0 : vector<8x32xf32>, vector<8x32xf32> -> vector<16x32xf32>
    %6 = arith.addf %4, %5 : vector<16x32xf32>
    %c8 = arith.constant 8 : index
    %c0_6 = arith.constant 0 : index
    %7 = vector.load %arg3[%c8, %c0_6] : memref<400x128xf32, #tpu.memory_space<vmem>>, vector<32x96xf32>
    %c40 = arith.constant 40 : index
    %c0_7 = arith.constant 0 : index
    %8 = vector.load %arg3[%c40, %c0_7] : memref<400x128xf32, #tpu.memory_space<vmem>>, vector<1x96xf32>
    %c48 = arith.constant 48 : index
    %c0_8 = arith.constant 0 : index
    %9 = vector.load %arg3[%c48, %c0_8] : memref<400x128xf32, #tpu.memory_space<vmem>>, vector<32x32xf32>
    %c80 = arith.constant 80 : index
    %c0_9 = arith.constant 0 : index
    %10 = vector.load %arg3[%c80, %c0_9] : memref<400x128xf32, #tpu.memory_space<vmem>>, vector<1x32xf32>
    %c88 = arith.constant 88 : index
    %c0_10 = arith.constant 0 : index
    %11 = vector.load %arg3[%c88, %c0_10] : memref<400x128xf32, #tpu.memory_space<vmem>>, vector<1x32xf32>
    %c96 = arith.constant 96 : index
    %c0_11 = arith.constant 0 : index
    %12 = vector.load %arg3[%c96, %c0_11] : memref<400x128xf32, #tpu.memory_space<vmem>>, vector<1x32xf32>
    %cst_12 = arith.constant dense<0.000000e+00> : vector<16x96xf32>
    %13 = tpu.matmul %6, %7, %cst_12 {dimension_numbers = #tpu.dot_dimension_numbers<[1], [0], [0], [1], [0, 0, 1, 1], [], []>} : vector<16x32xf32>, vector<32x96xf32>, vector<16x96xf32> -> vector<16x96xf32>
    %14 = vector.broadcast %8 : vector<1x96xf32> to vector<16x96xf32>
    %15 = arith.addf %13, %14 : vector<16x96xf32>
    %16 = vector.extract_strided_slice %15 {offsets = [0, 0], sizes = [16, 32], strides = [1, 1]} : vector<16x96xf32> to vector<16x32xf32>
    %17 = vector.extract_strided_slice %15 {offsets = [0, 32], sizes = [16, 32], strides = [1, 1]} : vector<16x96xf32> to vector<16x32xf32>
    %18 = vector.extract_strided_slice %15 {offsets = [0, 64], sizes = [16, 32], strides = [1, 1]} : vector<16x96xf32> to vector<16x32xf32>
    %19 = vector.extract_strided_slice %1 {offsets = [0, 0, 0], sizes = [1, 1, 8], strides = [1, 1, 1]} : vector<2x1x8xf32> to vector<1x1x8xf32>
    %20 = vector.shape_cast %19 : vector<1x1x8xf32> to vector<1x8xf32>
    %21 = vector.extract_strided_slice %16 {offsets = [0, 0], sizes = [8, 8], strides = [1, 1]} : vector<16x32xf32> to vector<8x8xf32>
    %22 = vector.extract_strided_slice %17 {offsets = [0, 0], sizes = [8, 8], strides = [1, 1]} : vector<16x32xf32> to vector<8x8xf32>
    %23 = vector.extract_strided_slice %18 {offsets = [0, 0], sizes = [8, 8], strides = [1, 1]} : vector<16x32xf32> to vector<8x8xf32>
    "tpu.trace_start"() <{level = 10 : i32, message = "qd,kd->qk"}> : () -> ()
    %cst_13 = arith.constant dense<0.000000e+00> : vector<8x8xf32>
    %24 = tpu.matmul %21, %22, %cst_13 {dimension_numbers = #tpu.dot_dimension_numbers<[1], [1], [0], [0], [0, 0, 1, 0], [], []>} : vector<8x8xf32>, vector<8x8xf32>, vector<8x8xf32> -> vector<8x8xf32>
    "tpu.trace_stop"() : () -> ()
    %cst_14 = arith.constant 0.353553385 : f32
    %25 = vector.broadcast %cst_14 : f32 to vector<8x8xf32>
    %26 = arith.mulf %24, %25 : vector<8x8xf32>
    %27 = vector.broadcast %20 : vector<1x8xf32> to vector<8x8xf32>
    %28 = arith.addf %26, %27 : vector<8x8xf32>
    %cst_15 = arith.constant dense<0xFF800000> : vector<8xf32>
    %29 = vector.multi_reduction <maximumf>, %28, %cst_15 [1] : vector<8x8xf32> to vector<8xf32>
    %30 = vector.shape_cast %29 : vector<8xf32> to vector<8x1xf32>
    %31 = vector.broadcast %30 : vector<8x1xf32> to vector<8x8xf32>
    %32 = arith.subf %28, %31 : vector<8x8xf32>
    %33 = math.exp %32 : vector<8x8xf32>
    %cst_16 = arith.constant dense<0.000000e+00> : vector<8xf32>
    %34 = vector.multi_reduction <add>, %33, %cst_16 [1] : vector<8x8xf32> to vector<8xf32>
    %35 = vector.shape_cast %34 : vector<8xf32> to vector<8x1xf32>
    %36 = tpu.reciprocal %35 {approx = true} : vector<8x1xf32> -> vector<8x1xf32>
    %37 = vector.broadcast %36 : vector<8x1xf32> to vector<8x8xf32>
    %38 = arith.mulf %33, %37 : vector<8x8xf32>
    %cst_17 = arith.constant dense<0.000000e+00> : vector<8x8xf32>
    %39 = tpu.matmul %38, %23, %cst_17 {dimension_numbers = #tpu.dot_dimension_numbers<[1], [0], [0], [1], [0, 0, 1, 1], [], []>} : vector<8x8xf32>, vector<8x8xf32>, vector<8x8xf32> -> vector<8x8xf32>
    %40 = vector.extract_strided_slice %9 {offsets = [0, 0], sizes = [8, 32], strides = [1, 1]} : vector<32x32xf32> to vector<8x32xf32>
    %cst_18 = arith.constant dense<0.000000e+00> : vector<8x32xf32>
    %41 = tpu.matmul %39, %40, %cst_18 {dimension_numbers = #tpu.dot_dimension_numbers<[1], [0], [0], [1], [0, 0, 1, 1], [], []>} : vector<8x8xf32>, vector<8x32xf32>, vector<8x32xf32> -> vector<8x32xf32>
    %42 = vector.extract_strided_slice %16 {offsets = [0, 8], sizes = [8, 8], strides = [1, 1]} : vector<16x32xf32> to vector<8x8xf32>
    %43 = vector.extract_strided_slice %17 {offsets = [0, 8], sizes = [8, 8], strides = [1, 1]} : vector<16x32xf32> to vector<8x8xf32>
    %44 = vector.extract_strided_slice %18 {offsets = [0, 8], sizes = [8, 8], strides = [1, 1]} : vector<16x32xf32> to vector<8x8xf32>
    "tpu.trace_start"() <{level = 10 : i32, message = "qd,kd->qk"}> : () -> ()
    %cst_19 = arith.constant dense<0.000000e+00> : vector<8x8xf32>
    %45 = tpu.matmul %42, %43, %cst_19 {dimension_numbers = #tpu.dot_dimension_numbers<[1], [1], [0], [0], [0, 0, 1, 0], [], []>} : vector<8x8xf32>, vector<8x8xf32>, vector<8x8xf32> -> vector<8x8xf32>
    "tpu.trace_stop"() : () -> ()
    %cst_20 = arith.constant 0.353553385 : f32
    %46 = vector.broadcast %cst_20 : f32 to vector<8x8xf32>
    %47 = arith.mulf %45, %46 : vector<8x8xf32>
    %48 = vector.broadcast %20 : vector<1x8xf32> to vector<8x8xf32>
    %49 = arith.addf %47, %48 : vector<8x8xf32>
    %cst_21 = arith.constant dense<0xFF800000> : vector<8xf32>
    %50 = vector.multi_reduction <maximumf>, %49, %cst_21 [1] : vector<8x8xf32> to vector<8xf32>
    %51 = vector.shape_cast %50 : vector<8xf32> to vector<8x1xf32>
    %52 = vector.broadcast %51 : vector<8x1xf32> to vector<8x8xf32>
    %53 = arith.subf %49, %52 : vector<8x8xf32>
    %54 = math.exp %53 : vector<8x8xf32>
    %cst_22 = arith.constant dense<0.000000e+00> : vector<8xf32>
    %55 = vector.multi_reduction <add>, %54, %cst_22 [1] : vector<8x8xf32> to vector<8xf32>
    %56 = vector.shape_cast %55 : vector<8xf32> to vector<8x1xf32>
    %57 = tpu.reciprocal %56 {approx = true} : vector<8x1xf32> -> vector<8x1xf32>
    %58 = vector.broadcast %57 : vector<8x1xf32> to vector<8x8xf32>
    %59 = arith.mulf %54, %58 : vector<8x8xf32>
    %cst_23 = arith.constant dense<0.000000e+00> : vector<8x8xf32>
    %60 = tpu.matmul %59, %44, %cst_23 {dimension_numbers = #tpu.dot_dimension_numbers<[1], [0], [0], [1], [0, 0, 1, 1], [], []>} : vector<8x8xf32>, vector<8x8xf32>, vector<8x8xf32> -> vector<8x8xf32>
    %61 = vector.extract_strided_slice %9 {offsets = [8, 0], sizes = [8, 32], strides = [1, 1]} : vector<32x32xf32> to vector<8x32xf32>
    %cst_24 = arith.constant dense<0.000000e+00> : vector<8x32xf32>
    %62 = tpu.matmul %60, %61, %cst_24 {dimension_numbers = #tpu.dot_dimension_numbers<[1], [0], [0], [1], [0, 0, 1, 1], [], []>} : vector<8x8xf32>, vector<8x32xf32>, vector<8x32xf32> -> vector<8x32xf32>
    %63 = arith.addf %41, %62 : vector<8x32xf32>
    %64 = vector.extract_strided_slice %16 {offsets = [0, 16], sizes = [8, 8], strides = [1, 1]} : vector<16x32xf32> to vector<8x8xf32>
    %65 = vector.extract_strided_slice %17 {offsets = [0, 16], sizes = [8, 8], strides = [1, 1]} : vector<16x32xf32> to vector<8x8xf32>
    %66 = vector.extract_strided_slice %18 {offsets = [0, 16], sizes = [8, 8], strides = [1, 1]} : vector<16x32xf32> to vector<8x8xf32>
    "tpu.trace_start"() <{level = 10 : i32, message = "qd,kd->qk"}> : () -> ()
    %cst_25 = arith.constant dense<0.000000e+00> : vector<8x8xf32>
    %67 = tpu.matmul %64, %65, %cst_25 {dimension_numbers = #tpu.dot_dimension_numbers<[1], [1], [0], [0], [0, 0, 1, 0], [], []>} : vector<8x8xf32>, vector<8x8xf32>, vector<8x8xf32> -> vector<8x8xf32>
    "tpu.trace_stop"() : () -> ()
    %cst_26 = arith.constant 0.353553385 : f32
    %68 = vector.broadcast %cst_26 : f32 to vector<8x8xf32>
    %69 = arith.mulf %67, %68 : vector<8x8xf32>
    %70 = vector.broadcast %20 : vector<1x8xf32> to vector<8x8xf32>
    %71 = arith.addf %69, %70 : vector<8x8xf32>
    %cst_27 = arith.constant dense<0xFF800000> : vector<8xf32>
    %72 = vector.multi_reduction <maximumf>, %71, %cst_27 [1] : vector<8x8xf32> to vector<8xf32>
    %73 = vector.shape_cast %72 : vector<8xf32> to vector<8x1xf32>
    %74 = vector.broadcast %73 : vector<8x1xf32> to vector<8x8xf32>
    %75 = arith.subf %71, %74 : vector<8x8xf32>
    %76 = math.exp %75 : vector<8x8xf32>
    %cst_28 = arith.constant dense<0.000000e+00> : vector<8xf32>
    %77 = vector.multi_reduction <add>, %76, %cst_28 [1] : vector<8x8xf32> to vector<8xf32>
    %78 = vector.shape_cast %77 : vector<8xf32> to vector<8x1xf32>
    %79 = tpu.reciprocal %78 {approx = true} : vector<8x1xf32> -> vector<8x1xf32>
    %80 = vector.broadcast %79 : vector<8x1xf32> to vector<8x8xf32>
    %81 = arith.mulf %76, %80 : vector<8x8xf32>
    %cst_29 = arith.constant dense<0.000000e+00> : vector<8x8xf32>
    %82 = tpu.matmul %81, %66, %cst_29 {dimension_numbers = #tpu.dot_dimension_numbers<[1], [0], [0], [1], [0, 0, 1, 1], [], []>} : vector<8x8xf32>, vector<8x8xf32>, vector<8x8xf32> -> vector<8x8xf32>
    %83 = vector.extract_strided_slice %9 {offsets = [16, 0], sizes = [8, 32], strides = [1, 1]} : vector<32x32xf32> to vector<8x32xf32>
    %cst_30 = arith.constant dense<0.000000e+00> : vector<8x32xf32>
    %84 = tpu.matmul %82, %83, %cst_30 {dimension_numbers = #tpu.dot_dimension_numbers<[1], [0], [0], [1], [0, 0, 1, 1], [], []>} : vector<8x8xf32>, vector<8x32xf32>, vector<8x32xf32> -> vector<8x32xf32>
    %85 = arith.addf %63, %84 : vector<8x32xf32>
    %86 = vector.extract_strided_slice %16 {offsets = [0, 24], sizes = [8, 8], strides = [1, 1]} : vector<16x32xf32> to vector<8x8xf32>
    %87 = vector.extract_strided_slice %17 {offsets = [0, 24], sizes = [8, 8], strides = [1, 1]} : vector<16x32xf32> to vector<8x8xf32>
    %88 = vector.extract_strided_slice %18 {offsets = [0, 24], sizes = [8, 8], strides = [1, 1]} : vector<16x32xf32> to vector<8x8xf32>
    "tpu.trace_start"() <{level = 10 : i32, message = "qd,kd->qk"}> : () -> ()
    %cst_31 = arith.constant dense<0.000000e+00> : vector<8x8xf32>
    %89 = tpu.matmul %86, %87, %cst_31 {dimension_numbers = #tpu.dot_dimension_numbers<[1], [1], [0], [0], [0, 0, 1, 0], [], []>} : vector<8x8xf32>, vector<8x8xf32>, vector<8x8xf32> -> vector<8x8xf32>
    "tpu.trace_stop"() : () -> ()
    %cst_32 = arith.constant 0.353553385 : f32
    %90 = vector.broadcast %cst_32 : f32 to vector<8x8xf32>
    %91 = arith.mulf %89, %90 : vector<8x8xf32>
    %92 = vector.broadcast %20 : vector<1x8xf32> to vector<8x8xf32>
    %93 = arith.addf %91, %92 : vector<8x8xf32>
    %cst_33 = arith.constant dense<0xFF800000> : vector<8xf32>
    %94 = vector.multi_reduction <maximumf>, %93, %cst_33 [1] : vector<8x8xf32> to vector<8xf32>
    %95 = vector.shape_cast %94 : vector<8xf32> to vector<8x1xf32>
    %96 = vector.broadcast %95 : vector<8x1xf32> to vector<8x8xf32>
    %97 = arith.subf %93, %96 : vector<8x8xf32>
    %98 = math.exp %97 : vector<8x8xf32>
    %cst_34 = arith.constant dense<0.000000e+00> : vector<8xf32>
    %99 = vector.multi_reduction <add>, %98, %cst_34 [1] : vector<8x8xf32> to vector<8xf32>
    %100 = vector.shape_cast %99 : vector<8xf32> to vector<8x1xf32>
    %101 = tpu.reciprocal %100 {approx = true} : vector<8x1xf32> -> vector<8x1xf32>
    %102 = vector.broadcast %101 : vector<8x1xf32> to vector<8x8xf32>
    %103 = arith.mulf %98, %102 : vector<8x8xf32>
    %cst_35 = arith.constant dense<0.000000e+00> : vector<8x8xf32>
    %104 = tpu.matmul %103, %88, %cst_35 {dimension_numbers = #tpu.dot_dimension_numbers<[1], [0], [0], [1], [0, 0, 1, 1], [], []>} : vector<8x8xf32>, vector<8x8xf32>, vector<8x8xf32> -> vector<8x8xf32>
    %105 = vector.extract_strided_slice %9 {offsets = [24, 0], sizes = [8, 32], strides = [1, 1]} : vector<32x32xf32> to vector<8x32xf32>
    %cst_36 = arith.constant dense<0.000000e+00> : vector<8x32xf32>
    %106 = tpu.matmul %104, %105, %cst_36 {dimension_numbers = #tpu.dot_dimension_numbers<[1], [0], [0], [1], [0, 0, 1, 1], [], []>} : vector<8x8xf32>, vector<8x32xf32>, vector<8x32xf32> -> vector<8x32xf32>
    %107 = arith.addf %85, %106 : vector<8x32xf32>
    %108 = vector.extract_strided_slice %1 {offsets = [1, 0, 0], sizes = [1, 1, 8], strides = [1, 1, 1]} : vector<2x1x8xf32> to vector<1x1x8xf32>
    %109 = vector.shape_cast %108 : vector<1x1x8xf32> to vector<1x8xf32>
    %110 = vector.extract_strided_slice %16 {offsets = [8, 0], sizes = [8, 8], strides = [1, 1]} : vector<16x32xf32> to vector<8x8xf32>
    %111 = vector.extract_strided_slice %17 {offsets = [8, 0], sizes = [8, 8], strides = [1, 1]} : vector<16x32xf32> to vector<8x8xf32>
    %112 = vector.extract_strided_slice %18 {offsets = [8, 0], sizes = [8, 8], strides = [1, 1]} : vector<16x32xf32> to vector<8x8xf32>
    "tpu.trace_start"() <{level = 10 : i32, message = "qd,kd->qk"}> : () -> ()
    %cst_37 = arith.constant dense<0.000000e+00> : vector<8x8xf32>
    %113 = tpu.matmul %110, %111, %cst_37 {dimension_numbers = #tpu.dot_dimension_numbers<[1], [1], [0], [0], [0, 0, 1, 0], [], []>} : vector<8x8xf32>, vector<8x8xf32>, vector<8x8xf32> -> vector<8x8xf32>
    "tpu.trace_stop"() : () -> ()
    %cst_38 = arith.constant 0.353553385 : f32
    %114 = vector.broadcast %cst_38 : f32 to vector<8x8xf32>
    %115 = arith.mulf %113, %114 : vector<8x8xf32>
    %116 = vector.broadcast %109 : vector<1x8xf32> to vector<8x8xf32>
    %117 = arith.addf %115, %116 : vector<8x8xf32>
    %cst_39 = arith.constant dense<0xFF800000> : vector<8xf32>
    %118 = vector.multi_reduction <maximumf>, %117, %cst_39 [1] : vector<8x8xf32> to vector<8xf32>
    %119 = vector.shape_cast %118 : vector<8xf32> to vector<8x1xf32>
    %120 = vector.broadcast %119 : vector<8x1xf32> to vector<8x8xf32>
    %121 = arith.subf %117, %120 : vector<8x8xf32>
    %122 = math.exp %121 : vector<8x8xf32>
    %cst_40 = arith.constant dense<0.000000e+00> : vector<8xf32>
    %123 = vector.multi_reduction <add>, %122, %cst_40 [1] : vector<8x8xf32> to vector<8xf32>
    %124 = vector.shape_cast %123 : vector<8xf32> to vector<8x1xf32>
    %125 = tpu.reciprocal %124 {approx = true} : vector<8x1xf32> -> vector<8x1xf32>
    %126 = vector.broadcast %125 : vector<8x1xf32> to vector<8x8xf32>
    %127 = arith.mulf %122, %126 : vector<8x8xf32>
    %cst_41 = arith.constant dense<0.000000e+00> : vector<8x8xf32>
    %128 = tpu.matmul %127, %112, %cst_41 {dimension_numbers = #tpu.dot_dimension_numbers<[1], [0], [0], [1], [0, 0, 1, 1], [], []>} : vector<8x8xf32>, vector<8x8xf32>, vector<8x8xf32> -> vector<8x8xf32>
    %129 = vector.extract_strided_slice %9 {offsets = [0, 0], sizes = [8, 32], strides = [1, 1]} : vector<32x32xf32> to vector<8x32xf32>
    %cst_42 = arith.constant dense<0.000000e+00> : vector<8x32xf32>
    %130 = tpu.matmul %128, %129, %cst_42 {dimension_numbers = #tpu.dot_dimension_numbers<[1], [0], [0], [1], [0, 0, 1, 1], [], []>} : vector<8x8xf32>, vector<8x32xf32>, vector<8x32xf32> -> vector<8x32xf32>
    %131 = vector.extract_strided_slice %16 {offsets = [8, 8], sizes = [8, 8], strides = [1, 1]} : vector<16x32xf32> to vector<8x8xf32>
    %132 = vector.extract_strided_slice %17 {offsets = [8, 8], sizes = [8, 8], strides = [1, 1]} : vector<16x32xf32> to vector<8x8xf32>
    %133 = vector.extract_strided_slice %18 {offsets = [8, 8], sizes = [8, 8], strides = [1, 1]} : vector<16x32xf32> to vector<8x8xf32>
    "tpu.trace_start"() <{level = 10 : i32, message = "qd,kd->qk"}> : () -> ()
    %cst_43 = arith.constant dense<0.000000e+00> : vector<8x8xf32>
    %134 = tpu.matmul %131, %132, %cst_43 {dimension_numbers = #tpu.dot_dimension_numbers<[1], [1], [0], [0], [0, 0, 1, 0], [], []>} : vector<8x8xf32>, vector<8x8xf32>, vector<8x8xf32> -> vector<8x8xf32>
    "tpu.trace_stop"() : () -> ()
    %cst_44 = arith.constant 0.353553385 : f32
    %135 = vector.broadcast %cst_44 : f32 to vector<8x8xf32>
    %136 = arith.mulf %134, %135 : vector<8x8xf32>
    %137 = vector.broadcast %109 : vector<1x8xf32> to vector<8x8xf32>
    %138 = arith.addf %136, %137 : vector<8x8xf32>
    %cst_45 = arith.constant dense<0xFF800000> : vector<8xf32>
    %139 = vector.multi_reduction <maximumf>, %138, %cst_45 [1] : vector<8x8xf32> to vector<8xf32>
    %140 = vector.shape_cast %139 : vector<8xf32> to vector<8x1xf32>
    %141 = vector.broadcast %140 : vector<8x1xf32> to vector<8x8xf32>
    %142 = arith.subf %138, %141 : vector<8x8xf32>
    %143 = math.exp %142 : vector<8x8xf32>
    %cst_46 = arith.constant dense<0.000000e+00> : vector<8xf32>
    %144 = vector.multi_reduction <add>, %143, %cst_46 [1] : vector<8x8xf32> to vector<8xf32>
    %145 = vector.shape_cast %144 : vector<8xf32> to vector<8x1xf32>
    %146 = tpu.reciprocal %145 {approx = true} : vector<8x1xf32> -> vector<8x1xf32>
    %147 = vector.broadcast %146 : vector<8x1xf32> to vector<8x8xf32>
    %148 = arith.mulf %143, %147 : vector<8x8xf32>
    %cst_47 = arith.constant dense<0.000000e+00> : vector<8x8xf32>
    %149 = tpu.matmul %148, %133, %cst_47 {dimension_numbers = #tpu.dot_dimension_numbers<[1], [0], [0], [1], [0, 0, 1, 1], [], []>} : vector<8x8xf32>, vector<8x8xf32>, vector<8x8xf32> -> vector<8x8xf32>
    %150 = vector.extract_strided_slice %9 {offsets = [8, 0], sizes = [8, 32], strides = [1, 1]} : vector<32x32xf32> to vector<8x32xf32>
    %cst_48 = arith.constant dense<0.000000e+00> : vector<8x32xf32>
    %151 = tpu.matmul %149, %150, %cst_48 {dimension_numbers = #tpu.dot_dimension_numbers<[1], [0], [0], [1], [0, 0, 1, 1], [], []>} : vector<8x8xf32>, vector<8x32xf32>, vector<8x32xf32> -> vector<8x32xf32>
    %152 = arith.addf %130, %151 : vector<8x32xf32>
    %153 = vector.extract_strided_slice %16 {offsets = [8, 16], sizes = [8, 8], strides = [1, 1]} : vector<16x32xf32> to vector<8x8xf32>
    %154 = vector.extract_strided_slice %17 {offsets = [8, 16], sizes = [8, 8], strides = [1, 1]} : vector<16x32xf32> to vector<8x8xf32>
    %155 = vector.extract_strided_slice %18 {offsets = [8, 16], sizes = [8, 8], strides = [1, 1]} : vector<16x32xf32> to vector<8x8xf32>
    "tpu.trace_start"() <{level = 10 : i32, message = "qd,kd->qk"}> : () -> ()
    %cst_49 = arith.constant dense<0.000000e+00> : vector<8x8xf32>
    %156 = tpu.matmul %153, %154, %cst_49 {dimension_numbers = #tpu.dot_dimension_numbers<[1], [1], [0], [0], [0, 0, 1, 0], [], []>} : vector<8x8xf32>, vector<8x8xf32>, vector<8x8xf32> -> vector<8x8xf32>
    "tpu.trace_stop"() : () -> ()
    %cst_50 = arith.constant 0.353553385 : f32
    %157 = vector.broadcast %cst_50 : f32 to vector<8x8xf32>
    %158 = arith.mulf %156, %157 : vector<8x8xf32>
    %159 = vector.broadcast %109 : vector<1x8xf32> to vector<8x8xf32>
    %160 = arith.addf %158, %159 : vector<8x8xf32>
    %cst_51 = arith.constant dense<0xFF800000> : vector<8xf32>
    %161 = vector.multi_reduction <maximumf>, %160, %cst_51 [1] : vector<8x8xf32> to vector<8xf32>
    %162 = vector.shape_cast %161 : vector<8xf32> to vector<8x1xf32>
    %163 = vector.broadcast %162 : vector<8x1xf32> to vector<8x8xf32>
    %164 = arith.subf %160, %163 : vector<8x8xf32>
    %165 = math.exp %164 : vector<8x8xf32>
    %cst_52 = arith.constant dense<0.000000e+00> : vector<8xf32>
    %166 = vector.multi_reduction <add>, %165, %cst_52 [1] : vector<8x8xf32> to vector<8xf32>
    %167 = vector.shape_cast %166 : vector<8xf32> to vector<8x1xf32>
    %168 = tpu.reciprocal %167 {approx = true} : vector<8x1xf32> -> vector<8x1xf32>
    %169 = vector.broadcast %168 : vector<8x1xf32> to vector<8x8xf32>
    %170 = arith.mulf %165, %169 : vector<8x8xf32>
    %cst_53 = arith.constant dense<0.000000e+00> : vector<8x8xf32>
    %171 = tpu.matmul %170, %155, %cst_53 {dimension_numbers = #tpu.dot_dimension_numbers<[1], [0], [0], [1], [0, 0, 1, 1], [], []>} : vector<8x8xf32>, vector<8x8xf32>, vector<8x8xf32> -> vector<8x8xf32>
    %172 = vector.extract_strided_slice %9 {offsets = [16, 0], sizes = [8, 32], strides = [1, 1]} : vector<32x32xf32> to vector<8x32xf32>
    %cst_54 = arith.constant dense<0.000000e+00> : vector<8x32xf32>
    %173 = tpu.matmul %171, %172, %cst_54 {dimension_numbers = #tpu.dot_dimension_numbers<[1], [0], [0], [1], [0, 0, 1, 1], [], []>} : vector<8x8xf32>, vector<8x32xf32>, vector<8x32xf32> -> vector<8x32xf32>
    %174 = arith.addf %152, %173 : vector<8x32xf32>
    %175 = vector.extract_strided_slice %16 {offsets = [8, 24], sizes = [8, 8], strides = [1, 1]} : vector<16x32xf32> to vector<8x8xf32>
    %176 = vector.extract_strided_slice %17 {offsets = [8, 24], sizes = [8, 8], strides = [1, 1]} : vector<16x32xf32> to vector<8x8xf32>
    %177 = vector.extract_strided_slice %18 {offsets = [8, 24], sizes = [8, 8], strides = [1, 1]} : vector<16x32xf32> to vector<8x8xf32>
    "tpu.trace_start"() <{level = 10 : i32, message = "qd,kd->qk"}> : () -> ()
    %cst_55 = arith.constant dense<0.000000e+00> : vector<8x8xf32>
    %178 = tpu.matmul %175, %176, %cst_55 {dimension_numbers = #tpu.dot_dimension_numbers<[1], [1], [0], [0], [0, 0, 1, 0], [], []>} : vector<8x8xf32>, vector<8x8xf32>, vector<8x8xf32> -> vector<8x8xf32>
    "tpu.trace_stop"() : () -> ()
    %cst_56 = arith.constant 0.353553385 : f32
    %179 = vector.broadcast %cst_56 : f32 to vector<8x8xf32>
    %180 = arith.mulf %178, %179 : vector<8x8xf32>
    %181 = vector.broadcast %109 : vector<1x8xf32> to vector<8x8xf32>
    %182 = arith.addf %180, %181 : vector<8x8xf32>
    %cst_57 = arith.constant dense<0xFF800000> : vector<8xf32>
    %183 = vector.multi_reduction <maximumf>, %182, %cst_57 [1] : vector<8x8xf32> to vector<8xf32>
    %184 = vector.shape_cast %183 : vector<8xf32> to vector<8x1xf32>
    %185 = vector.broadcast %184 : vector<8x1xf32> to vector<8x8xf32>
    %186 = arith.subf %182, %185 : vector<8x8xf32>
    %187 = math.exp %186 : vector<8x8xf32>
    %cst_58 = arith.constant dense<0.000000e+00> : vector<8xf32>
    %188 = vector.multi_reduction <add>, %187, %cst_58 [1] : vector<8x8xf32> to vector<8xf32>
    %189 = vector.shape_cast %188 : vector<8xf32> to vector<8x1xf32>
    %190 = tpu.reciprocal %189 {approx = true} : vector<8x1xf32> -> vector<8x1xf32>
    %191 = vector.broadcast %190 : vector<8x1xf32> to vector<8x8xf32>
    %192 = arith.mulf %187, %191 : vector<8x8xf32>
    %cst_59 = arith.constant dense<0.000000e+00> : vector<8x8xf32>
    %193 = tpu.matmul %192, %177, %cst_59 {dimension_numbers = #tpu.dot_dimension_numbers<[1], [0], [0], [1], [0, 0, 1, 1], [], []>} : vector<8x8xf32>, vector<8x8xf32>, vector<8x8xf32> -> vector<8x8xf32>
    %194 = vector.extract_strided_slice %9 {offsets = [24, 0], sizes = [8, 32], strides = [1, 1]} : vector<32x32xf32> to vector<8x32xf32>
    %cst_60 = arith.constant dense<0.000000e+00> : vector<8x32xf32>
    %195 = tpu.matmul %193, %194, %cst_60 {dimension_numbers = #tpu.dot_dimension_numbers<[1], [0], [0], [1], [0, 0, 1, 1], [], []>} : vector<8x8xf32>, vector<8x32xf32>, vector<8x32xf32> -> vector<8x32xf32>
    %196 = arith.addf %174, %195 : vector<8x32xf32>
    %197 = tpu.concatenate %107, %196 in 0 : vector<8x32xf32>, vector<8x32xf32> -> vector<16x32xf32>
    %198 = vector.broadcast %10 : vector<1x32xf32> to vector<16x32xf32>
    %199 = arith.addf %197, %198 : vector<16x32xf32>
    %200 = arith.addf %6, %199 : vector<16x32xf32>
    %cst_61 = arith.constant dense<0.000000e+00> : vector<16xf32>
    %201 = vector.multi_reduction <add>, %200, %cst_61 [1] : vector<16x32xf32> to vector<16xf32>
    %202 = vector.shape_cast %201 : vector<16xf32> to vector<16x1xf32>
    %cst_62 = arith.constant 3.200000e+01 : f32
    %203 = vector.broadcast %cst_62 : f32 to vector<16x1xf32>
    %204 = arith.divf %202, %203 : vector<16x1xf32>
    %205 = arith.mulf %200, %200 : vector<16x32xf32>
    %cst_63 = arith.constant dense<0.000000e+00> : vector<16xf32>
    %206 = vector.multi_reduction <add>, %205, %cst_63 [1] : vector<16x32xf32> to vector<16xf32>
    %207 = vector.shape_cast %206 : vector<16xf32> to vector<16x1xf32>
    %cst_64 = arith.constant 3.200000e+01 : f32
    %208 = vector.broadcast %cst_64 : f32 to vector<16x1xf32>
    %209 = arith.divf %207, %208 : vector<16x1xf32>
    %210 = arith.mulf %204, %204 : vector<16x1xf32>
    %211 = arith.subf %209, %210 : vector<16x1xf32>
    %212 = vector.broadcast %204 : vector<16x1xf32> to vector<16x32xf32>
    %213 = arith.subf %200, %212 : vector<16x32xf32>
    %cst_65 = arith.constant 9.99999974E-6 : f32
    %214 = vector.broadcast %cst_65 : f32 to vector<16x1xf32>
    %215 = arith.addf %211, %214 : vector<16x1xf32>
    %216 = math.rsqrt %215 : vector<16x1xf32>
    %217 = vector.broadcast %216 : vector<16x1xf32> to vector<16x32xf32>
    %218 = arith.mulf %213, %217 : vector<16x32xf32>
    %219 = vector.broadcast %11 : vector<1x32xf32> to vector<16x32xf32>
    %220 = arith.mulf %218, %219 : vector<16x32xf32>
    %221 = vector.broadcast %12 : vector<1x32xf32> to vector<16x32xf32>
    %222 = arith.addf %220, %221 : vector<16x32xf32>
    %c104 = arith.constant 104 : index
    %c0_66 = arith.constant 0 : index
    %223 = vector.load %arg3[%c104, %c0_66] : memref<400x128xf32, #tpu.memory_space<vmem>>, vector<32x96xf32>
    %c136 = arith.constant 136 : index
    %c0_67 = arith.constant 0 : index
    %224 = vector.load %arg3[%c136, %c0_67] : memref<400x128xf32, #tpu.memory_space<vmem>>, vector<1x96xf32>
    %c144 = arith.constant 144 : index
    %c0_68 = arith.constant 0 : index
    %225 = vector.load %arg3[%c144, %c0_68] : memref<400x128xf32, #tpu.memory_space<vmem>>, vector<32x32xf32>
    %c176 = arith.constant 176 : index
    %c0_69 = arith.constant 0 : index
    %226 = vector.load %arg3[%c176, %c0_69] : memref<400x128xf32, #tpu.memory_space<vmem>>, vector<1x32xf32>
    %c184 = arith.constant 184 : index
    %c0_70 = arith.constant 0 : index
    %227 = vector.load %arg3[%c184, %c0_70] : memref<400x128xf32, #tpu.memory_space<vmem>>, vector<1x32xf32>
    %c192 = arith.constant 192 : index
    %c0_71 = arith.constant 0 : index
    %228 = vector.load %arg3[%c192, %c0_71] : memref<400x128xf32, #tpu.memory_space<vmem>>, vector<1x32xf32>
    %cst_72 = arith.constant dense<0.000000e+00> : vector<16x96xf32>
    %229 = tpu.matmul %222, %223, %cst_72 {dimension_numbers = #tpu.dot_dimension_numbers<[1], [0], [0], [1], [0, 0, 1, 1], [], []>} : vector<16x32xf32>, vector<32x96xf32>, vector<16x96xf32> -> vector<16x96xf32>
    %230 = vector.broadcast %224 : vector<1x96xf32> to vector<16x96xf32>
    %231 = arith.addf %229, %230 : vector<16x96xf32>
    %232 = vector.extract_strided_slice %231 {offsets = [0, 0], sizes = [16, 32], strides = [1, 1]} : vector<16x96xf32> to vector<16x32xf32>
    %233 = vector.extract_strided_slice %231 {offsets = [0, 32], sizes = [16, 32], strides = [1, 1]} : vector<16x96xf32> to vector<16x32xf32>
    %234 = vector.extract_strided_slice %231 {offsets = [0, 64], sizes = [16, 32], strides = [1, 1]} : vector<16x96xf32> to vector<16x32xf32>
    %235 = vector.extract_strided_slice %1 {offsets = [0, 0, 0], sizes = [1, 1, 8], strides = [1, 1, 1]} : vector<2x1x8xf32> to vector<1x1x8xf32>
    %236 = vector.shape_cast %235 : vector<1x1x8xf32> to vector<1x8xf32>
    %237 = vector.extract_strided_slice %232 {offsets = [0, 0], sizes = [8, 8], strides = [1, 1]} : vector<16x32xf32> to vector<8x8xf32>
    %238 = vector.extract_strided_slice %233 {offsets = [0, 0], sizes = [8, 8], strides = [1, 1]} : vector<16x32xf32> to vector<8x8xf32>
    %239 = vector.extract_strided_slice %234 {offsets = [0, 0], sizes = [8, 8], strides = [1, 1]} : vector<16x32xf32> to vector<8x8xf32>
    "tpu.trace_start"() <{level = 10 : i32, message = "qd,kd->qk"}> : () -> ()
    %cst_73 = arith.constant dense<0.000000e+00> : vector<8x8xf32>
    %240 = tpu.matmul %237, %238, %cst_73 {dimension_numbers = #tpu.dot_dimension_numbers<[1], [1], [0], [0], [0, 0, 1, 0], [], []>} : vector<8x8xf32>, vector<8x8xf32>, vector<8x8xf32> -> vector<8x8xf32>
    "tpu.trace_stop"() : () -> ()
    %cst_74 = arith.constant 0.353553385 : f32
    %241 = vector.broadcast %cst_74 : f32 to vector<8x8xf32>
    %242 = arith.mulf %240, %241 : vector<8x8xf32>
    %243 = vector.broadcast %236 : vector<1x8xf32> to vector<8x8xf32>
    %244 = arith.addf %242, %243 : vector<8x8xf32>
    %cst_75 = arith.constant dense<0xFF800000> : vector<8xf32>
    %245 = vector.multi_reduction <maximumf>, %244, %cst_75 [1] : vector<8x8xf32> to vector<8xf32>
    %246 = vector.shape_cast %245 : vector<8xf32> to vector<8x1xf32>
    %247 = vector.broadcast %246 : vector<8x1xf32> to vector<8x8xf32>
    %248 = arith.subf %244, %247 : vector<8x8xf32>
    %249 = math.exp %248 : vector<8x8xf32>
    %cst_76 = arith.constant dense<0.000000e+00> : vector<8xf32>
    %250 = vector.multi_reduction <add>, %249, %cst_76 [1] : vector<8x8xf32> to vector<8xf32>
    %251 = vector.shape_cast %250 : vector<8xf32> to vector<8x1xf32>
    %252 = tpu.reciprocal %251 {approx = true} : vector<8x1xf32> -> vector<8x1xf32>
    %253 = vector.broadcast %252 : vector<8x1xf32> to vector<8x8xf32>
    %254 = arith.mulf %249, %253 : vector<8x8xf32>
    %cst_77 = arith.constant dense<0.000000e+00> : vector<8x8xf32>
    %255 = tpu.matmul %254, %239, %cst_77 {dimension_numbers = #tpu.dot_dimension_numbers<[1], [0], [0], [1], [0, 0, 1, 1], [], []>} : vector<8x8xf32>, vector<8x8xf32>, vector<8x8xf32> -> vector<8x8xf32>
    %256 = vector.extract_strided_slice %225 {offsets = [0, 0], sizes = [8, 32], strides = [1, 1]} : vector<32x32xf32> to vector<8x32xf32>
    %cst_78 = arith.constant dense<0.000000e+00> : vector<8x32xf32>
    %257 = tpu.matmul %255, %256, %cst_78 {dimension_numbers = #tpu.dot_dimension_numbers<[1], [0], [0], [1], [0, 0, 1, 1], [], []>} : vector<8x8xf32>, vector<8x32xf32>, vector<8x32xf32> -> vector<8x32xf32>
    %258 = vector.extract_strided_slice %232 {offsets = [0, 8], sizes = [8, 8], strides = [1, 1]} : vector<16x32xf32> to vector<8x8xf32>
    %259 = vector.extract_strided_slice %233 {offsets = [0, 8], sizes = [8, 8], strides = [1, 1]} : vector<16x32xf32> to vector<8x8xf32>
    %260 = vector.extract_strided_slice %234 {offsets = [0, 8], sizes = [8, 8], strides = [1, 1]} : vector<16x32xf32> to vector<8x8xf32>
    "tpu.trace_start"() <{level = 10 : i32, message = "qd,kd->qk"}> : () -> ()
    %cst_79 = arith.constant dense<0.000000e+00> : vector<8x8xf32>
    %261 = tpu.matmul %258, %259, %cst_79 {dimension_numbers = #tpu.dot_dimension_numbers<[1], [1], [0], [0], [0, 0, 1, 0], [], []>} : vector<8x8xf32>, vector<8x8xf32>, vector<8x8xf32> -> vector<8x8xf32>
    "tpu.trace_stop"() : () -> ()
    %cst_80 = arith.constant 0.353553385 : f32
    %262 = vector.broadcast %cst_80 : f32 to vector<8x8xf32>
    %263 = arith.mulf %261, %262 : vector<8x8xf32>
    %264 = vector.broadcast %236 : vector<1x8xf32> to vector<8x8xf32>
    %265 = arith.addf %263, %264 : vector<8x8xf32>
    %cst_81 = arith.constant dense<0xFF800000> : vector<8xf32>
    %266 = vector.multi_reduction <maximumf>, %265, %cst_81 [1] : vector<8x8xf32> to vector<8xf32>
    %267 = vector.shape_cast %266 : vector<8xf32> to vector<8x1xf32>
    %268 = vector.broadcast %267 : vector<8x1xf32> to vector<8x8xf32>
    %269 = arith.subf %265, %268 : vector<8x8xf32>
    %270 = math.exp %269 : vector<8x8xf32>
    %cst_82 = arith.constant dense<0.000000e+00> : vector<8xf32>
    %271 = vector.multi_reduction <add>, %270, %cst_82 [1] : vector<8x8xf32> to vector<8xf32>
    %272 = vector.shape_cast %271 : vector<8xf32> to vector<8x1xf32>
    %273 = tpu.reciprocal %272 {approx = true} : vector<8x1xf32> -> vector<8x1xf32>
    %274 = vector.broadcast %273 : vector<8x1xf32> to vector<8x8xf32>
    %275 = arith.mulf %270, %274 : vector<8x8xf32>
    %cst_83 = arith.constant dense<0.000000e+00> : vector<8x8xf32>
    %276 = tpu.matmul %275, %260, %cst_83 {dimension_numbers = #tpu.dot_dimension_numbers<[1], [0], [0], [1], [0, 0, 1, 1], [], []>} : vector<8x8xf32>, vector<8x8xf32>, vector<8x8xf32> -> vector<8x8xf32>
    %277 = vector.extract_strided_slice %225 {offsets = [8, 0], sizes = [8, 32], strides = [1, 1]} : vector<32x32xf32> to vector<8x32xf32>
    %cst_84 = arith.constant dense<0.000000e+00> : vector<8x32xf32>
    %278 = tpu.matmul %276, %277, %cst_84 {dimension_numbers = #tpu.dot_dimension_numbers<[1], [0], [0], [1], [0, 0, 1, 1], [], []>} : vector<8x8xf32>, vector<8x32xf32>, vector<8x32xf32> -> vector<8x32xf32>
    %279 = arith.addf %257, %278 : vector<8x32xf32>
    %280 = vector.extract_strided_slice %232 {offsets = [0, 16], sizes = [8, 8], strides = [1, 1]} : vector<16x32xf32> to vector<8x8xf32>
    %281 = vector.extract_strided_slice %233 {offsets = [0, 16], sizes = [8, 8], strides = [1, 1]} : vector<16x32xf32> to vector<8x8xf32>
    %282 = vector.extract_strided_slice %234 {offsets = [0, 16], sizes = [8, 8], strides = [1, 1]} : vector<16x32xf32> to vector<8x8xf32>
    "tpu.trace_start"() <{level = 10 : i32, message = "qd,kd->qk"}> : () -> ()
    %cst_85 = arith.constant dense<0.000000e+00> : vector<8x8xf32>
    %283 = tpu.matmul %280, %281, %cst_85 {dimension_numbers = #tpu.dot_dimension_numbers<[1], [1], [0], [0], [0, 0, 1, 0], [], []>} : vector<8x8xf32>, vector<8x8xf32>, vector<8x8xf32> -> vector<8x8xf32>
    "tpu.trace_stop"() : () -> ()
    %cst_86 = arith.constant 0.353553385 : f32
    %284 = vector.broadcast %cst_86 : f32 to vector<8x8xf32>
    %285 = arith.mulf %283, %284 : vector<8x8xf32>
    %286 = vector.broadcast %236 : vector<1x8xf32> to vector<8x8xf32>
    %287 = arith.addf %285, %286 : vector<8x8xf32>
    %cst_87 = arith.constant dense<0xFF800000> : vector<8xf32>
    %288 = vector.multi_reduction <maximumf>, %287, %cst_87 [1] : vector<8x8xf32> to vector<8xf32>
    %289 = vector.shape_cast %288 : vector<8xf32> to vector<8x1xf32>
    %290 = vector.broadcast %289 : vector<8x1xf32> to vector<8x8xf32>
    %291 = arith.subf %287, %290 : vector<8x8xf32>
    %292 = math.exp %291 : vector<8x8xf32>
    %cst_88 = arith.constant dense<0.000000e+00> : vector<8xf32>
    %293 = vector.multi_reduction <add>, %292, %cst_88 [1] : vector<8x8xf32> to vector<8xf32>
    %294 = vector.shape_cast %293 : vector<8xf32> to vector<8x1xf32>
    %295 = tpu.reciprocal %294 {approx = true} : vector<8x1xf32> -> vector<8x1xf32>
    %296 = vector.broadcast %295 : vector<8x1xf32> to vector<8x8xf32>
    %297 = arith.mulf %292, %296 : vector<8x8xf32>
    %cst_89 = arith.constant dense<0.000000e+00> : vector<8x8xf32>
    %298 = tpu.matmul %297, %282, %cst_89 {dimension_numbers = #tpu.dot_dimension_numbers<[1], [0], [0], [1], [0, 0, 1, 1], [], []>} : vector<8x8xf32>, vector<8x8xf32>, vector<8x8xf32> -> vector<8x8xf32>
    %299 = vector.extract_strided_slice %225 {offsets = [16, 0], sizes = [8, 32], strides = [1, 1]} : vector<32x32xf32> to vector<8x32xf32>
    %cst_90 = arith.constant dense<0.000000e+00> : vector<8x32xf32>
    %300 = tpu.matmul %298, %299, %cst_90 {dimension_numbers = #tpu.dot_dimension_numbers<[1], [0], [0], [1], [0, 0, 1, 1], [], []>} : vector<8x8xf32>, vector<8x32xf32>, vector<8x32xf32> -> vector<8x32xf32>
    %301 = arith.addf %279, %300 : vector<8x32xf32>
    %302 = vector.extract_strided_slice %232 {offsets = [0, 24], sizes = [8, 8], strides = [1, 1]} : vector<16x32xf32> to vector<8x8xf32>
    %303 = vector.extract_strided_slice %233 {offsets = [0, 24], sizes = [8, 8], strides = [1, 1]} : vector<16x32xf32> to vector<8x8xf32>
    %304 = vector.extract_strided_slice %234 {offsets = [0, 24], sizes = [8, 8], strides = [1, 1]} : vector<16x32xf32> to vector<8x8xf32>
    "tpu.trace_start"() <{level = 10 : i32, message = "qd,kd->qk"}> : () -> ()
    %cst_91 = arith.constant dense<0.000000e+00> : vector<8x8xf32>
    %305 = tpu.matmul %302, %303, %cst_91 {dimension_numbers = #tpu.dot_dimension_numbers<[1], [1], [0], [0], [0, 0, 1, 0], [], []>} : vector<8x8xf32>, vector<8x8xf32>, vector<8x8xf32> -> vector<8x8xf32>
    "tpu.trace_stop"() : () -> ()
    %cst_92 = arith.constant 0.353553385 : f32
    %306 = vector.broadcast %cst_92 : f32 to vector<8x8xf32>
    %307 = arith.mulf %305, %306 : vector<8x8xf32>
    %308 = vector.broadcast %236 : vector<1x8xf32> to vector<8x8xf32>
    %309 = arith.addf %307, %308 : vector<8x8xf32>
    %cst_93 = arith.constant dense<0xFF800000> : vector<8xf32>
    %310 = vector.multi_reduction <maximumf>, %309, %cst_93 [1] : vector<8x8xf32> to vector<8xf32>
    %311 = vector.shape_cast %310 : vector<8xf32> to vector<8x1xf32>
    %312 = vector.broadcast %311 : vector<8x1xf32> to vector<8x8xf32>
    %313 = arith.subf %309, %312 : vector<8x8xf32>
    %314 = math.exp %313 : vector<8x8xf32>
    %cst_94 = arith.constant dense<0.000000e+00> : vector<8xf32>
    %315 = vector.multi_reduction <add>, %314, %cst_94 [1] : vector<8x8xf32> to vector<8xf32>
    %316 = vector.shape_cast %315 : vector<8xf32> to vector<8x1xf32>
    %317 = tpu.reciprocal %316 {approx = true} : vector<8x1xf32> -> vector<8x1xf32>
    %318 = vector.broadcast %317 : vector<8x1xf32> to vector<8x8xf32>
    %319 = arith.mulf %314, %318 : vector<8x8xf32>
    %cst_95 = arith.constant dense<0.000000e+00> : vector<8x8xf32>
    %320 = tpu.matmul %319, %304, %cst_95 {dimension_numbers = #tpu.dot_dimension_numbers<[1], [0], [0], [1], [0, 0, 1, 1], [], []>} : vector<8x8xf32>, vector<8x8xf32>, vector<8x8xf32> -> vector<8x8xf32>
    %321 = vector.extract_strided_slice %225 {offsets = [24, 0], sizes = [8, 32], strides = [1, 1]} : vector<32x32xf32> to vector<8x32xf32>
    %cst_96 = arith.constant dense<0.000000e+00> : vector<8x32xf32>
    %322 = tpu.matmul %320, %321, %cst_96 {dimension_numbers = #tpu.dot_dimension_numbers<[1], [0], [0], [1], [0, 0, 1, 1], [], []>} : vector<8x8xf32>, vector<8x32xf32>, vector<8x32xf32> -> vector<8x32xf32>
    %323 = arith.addf %301, %322 : vector<8x32xf32>
    %324 = vector.extract_strided_slice %1 {offsets = [1, 0, 0], sizes = [1, 1, 8], strides = [1, 1, 1]} : vector<2x1x8xf32> to vector<1x1x8xf32>
    %325 = vector.shape_cast %324 : vector<1x1x8xf32> to vector<1x8xf32>
    %326 = vector.extract_strided_slice %232 {offsets = [8, 0], sizes = [8, 8], strides = [1, 1]} : vector<16x32xf32> to vector<8x8xf32>
    %327 = vector.extract_strided_slice %233 {offsets = [8, 0], sizes = [8, 8], strides = [1, 1]} : vector<16x32xf32> to vector<8x8xf32>
    %328 = vector.extract_strided_slice %234 {offsets = [8, 0], sizes = [8, 8], strides = [1, 1]} : vector<16x32xf32> to vector<8x8xf32>
    "tpu.trace_start"() <{level = 10 : i32, message = "qd,kd->qk"}> : () -> ()
    %cst_97 = arith.constant dense<0.000000e+00> : vector<8x8xf32>
    %329 = tpu.matmul %326, %327, %cst_97 {dimension_numbers = #tpu.dot_dimension_numbers<[1], [1], [0], [0], [0, 0, 1, 0], [], []>} : vector<8x8xf32>, vector<8x8xf32>, vector<8x8xf32> -> vector<8x8xf32>
    "tpu.trace_stop"() : () -> ()
    %cst_98 = arith.constant 0.353553385 : f32
    %330 = vector.broadcast %cst_98 : f32 to vector<8x8xf32>
    %331 = arith.mulf %329, %330 : vector<8x8xf32>
    %332 = vector.broadcast %325 : vector<1x8xf32> to vector<8x8xf32>
    %333 = arith.addf %331, %332 : vector<8x8xf32>
    %cst_99 = arith.constant dense<0xFF800000> : vector<8xf32>
    %334 = vector.multi_reduction <maximumf>, %333, %cst_99 [1] : vector<8x8xf32> to vector<8xf32>
    %335 = vector.shape_cast %334 : vector<8xf32> to vector<8x1xf32>
    %336 = vector.broadcast %335 : vector<8x1xf32> to vector<8x8xf32>
    %337 = arith.subf %333, %336 : vector<8x8xf32>
    %338 = math.exp %337 : vector<8x8xf32>
    %cst_100 = arith.constant dense<0.000000e+00> : vector<8xf32>
    %339 = vector.multi_reduction <add>, %338, %cst_100 [1] : vector<8x8xf32> to vector<8xf32>
    %340 = vector.shape_cast %339 : vector<8xf32> to vector<8x1xf32>
    %341 = tpu.reciprocal %340 {approx = true} : vector<8x1xf32> -> vector<8x1xf32>
    %342 = vector.broadcast %341 : vector<8x1xf32> to vector<8x8xf32>
    %343 = arith.mulf %338, %342 : vector<8x8xf32>
    %cst_101 = arith.constant dense<0.000000e+00> : vector<8x8xf32>
    %344 = tpu.matmul %343, %328, %cst_101 {dimension_numbers = #tpu.dot_dimension_numbers<[1], [0], [0], [1], [0, 0, 1, 1], [], []>} : vector<8x8xf32>, vector<8x8xf32>, vector<8x8xf32> -> vector<8x8xf32>
    %345 = vector.extract_strided_slice %225 {offsets = [0, 0], sizes = [8, 32], strides = [1, 1]} : vector<32x32xf32> to vector<8x32xf32>
    %cst_102 = arith.constant dense<0.000000e+00> : vector<8x32xf32>
    %346 = tpu.matmul %344, %345, %cst_102 {dimension_numbers = #tpu.dot_dimension_numbers<[1], [0], [0], [1], [0, 0, 1, 1], [], []>} : vector<8x8xf32>, vector<8x32xf32>, vector<8x32xf32> -> vector<8x32xf32>
    %347 = vector.extract_strided_slice %232 {offsets = [8, 8], sizes = [8, 8], strides = [1, 1]} : vector<16x32xf32> to vector<8x8xf32>
    %348 = vector.extract_strided_slice %233 {offsets = [8, 8], sizes = [8, 8], strides = [1, 1]} : vector<16x32xf32> to vector<8x8xf32>
    %349 = vector.extract_strided_slice %234 {offsets = [8, 8], sizes = [8, 8], strides = [1, 1]} : vector<16x32xf32> to vector<8x8xf32>
    "tpu.trace_start"() <{level = 10 : i32, message = "qd,kd->qk"}> : () -> ()
    %cst_103 = arith.constant dense<0.000000e+00> : vector<8x8xf32>
    %350 = tpu.matmul %347, %348, %cst_103 {dimension_numbers = #tpu.dot_dimension_numbers<[1], [1], [0], [0], [0, 0, 1, 0], [], []>} : vector<8x8xf32>, vector<8x8xf32>, vector<8x8xf32> -> vector<8x8xf32>
    "tpu.trace_stop"() : () -> ()
    %cst_104 = arith.constant 0.353553385 : f32
    %351 = vector.broadcast %cst_104 : f32 to vector<8x8xf32>
    %352 = arith.mulf %350, %351 : vector<8x8xf32>
    %353 = vector.broadcast %325 : vector<1x8xf32> to vector<8x8xf32>
    %354 = arith.addf %352, %353 : vector<8x8xf32>
    %cst_105 = arith.constant dense<0xFF800000> : vector<8xf32>
    %355 = vector.multi_reduction <maximumf>, %354, %cst_105 [1] : vector<8x8xf32> to vector<8xf32>
    %356 = vector.shape_cast %355 : vector<8xf32> to vector<8x1xf32>
    %357 = vector.broadcast %356 : vector<8x1xf32> to vector<8x8xf32>
    %358 = arith.subf %354, %357 : vector<8x8xf32>
    %359 = math.exp %358 : vector<8x8xf32>
    %cst_106 = arith.constant dense<0.000000e+00> : vector<8xf32>
    %360 = vector.multi_reduction <add>, %359, %cst_106 [1] : vector<8x8xf32> to vector<8xf32>
    %361 = vector.shape_cast %360 : vector<8xf32> to vector<8x1xf32>
    %362 = tpu.reciprocal %361 {approx = true} : vector<8x1xf32> -> vector<8x1xf32>
    %363 = vector.broadcast %362 : vector<8x1xf32> to vector<8x8xf32>
    %364 = arith.mulf %359, %363 : vector<8x8xf32>
    %cst_107 = arith.constant dense<0.000000e+00> : vector<8x8xf32>
    %365 = tpu.matmul %364, %349, %cst_107 {dimension_numbers = #tpu.dot_dimension_numbers<[1], [0], [0], [1], [0, 0, 1, 1], [], []>} : vector<8x8xf32>, vector<8x8xf32>, vector<8x8xf32> -> vector<8x8xf32>
    %366 = vector.extract_strided_slice %225 {offsets = [8, 0], sizes = [8, 32], strides = [1, 1]} : vector<32x32xf32> to vector<8x32xf32>
    %cst_108 = arith.constant dense<0.000000e+00> : vector<8x32xf32>
    %367 = tpu.matmul %365, %366, %cst_108 {dimension_numbers = #tpu.dot_dimension_numbers<[1], [0], [0], [1], [0, 0, 1, 1], [], []>} : vector<8x8xf32>, vector<8x32xf32>, vector<8x32xf32> -> vector<8x32xf32>
    %368 = arith.addf %346, %367 : vector<8x32xf32>
    %369 = vector.extract_strided_slice %232 {offsets = [8, 16], sizes = [8, 8], strides = [1, 1]} : vector<16x32xf32> to vector<8x8xf32>
    %370 = vector.extract_strided_slice %233 {offsets = [8, 16], sizes = [8, 8], strides = [1, 1]} : vector<16x32xf32> to vector<8x8xf32>
    %371 = vector.extract_strided_slice %234 {offsets = [8, 16], sizes = [8, 8], strides = [1, 1]} : vector<16x32xf32> to vector<8x8xf32>
    "tpu.trace_start"() <{level = 10 : i32, message = "qd,kd->qk"}> : () -> ()
    %cst_109 = arith.constant dense<0.000000e+00> : vector<8x8xf32>
    %372 = tpu.matmul %369, %370, %cst_109 {dimension_numbers = #tpu.dot_dimension_numbers<[1], [1], [0], [0], [0, 0, 1, 0], [], []>} : vector<8x8xf32>, vector<8x8xf32>, vector<8x8xf32> -> vector<8x8xf32>
    "tpu.trace_stop"() : () -> ()
    %cst_110 = arith.constant 0.353553385 : f32
    %373 = vector.broadcast %cst_110 : f32 to vector<8x8xf32>
    %374 = arith.mulf %372, %373 : vector<8x8xf32>
    %375 = vector.broadcast %325 : vector<1x8xf32> to vector<8x8xf32>
    %376 = arith.addf %374, %375 : vector<8x8xf32>
    %cst_111 = arith.constant dense<0xFF800000> : vector<8xf32>
    %377 = vector.multi_reduction <maximumf>, %376, %cst_111 [1] : vector<8x8xf32> to vector<8xf32>
    %378 = vector.shape_cast %377 : vector<8xf32> to vector<8x1xf32>
    %379 = vector.broadcast %378 : vector<8x1xf32> to vector<8x8xf32>
    %380 = arith.subf %376, %379 : vector<8x8xf32>
    %381 = math.exp %380 : vector<8x8xf32>
    %cst_112 = arith.constant dense<0.000000e+00> : vector<8xf32>
    %382 = vector.multi_reduction <add>, %381, %cst_112 [1] : vector<8x8xf32> to vector<8xf32>
    %383 = vector.shape_cast %382 : vector<8xf32> to vector<8x1xf32>
    %384 = tpu.reciprocal %383 {approx = true} : vector<8x1xf32> -> vector<8x1xf32>
    %385 = vector.broadcast %384 : vector<8x1xf32> to vector<8x8xf32>
    %386 = arith.mulf %381, %385 : vector<8x8xf32>
    %cst_113 = arith.constant dense<0.000000e+00> : vector<8x8xf32>
    %387 = tpu.matmul %386, %371, %cst_113 {dimension_numbers = #tpu.dot_dimension_numbers<[1], [0], [0], [1], [0, 0, 1, 1], [], []>} : vector<8x8xf32>, vector<8x8xf32>, vector<8x8xf32> -> vector<8x8xf32>
    %388 = vector.extract_strided_slice %225 {offsets = [16, 0], sizes = [8, 32], strides = [1, 1]} : vector<32x32xf32> to vector<8x32xf32>
    %cst_114 = arith.constant dense<0.000000e+00> : vector<8x32xf32>
    %389 = tpu.matmul %387, %388, %cst_114 {dimension_numbers = #tpu.dot_dimension_numbers<[1], [0], [0], [1], [0, 0, 1, 1], [], []>} : vector<8x8xf32>, vector<8x32xf32>, vector<8x32xf32> -> vector<8x32xf32>
    %390 = arith.addf %368, %389 : vector<8x32xf32>
    %391 = vector.extract_strided_slice %232 {offsets = [8, 24], sizes = [8, 8], strides = [1, 1]} : vector<16x32xf32> to vector<8x8xf32>
    %392 = vector.extract_strided_slice %233 {offsets = [8, 24], sizes = [8, 8], strides = [1, 1]} : vector<16x32xf32> to vector<8x8xf32>
    %393 = vector.extract_strided_slice %234 {offsets = [8, 24], sizes = [8, 8], strides = [1, 1]} : vector<16x32xf32> to vector<8x8xf32>
    "tpu.trace_start"() <{level = 10 : i32, message = "qd,kd->qk"}> : () -> ()
    %cst_115 = arith.constant dense<0.000000e+00> : vector<8x8xf32>
    %394 = tpu.matmul %391, %392, %cst_115 {dimension_numbers = #tpu.dot_dimension_numbers<[1], [1], [0], [0], [0, 0, 1, 0], [], []>} : vector<8x8xf32>, vector<8x8xf32>, vector<8x8xf32> -> vector<8x8xf32>
    "tpu.trace_stop"() : () -> ()
    %cst_116 = arith.constant 0.353553385 : f32
    %395 = vector.broadcast %cst_116 : f32 to vector<8x8xf32>
    %396 = arith.mulf %394, %395 : vector<8x8xf32>
    %397 = vector.broadcast %325 : vector<1x8xf32> to vector<8x8xf32>
    %398 = arith.addf %396, %397 : vector<8x8xf32>
    %cst_117 = arith.constant dense<0xFF800000> : vector<8xf32>
    %399 = vector.multi_reduction <maximumf>, %398, %cst_117 [1] : vector<8x8xf32> to vector<8xf32>
    %400 = vector.shape_cast %399 : vector<8xf32> to vector<8x1xf32>
    %401 = vector.broadcast %400 : vector<8x1xf32> to vector<8x8xf32>
    %402 = arith.subf %398, %401 : vector<8x8xf32>
    %403 = math.exp %402 : vector<8x8xf32>
    %cst_118 = arith.constant dense<0.000000e+00> : vector<8xf32>
    %404 = vector.multi_reduction <add>, %403, %cst_118 [1] : vector<8x8xf32> to vector<8xf32>
    %405 = vector.shape_cast %404 : vector<8xf32> to vector<8x1xf32>
    %406 = tpu.reciprocal %405 {approx = true} : vector<8x1xf32> -> vector<8x1xf32>
    %407 = vector.broadcast %406 : vector<8x1xf32> to vector<8x8xf32>
    %408 = arith.mulf %403, %407 : vector<8x8xf32>
    %cst_119 = arith.constant dense<0.000000e+00> : vector<8x8xf32>
    %409 = tpu.matmul %408, %393, %cst_119 {dimension_numbers = #tpu.dot_dimension_numbers<[1], [0], [0], [1], [0, 0, 1, 1], [], []>} : vector<8x8xf32>, vector<8x8xf32>, vector<8x8xf32> -> vector<8x8xf32>
    %410 = vector.extract_strided_slice %225 {offsets = [24, 0], sizes = [8, 32], strides = [1, 1]} : vector<32x32xf32> to vector<8x32xf32>
    %cst_120 = arith.constant dense<0.000000e+00> : vector<8x32xf32>
    %411 = tpu.matmul %409, %410, %cst_120 {dimension_numbers = #tpu.dot_dimension_numbers<[1], [0], [0], [1], [0, 0, 1, 1], [], []>} : vector<8x8xf32>, vector<8x32xf32>, vector<8x32xf32> -> vector<8x32xf32>
    %412 = arith.addf %390, %411 : vector<8x32xf32>
    %413 = tpu.concatenate %323, %412 in 0 : vector<8x32xf32>, vector<8x32xf32> -> vector<16x32xf32>
    %414 = vector.broadcast %226 : vector<1x32xf32> to vector<16x32xf32>
    %415 = arith.addf %413, %414 : vector<16x32xf32>
    %416 = arith.addf %222, %415 : vector<16x32xf32>
    %cst_121 = arith.constant dense<0.000000e+00> : vector<16xf32>
    %417 = vector.multi_reduction <add>, %416, %cst_121 [1] : vector<16x32xf32> to vector<16xf32>
    %418 = vector.shape_cast %417 : vector<16xf32> to vector<16x1xf32>
    %cst_122 = arith.constant 3.200000e+01 : f32
    %419 = vector.broadcast %cst_122 : f32 to vector<16x1xf32>
    %420 = arith.divf %418, %419 : vector<16x1xf32>
    %421 = arith.mulf %416, %416 : vector<16x32xf32>
    %cst_123 = arith.constant dense<0.000000e+00> : vector<16xf32>
    %422 = vector.multi_reduction <add>, %421, %cst_123 [1] : vector<16x32xf32> to vector<16xf32>
    %423 = vector.shape_cast %422 : vector<16xf32> to vector<16x1xf32>
    %cst_124 = arith.constant 3.200000e+01 : f32
    %424 = vector.broadcast %cst_124 : f32 to vector<16x1xf32>
    %425 = arith.divf %423, %424 : vector<16x1xf32>
    %426 = arith.mulf %420, %420 : vector<16x1xf32>
    %427 = arith.subf %425, %426 : vector<16x1xf32>
    %428 = vector.broadcast %420 : vector<16x1xf32> to vector<16x32xf32>
    %429 = arith.subf %416, %428 : vector<16x32xf32>
    %cst_125 = arith.constant 9.99999974E-6 : f32
    %430 = vector.broadcast %cst_125 : f32 to vector<16x1xf32>
    %431 = arith.addf %427, %430 : vector<16x1xf32>
    %432 = math.rsqrt %431 : vector<16x1xf32>
    %433 = vector.broadcast %432 : vector<16x1xf32> to vector<16x32xf32>
    %434 = arith.mulf %429, %433 : vector<16x32xf32>
    %435 = vector.broadcast %227 : vector<1x32xf32> to vector<16x32xf32>
    %436 = arith.mulf %434, %435 : vector<16x32xf32>
    %437 = vector.broadcast %228 : vector<1x32xf32> to vector<16x32xf32>
    %438 = arith.addf %436, %437 : vector<16x32xf32>
    %c200 = arith.constant 200 : index
    %c0_126 = arith.constant 0 : index
    %439 = vector.load %arg3[%c200, %c0_126] : memref<400x128xf32, #tpu.memory_space<vmem>>, vector<32x32xf32>
    %cst_127 = arith.constant dense<0.000000e+00> : vector<16x32xf32>
    %440 = tpu.matmul %438, %439, %cst_127 {dimension_numbers = #tpu.dot_dimension_numbers<[1], [0], [0], [1], [0, 0, 1, 1], [], []>} : vector<16x32xf32>, vector<32x32xf32>, vector<16x32xf32> -> vector<16x32xf32>
    %c232 = arith.constant 232 : index
    %c0_128 = arith.constant 0 : index
    %441 = vector.load %arg3[%c232, %c0_128] : memref<400x128xf32, #tpu.memory_space<vmem>>, vector<1x32xf32>
    %442 = vector.broadcast %441 : vector<1x32xf32> to vector<16x32xf32>
    %443 = arith.addf %440, %442 : vector<16x32xf32>
    %444 = arith.addf %438, %443 : vector<16x32xf32>
    %c240 = arith.constant 240 : index
    %c0_129 = arith.constant 0 : index
    %445 = vector.load %arg3[%c240, %c0_129] : memref<400x128xf32, #tpu.memory_space<vmem>>, vector<1x32xf32>
    %c248 = arith.constant 248 : index
    %c0_130 = arith.constant 0 : index
    %446 = vector.load %arg3[%c248, %c0_130] : memref<400x128xf32, #tpu.memory_space<vmem>>, vector<1x32xf32>
    %cst_131 = arith.constant dense<0.000000e+00> : vector<16xf32>
    %447 = vector.multi_reduction <add>, %444, %cst_131 [1] : vector<16x32xf32> to vector<16xf32>
    %448 = vector.shape_cast %447 : vector<16xf32> to vector<16x1xf32>
    %cst_132 = arith.constant 3.200000e+01 : f32
    %449 = vector.broadcast %cst_132 : f32 to vector<16x1xf32>
    %450 = arith.divf %448, %449 : vector<16x1xf32>
    %451 = arith.mulf %444, %444 : vector<16x32xf32>
    %cst_133 = arith.constant dense<0.000000e+00> : vector<16xf32>
    %452 = vector.multi_reduction <add>, %451, %cst_133 [1] : vector<16x32xf32> to vector<16xf32>
    %453 = vector.shape_cast %452 : vector<16xf32> to vector<16x1xf32>
    %cst_134 = arith.constant 3.200000e+01 : f32
    %454 = vector.broadcast %cst_134 : f32 to vector<16x1xf32>
    %455 = arith.divf %453, %454 : vector<16x1xf32>
    %456 = arith.mulf %450, %450 : vector<16x1xf32>
    %457 = arith.subf %455, %456 : vector<16x1xf32>
    %458 = vector.broadcast %450 : vector<16x1xf32> to vector<16x32xf32>
    %459 = arith.subf %444, %458 : vector<16x32xf32>
    %cst_135 = arith.constant 9.99999974E-6 : f32
    %460 = vector.broadcast %cst_135 : f32 to vector<16x1xf32>
    %461 = arith.addf %457, %460 : vector<16x1xf32>
    %462 = math.rsqrt %461 : vector<16x1xf32>
    %463 = vector.broadcast %462 : vector<16x1xf32> to vector<16x32xf32>
    %464 = arith.mulf %459, %463 : vector<16x32xf32>
    %465 = vector.broadcast %445 : vector<1x32xf32> to vector<16x32xf32>
    %466 = arith.mulf %464, %465 : vector<16x32xf32>
    %467 = vector.broadcast %446 : vector<1x32xf32> to vector<16x32xf32>
    %468 = arith.addf %466, %467 : vector<16x32xf32>
    %c256 = arith.constant 256 : index
    %c0_136 = arith.constant 0 : index
    %469 = vector.load %arg3[%c256, %c0_136] : memref<400x128xf32, #tpu.memory_space<vmem>>, vector<32x32xf32>
    %cst_137 = arith.constant dense<0.000000e+00> : vector<16x32xf32>
    %470 = tpu.matmul %468, %469, %cst_137 {dimension_numbers = #tpu.dot_dimension_numbers<[1], [0], [0], [1], [0, 0, 1, 1], [], []>} : vector<16x32xf32>, vector<32x32xf32>, vector<16x32xf32> -> vector<16x32xf32>
    %c288 = arith.constant 288 : index
    %c0_138 = arith.constant 0 : index
    %471 = vector.load %arg3[%c288, %c0_138] : memref<400x128xf32, #tpu.memory_space<vmem>>, vector<1x32xf32>
    %472 = vector.broadcast %471 : vector<1x32xf32> to vector<16x32xf32>
    %473 = arith.addf %470, %472 : vector<16x32xf32>
    %474 = math.tanh %473 : vector<16x32xf32>
    %c296 = arith.constant 296 : index
    %c0_139 = arith.constant 0 : index
    %475 = vector.load %arg3[%c296, %c0_139] : memref<400x128xf32, #tpu.memory_space<vmem>>, vector<32x1xf32>
    %cst_140 = arith.constant dense<0.000000e+00> : vector<16x1xf32>
    %476 = tpu.matmul %474, %475, %cst_140 {dimension_numbers = #tpu.dot_dimension_numbers<[1], [0], [0], [1], [0, 0, 1, 1], [], []>} : vector<16x32xf32>, vector<32x1xf32>, vector<16x1xf32> -> vector<16x1xf32>
    %c328 = arith.constant 328 : index
    %c0_141 = arith.constant 0 : index
    %477 = vector.load %arg3[%c328, %c0_141] : memref<400x128xf32, #tpu.memory_space<vmem>>, vector<1x1xf32>
    %478 = vector.broadcast %477 : vector<1x1xf32> to vector<16x1xf32>
    %479 = arith.addf %476, %478 : vector<16x1xf32>
    %480 = vector.extract_strided_slice %479 {offsets = [0, 0], sizes = [8, 1], strides = [1, 1]} : vector<16x1xf32> to vector<8x1xf32>
    %cst_142 = arith.constant dense<0xFF800000> : vector<1xf32>
    %481 = vector.multi_reduction <maximumf>, %480, %cst_142 [0] : vector<8x1xf32> to vector<1xf32>
    %482 = vector.shape_cast %481 : vector<1xf32> to vector<1x1xf32>
    %483 = vector.broadcast %482 : vector<1x1xf32> to vector<8x1xf32>
    %484 = arith.subf %480, %483 : vector<8x1xf32>
    %485 = math.exp %484 : vector<8x1xf32>
    %cst_143 = arith.constant dense<0.000000e+00> : vector<1xf32>
    %486 = vector.multi_reduction <add>, %485, %cst_143 [0] : vector<8x1xf32> to vector<1xf32>
    %487 = vector.shape_cast %486 : vector<1xf32> to vector<1x1xf32>
    %488 = tpu.reciprocal %487 {approx = true} : vector<1x1xf32> -> vector<1x1xf32>
    %489 = vector.broadcast %488 : vector<1x1xf32> to vector<8x1xf32>
    %490 = arith.mulf %485, %489 : vector<8x1xf32>
    %491 = vector.extract_strided_slice %468 {offsets = [0, 0], sizes = [8, 32], strides = [1, 1]} : vector<16x32xf32> to vector<8x32xf32>
    %492 = vector.broadcast %490 : vector<8x1xf32> to vector<8x32xf32>
    %493 = arith.mulf %492, %491 : vector<8x32xf32>
    %cst_144 = arith.constant dense<0.000000e+00> : vector<32xf32>
    %494 = vector.multi_reduction <add>, %493, %cst_144 [0] : vector<8x32xf32> to vector<32xf32>
    %495 = vector.shape_cast %494 : vector<32xf32> to vector<1x32xf32>
    %496 = vector.extract_strided_slice %479 {offsets = [8, 0], sizes = [8, 1], strides = [1, 1]} : vector<16x1xf32> to vector<8x1xf32>
    %cst_145 = arith.constant dense<0xFF800000> : vector<1xf32>
    %497 = vector.multi_reduction <maximumf>, %496, %cst_145 [0] : vector<8x1xf32> to vector<1xf32>
    %498 = vector.shape_cast %497 : vector<1xf32> to vector<1x1xf32>
    %499 = vector.broadcast %498 : vector<1x1xf32> to vector<8x1xf32>
    %500 = arith.subf %496, %499 : vector<8x1xf32>
    %501 = math.exp %500 : vector<8x1xf32>
    %cst_146 = arith.constant dense<0.000000e+00> : vector<1xf32>
    %502 = vector.multi_reduction <add>, %501, %cst_146 [0] : vector<8x1xf32> to vector<1xf32>
    %503 = vector.shape_cast %502 : vector<1xf32> to vector<1x1xf32>
    %504 = tpu.reciprocal %503 {approx = true} : vector<1x1xf32> -> vector<1x1xf32>
    %505 = vector.broadcast %504 : vector<1x1xf32> to vector<8x1xf32>
    %506 = arith.mulf %501, %505 : vector<8x1xf32>
    %507 = vector.extract_strided_slice %468 {offsets = [8, 0], sizes = [8, 32], strides = [1, 1]} : vector<16x32xf32> to vector<8x32xf32>
    %508 = vector.broadcast %506 : vector<8x1xf32> to vector<8x32xf32>
    %509 = arith.mulf %508, %507 : vector<8x32xf32>
    %cst_147 = arith.constant dense<0.000000e+00> : vector<32xf32>
    %510 = vector.multi_reduction <add>, %509, %cst_147 [0] : vector<8x32xf32> to vector<32xf32>
    %511 = vector.shape_cast %510 : vector<32xf32> to vector<1x32xf32>
    %512 = tpu.concatenate %495, %511 in 0 : vector<1x32xf32>, vector<1x32xf32> -> vector<2x32xf32>
    %c336 = arith.constant 336 : index
    %c0_148 = arith.constant 0 : index
    %513 = vector.load %arg3[%c336, %c0_148] : memref<400x128xf32, #tpu.memory_space<vmem>>, vector<32x16xf32>
    %cst_149 = arith.constant dense<0.000000e+00> : vector<2x16xf32>
    %514 = tpu.matmul %512, %513, %cst_149 {dimension_numbers = #tpu.dot_dimension_numbers<[1], [0], [0], [1], [0, 0, 1, 1], [], []>} : vector<2x32xf32>, vector<32x16xf32>, vector<2x16xf32> -> vector<2x16xf32>
    %c368 = arith.constant 368 : index
    %c0_150 = arith.constant 0 : index
    %515 = vector.load %arg3[%c368, %c0_150] : memref<400x128xf32, #tpu.memory_space<vmem>>, vector<1x16xf32>
    %516 = vector.broadcast %515 : vector<1x16xf32> to vector<2x16xf32>
    %517 = arith.addf %514, %516 : vector<2x16xf32>
    %cst_151 = arith.constant 0.000000e+00 : f32
    %518 = vector.broadcast %cst_151 : f32 to vector<2x16xf32>
    %519 = arith.maximumf %517, %518 : vector<2x16xf32>
    %c376 = arith.constant 376 : index
    %c0_152 = arith.constant 0 : index
    %520 = vector.load %arg3[%c376, %c0_152] : memref<400x128xf32, #tpu.memory_space<vmem>>, vector<16x32xf32>
    %cst_153 = arith.constant dense<0.000000e+00> : vector<2x32xf32>
    %521 = tpu.matmul %519, %520, %cst_153 {dimension_numbers = #tpu.dot_dimension_numbers<[1], [0], [0], [1], [0, 0, 1, 1], [], []>} : vector<2x16xf32>, vector<16x32xf32>, vector<2x32xf32> -> vector<2x32xf32>
    %c392 = arith.constant 392 : index
    %c0_154 = arith.constant 0 : index
    %522 = vector.load %arg3[%c392, %c0_154] : memref<400x128xf32, #tpu.memory_space<vmem>>, vector<1x32xf32>
    %523 = vector.broadcast %522 : vector<1x32xf32> to vector<2x32xf32>
    %524 = arith.addf %521, %523 : vector<2x32xf32>
    %c0_155 = arith.constant 0 : index
    %c0_156 = arith.constant 0 : index
    %525 = vector.load %arg4[%c0_155, %c0_156] : memref<2x32xf32, #tpu.memory_space<vmem>>, vector<2x32xf32>
    tpu.vector_store %arg4[%c0_155, %c0_156], %524 {strides = array<i32>} : memref<2x32xf32, #tpu.memory_space<vmem>>, vector<2x32xf32>,
    return
  }
  func.func @transform_0(%arg0: i32) -> (i32, i32) {
    %c0_i32 = arith.constant 0 : i32
    %c0_i32_0 = arith.constant 0 : i32
    %c0_i32_1 = arith.constant 0 : i32
    return %c0_i32, %c0_i32_0 : i32, i32
  }
  func.func @transform_1(%arg0: i32) -> (i32, i32, i32) {
    %c0_i32 = arith.constant 0 : i32
    %c0_i32_0 = arith.constant 0 : i32
    %c0_i32_1 = arith.constant 0 : i32
    %c0_i32_2 = arith.constant 0 : i32
    return %c0_i32, %c0_i32_0, %c0_i32_1 : i32, i32, i32
  }
  func.func @transform_2(%arg0: i32) -> (i32, i32) {
    %c0_i32 = arith.constant 0 : i32
    %c0_i32_0 = arith.constant 0 : i32
    %c0_i32_1 = arith.constant 0 : i32
    return %c0_i32, %c0_i32_0 : i32, i32
  }
  func.func @transform_3(%arg0: i32) -> (i32, i32) {
    %c0_i32 = arith.constant 0 : i32
    %c0_i32_0 = arith.constant 0 : i32
    %c0_i32_1 = arith.constant 0 : i32
    return %c0_i32, %c0_i32_0 : i32, i32
  }
}

</mosaic_0001>

<llo_original>
// kernel: tpu_custom_call.1
$region0: #{tpu_custom_call.1}
  #allocation0 [shape = 'u32[]', space=smem, size = 0x4, offset = 0x4, fixed_abs, tag = 'smem constant byte address 0x4 - core index']
  #allocation1 [shape = 'u32[144,128]{1,0:T(1,128)}', space=vmem, size = 0x12000, scoped, tag = 'internal scratch']
  %s0 = inlined_call_operand.hbm [shape: f32[16,32], index: 0, kind: input, shape index: {}]
  %s1 = inlined_call_operand.vmem [shape: f32[2,1,8], index: 1, kind: input, shape index: {}]
  %s2 = inlined_call_operand.hbm [shape: f32[400,128], index: 2, kind: input, shape index: {}]
  %s3 = inlined_call_operand.hbm [shape: f32[2,32], index: 3, kind: output, shape index: {}]
  %s4 = sld [smem:[#allocation0]]
  $region30: #{tpu_custom_call.1} parent=0
    _
  %s6 = ssub.s32 1, %s4
  %s7 = scalar_select 0, %s6, %s4
  $region1: #{tpu_custom_call.1} parent=0
    #allocation2 [shape = 'u8[8192]{0}', space=vmem, size = 0x2000, scoped, tag = 'input window, operand 0, single buffered']
    #allocation3 [shape = 's32[1]{0}', space=sflag, size = 0x4, scoped, tag = 'scoped memory for tpu_custom_call.1']
    #allocation4 [shape = 's32[1]{0}', space=sflag, size = 0x4, scoped, tag = 'scoped memory for tpu_custom_call.1']
    #allocation5 [shape = 'u8[204800]{0}', space=vmem, size = 0x32000, scoped, tag = 'input window, operand 2, single buffered']
    #allocation6 [shape = 's32[1]{0}', space=sflag, size = 0x4, scoped, tag = 'scoped memory for tpu_custom_call.1']
    #allocation7 [shape = 'u8[1024]{0}', space=vmem, size = 0x400, scoped, tag = 'output window, operand 0, single buffered']
    %8 = vsyncpa [#allocation3], 0
    %9 = vsyncpa [#allocation6], 0
    %10 = vsyncpa [#allocation4], 0
    // Predicated region
    $region2: #{tpu_custom_call.1} parent=1 // pred_check
      _
    $region3: #{tpu_custom_call.1} parent=1 // pred_check_branch
      %12 = sbr.rel (0) target = $region5
    $region4: #{tpu_custom_call.1} parent=1 // pred_region
      %s14 = ssub.s32 256, 256
      %15 = vsyncadd [#allocation3], %s14
      %s16 = sshll.u32 [#allocation2], 4
      %s17 = int_to_ptr.vmem [resolvable:$true] %s16
      %22 = dma.hbm_to_vmem [thread:$0]  %s0, 256, %s17, [#allocation3], 128, 128, 8
    $region5: #{tpu_custom_call.1} parent=1 // pred_fallthru
      _
    // Predicated region
    $region6: #{tpu_custom_call.1} parent=1 // pred_check
      _
    $region7: #{tpu_custom_call.1} parent=1 // pred_check_branch
      %24 = sbr.rel (0) target = $region9
    $region8: #{tpu_custom_call.1} parent=1 // pred_region
      _
    $region9: #{tpu_custom_call.1} parent=1 // pred_fallthru
      _
    // Predicated region
    $region10: #{tpu_custom_call.1} parent=1 // pred_check
      _
    $region11: #{tpu_custom_call.1} parent=1 // pred_check_branch
      %26 = sbr.rel (0) target = $region13
    $region12: #{tpu_custom_call.1} parent=1 // pred_region
      %s28 = ssub.s32 6400, 6400
      %29 = vsyncadd [#allocation6], %s28
      %s30 = sshll.u32 [#allocation5], 4
      %s31 = int_to_ptr.vmem [resolvable:$true] %s30
      %36 = dma.hbm_to_vmem [thread:$0]  %s2, 6400, %s31, [#allocation6], 128, 128, 8
    $region13: #{tpu_custom_call.1} parent=1 // pred_fallthru
      _
    // Predicated region
    $region14: #{tpu_custom_call.1} parent=1 // pred_check
      _
    $region15: #{tpu_custom_call.1} parent=1 // pred_check_branch
      %38 = sbr.rel (0) target = $region17
    $region16: #{tpu_custom_call.1} parent=1 // pred_region
      %39 = dma.done [#allocation3], 256
    $region17: #{tpu_custom_call.1} parent=1 // pred_fallthru
      _
    // Predicated region
    $region18: #{tpu_custom_call.1} parent=1 // pred_check
      _
    $region19: #{tpu_custom_call.1} parent=1 // pred_check_branch
      %41 = sbr.rel (0) target = $region21
    $region20: #{tpu_custom_call.1} parent=1 // pred_region
      %42 = dma.done [#allocation6], 6400
    $region21: #{tpu_custom_call.1} parent=1 // pred_fallthru
      _
    %v43 = vld [vmem:[#allocation2] sm:$0xff]
    %v44 = vld [vmem:[#allocation2 + $0x8] sm:$0xff]
    %v45 = vld [vmem:[%s1] sm:$0x1]
    %v46 = vld [vmem:[%s1 + $0x1] sm:$0x1]
    %v47 = vld [vmem:[#allocation5] sm:$0xff]
    %v48 = vmul.f32 %v43, 5.656854
    %v49 = vmul.f32 %v44, 5.656854
    %v50 = vadd.f32 %v48, %v47
    %v51 = vadd.f32 %v49, %v47
    %v52 = vld [vmem:[#allocation5 + $0x8] sm:$0xff]
    %v53 = vld [vmem:[#allocation5 + $0x10] sm:$0xff]
    %v54 = vld [vmem:[#allocation5 + $0x18] sm:$0xff]
    %v55 = vld [vmem:[#allocation5 + $0x20] sm:$0xff]
    %v56 = vld [vmem:[#allocation5 + $0x28] sm:$0x1]
    %v57 = vld [vmem:[#allocation5 + $0x30] sm:$0xff]
    %v58 = vld [vmem:[#allocation5 + $0x38] sm:$0xff]
    %v59 = vld [vmem:[#allocation5 + $0x40] sm:$0xff]
    %v60 = vld [vmem:[#allocation5 + $0x48] sm:$0xff]
    %v61 = vld [vmem:[#allocation5 + $0x50] sm:$0x1]
    %v62 = vld [vmem:[#allocation5 + $0x58] sm:$0x1]
    %v63 = vld [vmem:[#allocation5 + $0x60] sm:$0x1]
    %v64 = vlaneseq
    %v65 = vshrl.u32 %v64, 7
    %v66 = vsub.s32 0, %v65
    %v67 = vrot.slane %v56, %v66
    %vm68 = vcmask 261120
    %v70 = vsel %vm68, %v50, 0
    %v73 = vsel %vm68, %v51, 0
    %75 = vmatprep.subr.mxu0 0.0
    %76 = vmatpush1.msra.mxu0 %v52
    %77 = vmatprep.subr.mxu0 0.0
    %78 = vmatpush1.msra.mxu0 %v53
    %79 = vmatprep.subr.mxu0 0.0
    %80 = vmatpush1.msra.mxu0 %v54
    %81 = vmatprep.subr.mxu0 0.0
    %82 = vmatpush1.msra.mxu0 %v55
    %83 = vmatprep.subr.mxu0 0.0
    %84 = vmatpush1.msra.mxu0 0.0
    %85 = vmatprep.subr.mxu0 0.0
    %86 = vmatpush1.msra.mxu0 0.0
    %87 = vmatprep.subr.mxu0 0.0
    %88 = vmatpush1.msra.mxu0 0.0
    %89 = vmatprep.subr.mxu0 0.0
    %90 = vmatpush1.msra.mxu0 0.0
    %91 = vmatprep.subr.mxu0 0.0
    %92 = vmatpush1.msra.mxu0 0.0
    %93 = vmatprep.subr.mxu0 0.0
    %94 = vmatpush1.msra.mxu0 0.0
    %95 = vmatprep.subr.mxu0 0.0
    %96 = vmatpush1.msra.mxu0 0.0
    %97 = vmatprep.subr.mxu0 0.0
    %98 = vmatpush1.msra.mxu0 0.0
    %99 = vmatprep.subr.mxu0 0.0
    %100 = vmatpush1.msra.mxu0 0.0
    %101 = vmatprep.subr.mxu0 0.0
    %102 = vmatpush1.msra.mxu0 0.0
    %103 = vmatprep.subr.mxu0 0.0
    %104 = vmatpush1.msra.mxu0 0.0
    %105 = vmatprep.subr.mxu0 0.0
    %106 = vmatpush1.msra.mxu0 0.0
    %107 = vmatprep.subr.mxu0 0.0
    %108 = vmatpush1.msra.mxu0 0.0
    %109 = vmatprep.subr.mxu0 0.0
    %110 = vmatpush1.msra.mxu0 0.0
    %111 = vmatprep.subr.mxu0 0.0
    %112 = vmatpush1.msra.mxu0 0.0
    %113 = vmatprep.subr.mxu0 0.0
    %114 = vmatpush1.msra.mxu0 0.0
    %115 = vmatprep.subr.mxu0 0.0
    %116 = vmatpush1.msra.mxu0 0.0
    %117 = vmatprep.subr.mxu0 0.0
    %118 = vmatpush1.msra.mxu0 0.0
    %119 = vmatprep.subr.mxu0 0.0
    %120 = vmatpush1.msra.mxu0 0.0
    %121 = vmatprep.subr.mxu0 0.0
    %122 = vmatpush1.msra.mxu0 0.0
    %123 = vmatprep.subr.mxu0 0.0
    %124 = vmatpush1.msra.mxu0 0.0
    %125 = vmatprep.subr.mxu0 0.0
    %126 = vmatpush1.msra.mxu0 0.0
    %127 = vmatprep.subr.mxu0 0.0
    %128 = vmatpush1.msra.mxu0 0.0
    %129 = vmatprep.subr.mxu0 0.0
    %130 = vmatpush1.msra.mxu0 0.0
    %131 = vmatprep.subr.mxu0 0.0
    %132 = vmatpush1.msra.mxu0 0.0
    %133 = vmatprep.subr.mxu0 0.0
    %134 = vmatpush1.msra.mxu0 0.0
    %135 = vmatprep.subr.mxu0 0.0
    %136 = vmatpush1.msra.mxu0 0.0
    %137 = vmatprep.subr.mxu0 0.0
    %138 = vmatpush1.msra.mxu0 0.0
    %139 = vmatprep.mubr.f32.mxu0 0.0
    %140 = vmatmul.mubr.f32.gmra.mrb[0].mxu0 %v70
    %v141 = vpop.f32.mrb[0].mxu0
    %v142 = vadd.f32 %v67, %v141
    %v143 = vpop.f32.mrb[0].mxu0
    %144 = vmatprep.mubr.f32.mxu0 0.0
    %145 = vmatmul.mubr.f32.gmra.mrb[0].mxu0 %v73
    %v146 = vpop.f32.mrb[0].mxu0
    %v147 = vadd.f32 %v67, %v146
    %v148 = vpop.f32.mrb[0].mxu0
    %149 = vdwg.mxu0
    %151 = vrot.lane.b32.xlu0 %v142, 96
    %v152 = vpop.permute.xlu0 %151
    %vm153 = vcmask 64512
    %v154 = vsel %vm153, %v142, 0
    %v156 = vsel %vm153, %v152, 0
    %158 = vmatprep.subr.mxu0 0.0
    %159 = vmatpush1.xpose.msra.mxu0 %v156
    %160 = vmatprep.subr.mxu0 0.0
    %161 = vmatpush1.xpose.msra.mxu0 0.0
    %162 = vmatprep.subr.mxu0 0.0
    %163 = vmatpush1.xpose.msra.mxu0 0.0
    %164 = vmatprep.subr.mxu0 0.0
    %165 = vmatpush1.xpose.msra.mxu0 0.0
    %166 = vmatprep.subr.mxu0 0.0
    %167 = vmatpush1.xpose.msra.mxu0 0.0
    %168 = vmatprep.subr.mxu0 0.0
    %169 = vmatpush1.xpose.msra.mxu0 0.0
    %170 = vmatprep.subr.mxu0 0.0
    %171 = vmatpush1.xpose.msra.mxu0 0.0
    %172 = vmatprep.subr.mxu0 0.0
    %173 = vmatpush1.xpose.msra.mxu0 0.0
    %174 = vmatprep.subr.mxu0 0.0
    %175 = vmatpush1.xpose.msra.mxu0 0.0
    %176 = vmatprep.subr.mxu0 0.0
    %177 = vmatpush1.xpose.msra.mxu0 0.0
    %178 = vmatprep.subr.mxu0 0.0
    %179 = vmatpush1.xpose.msra.mxu0 0.0
    %180 = vmatprep.subr.mxu0 0.0
    %181 = vmatpush1.xpose.msra.mxu0 0.0
    %182 = vmatprep.subr.mxu0 0.0
    %183 = vmatpush1.xpose.msra.mxu0 0.0
    %184 = vmatprep.subr.mxu0 0.0
    %185 = vmatpush1.xpose.msra.mxu0 0.0
    %186 = vmatprep.subr.mxu0 0.0
    %187 = vmatpush1.xpose.msra.mxu0 0.0
    %188 = vmatprep.subr.mxu0 0.0
    %189 = vmatpush1.xpose.msra.mxu0 0.0
    %190 = vmatprep.subr.mxu0 0.0
    %191 = vmatpush1.xpose.msra.mxu0 0.0
    %192 = vmatprep.subr.mxu0 0.0
    %193 = vmatpush1.xpose.msra.mxu0 0.0
    %194 = vmatprep.subr.mxu0 0.0
    %195 = vmatpush1.xpose.msra.mxu0 0.0
    %196 = vmatprep.subr.mxu0 0.0
    %197 = vmatpush1.xpose.msra.mxu0 0.0
    %198 = vmatprep.subr.mxu0 0.0
    %199 = vmatpush1.xpose.msra.mxu0 0.0
    %200 = vmatprep.subr.mxu0 0.0
    %201 = vmatpush1.xpose.msra.mxu0 0.0
    %202 = vmatprep.subr.mxu0 0.0
    %203 = vmatpush1.xpose.msra.mxu0 0.0
    %204 = vmatprep.subr.mxu0 0.0
    %205 = vmatpush1.xpose.msra.mxu0 0.0
    %206 = vmatprep.subr.mxu0 0.0
    %207 = vmatpush1.xpose.msra.mxu0 0.0
    %208 = vmatprep.subr.mxu0 0.0
    %209 = vmatpush1.xpose.msra.mxu0 0.0
    %210 = vmatprep.subr.mxu0 0.0
    %211 = vmatpush1.xpose.msra.mxu0 0.0
    %212 = vmatprep.subr.mxu0 0.0
    %213 = vmatpush1.xpose.msra.mxu0 0.0
    %214 = vmatprep.subr.mxu0 0.0
    %215 = vmatpush1.xpose.msra.mxu0 0.0
    %216 = vmatprep.subr.mxu0 0.0
    %217 = vmatpush1.xpose.msra.mxu0 0.0
    %218 = vmatprep.subr.mxu0 0.0
    %219 = vmatpush1.xpose.msra.mxu0 0.0
    %220 = vmatprep.subr.mxu0 0.0
    %221 = vmatpush1.xpose.msra.mxu0 0.0
    %222 = vmatprep.mubr.f32.mxu0 0.0
    %223 = vmatmul.mubr.f32.gmra.mrb[0].mxu0 %v154
    %v224 = vpop.f32.mrb[0].mxu0
    %v225 = vadd.f32 0.0, %v224
    %v226 = vpop.f32.mrb[0].mxu0
    %227 = vdwg.mxu0
    %v228 = vmul.f32 %v225, 0.35355338
    %v230 = vlaneseq
    %v231 = vshrl.u32 %v230, 7
    %v232 = vsub.s32 0, %v231
    %v233 = vrot.slane %v45, %v232
    %v235 = vadd.f32 %v228, %v233
    %v236 = vsel %vm153, %v235, -inf
    %237 = vmax.xlane.f32.xlu0 %v236
    %v238 = vpop.xlane.xlu0 %237
    %v239 = vsub.f32 %v235, %v238
    %v240 = vmul.f32 %v239, 1.442695
    %v241 = vpow.pop %v240
    %v242 = vsel %vm153, %v241, 0.0
    %243 = vadd.xlane.f32.xlu0 %v242
    %v244 = vpop.xlane.xlu0 %243
    %v245 = vrcp.pop %v244
    %v246 = vmul.f32 %v241, %v245
    %247 = vrot.lane.b32.xlu0 %v142, 64
    %v248 = vpop.permute.xlu0 %247
    %v251 = vsel %vm153, %v246, 0
    %253 = vmatprep.subr.mxu0 0.0
    %254 = vmatpush1.msra.mxu0 %v248
    %255 = vmatprep.subr.mxu0 0.0
    %256 = vmatpush1.msra.mxu0 0.0
    %257 = vmatprep.subr.mxu0 0.0
    %258 = vmatpush1.msra.mxu0 0.0
    %259 = vmatprep.subr.mxu0 0.0
    %260 = vmatpush1.msra.mxu0 0.0
    %261 = vmatprep.subr.mxu0 0.0
    %262 = vmatpush1.msra.mxu0 0.0
    %263 = vmatprep.subr.mxu0 0.0
    %264 = vmatpush1.msra.mxu0 0.0
    %265 = vmatprep.subr.mxu0 0.0
    %266 = vmatpush1.msra.mxu0 0.0
    %267 = vmatprep.subr.mxu0 0.0
    %268 = vmatpush1.msra.mxu0 0.0
    %269 = vmatprep.subr.mxu0 0.0
    %270 = vmatpush1.msra.mxu0 0.0
    %271 = vmatprep.subr.mxu0 0.0
    %272 = vmatpush1.msra.mxu0 0.0
    %273 = vmatprep.subr.mxu0 0.0
    %274 = vmatpush1.msra.mxu0 0.0
    %275 = vmatprep.subr.mxu0 0.0
    %276 = vmatpush1.msra.mxu0 0.0
    %277 = vmatprep.subr.mxu0 0.0
    %278 = vmatpush1.msra.mxu0 0.0
    %279 = vmatprep.subr.mxu0 0.0
    %280 = vmatpush1.msra.mxu0 0.0
    %281 = vmatprep.subr.mxu0 0.0
    %282 = vmatpush1.msra.mxu0 0.0
    %283 = vmatprep.subr.mxu0 0.0
    %284 = vmatpush1.msra.mxu0 0.0
    %285 = vmatprep.subr.mxu0 0.0
    %286 = vmatpush1.msra.mxu0 0.0
    %287 = vmatprep.subr.mxu0 0.0
    %288 = vmatpush1.msra.mxu0 0.0
    %289 = vmatprep.subr.mxu0 0.0
    %290 = vmatpush1.msra.mxu0 0.0
    %291 = vmatprep.subr.mxu0 0.0
    %292 = vmatpush1.msra.mxu0 0.0
    %293 = vmatprep.subr.mxu0 0.0
    %294 = vmatpush1.msra.mxu0 0.0
    %295 = vmatprep.subr.mxu0 0.0
    %296 = vmatpush1.msra.mxu0 0.0
    %297 = vmatprep.subr.mxu0 0.0
    %298 = vmatpush1.msra.mxu0 0.0
    %299 = vmatprep.subr.mxu0 0.0
    %300 = vmatpush1.msra.mxu0 0.0
    %301 = vmatprep.subr.mxu0 0.0
    %302 = vmatpush1.msra.mxu0 0.0
    %303 = vmatprep.subr.mxu0 0.0
    %304 = vmatpush1.msra.mxu0 0.0
    %305 = vmatprep.subr.mxu0 0.0
    %306 = vmatpush1.msra.mxu0 0.0
    %307 = vmatprep.subr.mxu0 0.0
    %308 = vmatpush1.msra.mxu0 0.0
    %309 = vmatprep.subr.mxu0 0.0
    %310 = vmatpush1.msra.mxu0 0.0
    %311 = vmatprep.subr.mxu0 0.0
    %312 = vmatpush1.msra.mxu0 0.0
    %313 = vmatprep.subr.mxu0 0.0
    %314 = vmatpush1.msra.mxu0 0.0
    %315 = vmatprep.subr.mxu0 0.0
    %316 = vmatpush1.msra.mxu0 0.0
    %317 = vmatprep.mubr.f32.mxu0 0.0
    %318 = vmatmul.mubr.f32.gmra.mrb[0].mxu0 %v251
    %v319 = vpop.f32.mrb[0].mxu0
    %v320 = vadd.f32 0.0, %v319
    %v321 = vpop.f32.mrb[0].mxu0
    %322 = vdwg.mxu0
    %323 = vrot.lane.b32.xlu0 %v142, 120
    %v324 = vpop.permute.xlu0 %323
    %325 = vrot.lane.b32.xlu0 %v142, 88
    %v326 = vpop.permute.xlu0 %325
    %v327 = vsel %vm153, %v324, 0
    %v329 = vsel %vm153, %v326, 0
    %331 = vmatprep.subr.mxu0 0.0
    %332 = vmatpush1.xpose.msra.mxu0 %v329
    %333 = vmatprep.subr.mxu0 0.0
    %334 = vmatpush1.xpose.msra.mxu0 0.0
    %335 = vmatprep.subr.mxu0 0.0
    %336 = vmatpush1.xpose.msra.mxu0 0.0
    %337 = vmatprep.subr.mxu0 0.0
    %338 = vmatpush1.xpose.msra.mxu0 0.0
    %339 = vmatprep.subr.mxu0 0.0
    %340 = vmatpush1.xpose.msra.mxu0 0.0
    %341 = vmatprep.subr.mxu0 0.0
    %342 = vmatpush1.xpose.msra.mxu0 0.0
    %343 = vmatprep.subr.mxu0 0.0
    %344 = vmatpush1.xpose.msra.mxu0 0.0
    %345 = vmatprep.subr.mxu0 0.0
    %346 = vmatpush1.xpose.msra.mxu0 0.0
    %347 = vmatprep.subr.mxu0 0.0
    %348 = vmatpush1.xpose.msra.mxu0 0.0
    %349 = vmatprep.subr.mxu0 0.0
    %350 = vmatpush1.xpose.msra.mxu0 0.0
    %351 = vmatprep.subr.mxu0 0.0
    %352 = vmatpush1.xpose.msra.mxu0 0.0
    %353 = vmatprep.subr.mxu0 0.0
    %354 = vmatpush1.xpose.msra.mxu0 0.0
    %355 = vmatprep.subr.mxu0 0.0
    %356 = vmatpush1.xpose.msra.mxu0 0.0
    %357 = vmatprep.subr.mxu0 0.0
    %358 = vmatpush1.xpose.msra.mxu0 0.0
    %359 = vmatprep.subr.mxu0 0.0
    %360 = vmatpush1.xpose.msra.mxu0 0.0
    %361 = vmatprep.subr.mxu0 0.0
    %362 = vmatpush1.xpose.msra.mxu0 0.0
    %363 = vmatprep.subr.mxu0 0.0
    %364 = vmatpush1.xpose.msra.mxu0 0.0
    %365 = vmatprep.subr.mxu0 0.0
    %366 = vmatpush1.xpose.msra.mxu0 0.0
    %367 = vmatprep.subr.mxu0 0.0
    %368 = vmatpush1.xpose.msra.mxu0 0.0
    %369 = vmatprep.subr.mxu0 0.0
    %370 = vmatpush1.xpose.msra.mxu0 0.0
    %371 = vmatprep.subr.mxu0 0.0
    %372 = vmatpush1.xpose.msra.mxu0 0.0
    %373 = vmatprep.subr.mxu0 0.0
    %374 = vmatpush1.xpose.msra.mxu0 0.0
    %375 = vmatprep.subr.mxu0 0.0
    %376 = vmatpush1.xpose.msra.mxu0 0.0
    %377 = vmatprep.subr.mxu0 0.0
    %378 = vmatpush1.xpose.msra.mxu0 0.0
    %379 = vmatprep.subr.mxu0 0.0
    %380 = vmatpush1.xpose.msra.mxu0 0.0
    %381 = vmatprep.subr.mxu0 0.0
    %382 = vmatpush1.xpose.msra.mxu0 0.0
    %383 = vmatprep.subr.mxu0 0.0
    %384 = vmatpush1.xpose.msra.mxu0 0.0
    %385 = vmatprep.subr.mxu0 0.0
    %386 = vmatpush1.xpose.msra.mxu0 0.0
    %387 = vmatprep.subr.mxu0 0.0
    %388 = vmatpush1.xpose.msra.mxu0 0.0
    %389 = vmatprep.subr.mxu0 0.0
    %390 = vmatpush1.xpose.msra.mxu0 0.0
    %391 = vmatprep.subr.mxu0 0.0
    %392 = vmatpush1.xpose.msra.mxu0 0.0
    %393 = vmatprep.subr.mxu0 0.0
    %394 = vmatpush1.xpose.msra.mxu0 0.0
    %395 = vmatprep.mubr.f32.mxu0 0.0
    %396 = vmatmul.mubr.f32.gmra.mrb[0].mxu0 %v327
    %v397 = vpop.f32.mrb[0].mxu0
    %v398 = vadd.f32 0.0, %v397
    %v399 = vpop.f32.mrb[0].mxu0
    %400 = vdwg.mxu0
    %v401 = vmul.f32 %v398, 0.35355338
    %v402 = vadd.f32 %v401, %v233
    %v403 = vsel %vm153, %v402, -inf
    %404 = vmax.xlane.f32.xlu0 %v403
    %v405 = vpop.xlane.xlu0 %404
    %v406 = vsub.f32 %v402, %v405
    %v407 = vmul.f32 %v406, 1.442695
    %v408 = vpow.pop %v407
    %v409 = vsel %vm153, %v408, 0.0
    %410 = vadd.xlane.f32.xlu0 %v409
    %v411 = vpop.xlane.xlu0 %410
    %v412 = vrcp.pop %v411
    %v413 = vmul.f32 %v408, %v412
    %414 = vrot.lane.b32.xlu0 %v142, 56
    %v415 = vpop.permute.xlu0 %414
    %v418 = vsel %vm153, %v413, 0
    %420 = vmatprep.subr.mxu0 0.0
    %421 = vmatpush1.msra.mxu0 %v415
    %422 = vmatprep.subr.mxu0 0.0
    %423 = vmatpush1.msra.mxu0 0.0
    %424 = vmatprep.subr.mxu0 0.0
    %425 = vmatpush1.msra.mxu0 0.0
    %426 = vmatprep.subr.mxu0 0.0
    %427 = vmatpush1.msra.mxu0 0.0
    %428 = vmatprep.subr.mxu0 0.0
    %429 = vmatpush1.msra.mxu0 0.0
    %430 = vmatprep.subr.mxu0 0.0
    %431 = vmatpush1.msra.mxu0 0.0
    %432 = vmatprep.subr.mxu0 0.0
    %433 = vmatpush1.msra.mxu0 0.0
    %434 = vmatprep.subr.mxu0 0.0
    %435 = vmatpush1.msra.mxu0 0.0
    %436 = vmatprep.subr.mxu0 0.0
    %437 = vmatpush1.msra.mxu0 0.0
    %438 = vmatprep.subr.mxu0 0.0
    %439 = vmatpush1.msra.mxu0 0.0
    %440 = vmatprep.subr.mxu0 0.0
    %441 = vmatpush1.msra.mxu0 0.0
    %442 = vmatprep.subr.mxu0 0.0
    %443 = vmatpush1.msra.mxu0 0.0
    %444 = vmatprep.subr.mxu0 0.0
    %445 = vmatpush1.msra.mxu0 0.0
    %446 = vmatprep.subr.mxu0 0.0
    %447 = vmatpush1.msra.mxu0 0.0
    %448 = vmatprep.subr.mxu0 0.0
    %449 = vmatpush1.msra.mxu0 0.0
    %450 = vmatprep.subr.mxu0 0.0
    %451 = vmatpush1.msra.mxu0 0.0
    %452 = vmatprep.subr.mxu0 0.0
    %453 = vmatpush1.msra.mxu0 0.0
    %454 = vmatprep.subr.mxu0 0.0
    %455 = vmatpush1.msra.mxu0 0.0
    %456 = vmatprep.subr.mxu0 0.0
    %457 = vmatpush1.msra.mxu0 0.0
    %458 = vmatprep.subr.mxu0 0.0
    %459 = vmatpush1.msra.mxu0 0.0
    %460 = vmatprep.subr.mxu0 0.0
    %461 = vmatpush1.msra.mxu0 0.0
    %462 = vmatprep.subr.mxu0 0.0
    %463 = vmatpush1.msra.mxu0 0.0
    %464 = vmatprep.subr.mxu0 0.0
    %465 = vmatpush1.msra.mxu0 0.0
    %466 = vmatprep.subr.mxu0 0.0
    %467 = vmatpush1.msra.mxu0 0.0
    %468 = vmatprep.subr.mxu0 0.0
    %469 = vmatpush1.msra.mxu0 0.0
    %470 = vmatprep.subr.mxu0 0.0
    %471 = vmatpush1.msra.mxu0 0.0
    %472 = vmatprep.subr.mxu0 0.0
    %473 = vmatpush1.msra.mxu0 0.0
    %474 = vmatprep.subr.mxu0 0.0
    %475 = vmatpush1.msra.mxu0 0.0
    %476 = vmatprep.subr.mxu0 0.0
    %477 = vmatpush1.msra.mxu0 0.0
    %478 = vmatprep.subr.mxu0 0.0
    %479 = vmatpush1.msra.mxu0 0.0
    %480 = vmatprep.subr.mxu0 0.0
    %481 = vmatpush1.msra.mxu0 0.0
    %482 = vmatprep.subr.mxu0 0.0
    %483 = vmatpush1.msra.mxu0 0.0
    %484 = vmatprep.mubr.f32.mxu0 0.0
    %485 = vmatmul.mubr.f32.gmra.mrb[0].mxu0 %v418
    %v486 = vpop.f32.mrb[0].mxu0
    %v487 = vadd.f32 0.0, %v486
    %v488 = vpop.f32.mrb[0].mxu0
    %489 = vdwg.mxu0
    %v491 = vsel %vm153, %v487, 0
    %493 = vmatprep.subr.mxu0 0.0
    %494 = vmatpush1.msra.mxu0 %v58
    %495 = vmatprep.subr.mxu0 0.0
    %496 = vmatpush1.msra.mxu0 0.0
    %497 = vmatprep.subr.mxu0 0.0
    %498 = vmatpush1.msra.mxu0 0.0
    %499 = vmatprep.subr.mxu0 0.0
    %500 = vmatpush1.msra.mxu0 0.0
    %501 = vmatprep.subr.mxu0 0.0
    %502 = vmatpush1.msra.mxu0 0.0
    %503 = vmatprep.subr.mxu0 0.0
    %504 = vmatpush1.msra.mxu0 0.0
    %505 = vmatprep.subr.mxu0 0.0
    %506 = vmatpush1.msra.mxu0 0.0
    %507 = vmatprep.subr.mxu0 0.0
    %508 = vmatpush1.msra.mxu0 0.0
    %509 = vmatprep.subr.mxu0 0.0
    %510 = vmatpush1.msra.mxu0 0.0
    %511 = vmatprep.subr.mxu0 0.0
    %512 = vmatpush1.msra.mxu0 0.0
    %513 = vmatprep.subr.mxu0 0.0
    %514 = vmatpush1.msra.mxu0 0.0
    %515 = vmatprep.subr.mxu0 0.0
    %516 = vmatpush1.msra.mxu0 0.0
    %517 = vmatprep.subr.mxu0 0.0
    %518 = vmatpush1.msra.mxu0 0.0
    %519 = vmatprep.subr.mxu0 0.0
    %520 = vmatpush1.msra.mxu0 0.0
    %521 = vmatprep.subr.mxu0 0.0
    %522 = vmatpush1.msra.mxu0 0.0
    %523 = vmatprep.subr.mxu0 0.0
    %524 = vmatpush1.msra.mxu0 0.0
    %525 = vmatprep.subr.mxu0 0.0
    %526 = vmatpush1.msra.mxu0 0.0
    %527 = vmatprep.subr.mxu0 0.0
    %528 = vmatpush1.msra.mxu0 0.0
    %529 = vmatprep.subr.mxu0 0.0
    %530 = vmatpush1.msra.mxu0 0.0
    %531 = vmatprep.subr.mxu0 0.0
    %532 = vmatpush1.msra.mxu0 0.0
    %533 = vmatprep.subr.mxu0 0.0
    %534 = vmatpush1.msra.mxu0 0.0
    %535 = vmatprep.subr.mxu0 0.0
    %536 = vmatpush1.msra.mxu0 0.0
    %537 = vmatprep.subr.mxu0 0.0
    %538 = vmatpush1.msra.mxu0 0.0
    %539 = vmatprep.subr.mxu0 0.0
    %540 = vmatpush1.msra.mxu0 0.0
    %541 = vmatprep.subr.mxu0 0.0
    %542 = vmatpush1.msra.mxu0 0.0
    %543 = vmatprep.subr.mxu0 0.0
    %544 = vmatpush1.msra.mxu0 0.0
    %545 = vmatprep.subr.mxu0 0.0
    %546 = vmatpush1.msra.mxu0 0.0
    %547 = vmatprep.subr.mxu0 0.0
    %548 = vmatpush1.msra.mxu0 0.0
    %549 = vmatprep.subr.mxu0 0.0
    %550 = vmatpush1.msra.mxu0 0.0
    %551 = vmatprep.subr.mxu0 0.0
    %552 = vmatpush1.msra.mxu0 0.0
    %553 = vmatprep.subr.mxu0 0.0
    %554 = vmatpush1.msra.mxu0 0.0
    %555 = vmatprep.subr.mxu0 0.0
    %556 = vmatpush1.msra.mxu0 0.0
    %557 = vmatprep.mubr.f32.mxu0 0.0
    %558 = vmatmul.mubr.f32.gmra.mrb[0].mxu0 %v491
    %v559 = vpop.f32.mrb[0].mxu0
    %v560 = vadd.f32 0.0, %v559
    %v561 = vpop.f32.mrb[0].mxu0
    %562 = vdwg.mxu0
    %v564 = vsel %vm153, %v320, 0
    %566 = vmatprep.subr.mxu0 0.0
    %567 = vmatpush1.msra.mxu0 %v57
    %568 = vmatprep.subr.mxu0 0.0
    %569 = vmatpush1.msra.mxu0 0.0
    %570 = vmatprep.subr.mxu0 0.0
    %571 = vmatpush1.msra.mxu0 0.0
    %572 = vmatprep.subr.mxu0 0.0
    %573 = vmatpush1.msra.mxu0 0.0
    %574 = vmatprep.subr.mxu0 0.0
    %575 = vmatpush1.msra.mxu0 0.0
    %576 = vmatprep.subr.mxu0 0.0
    %577 = vmatpush1.msra.mxu0 0.0
    %578 = vmatprep.subr.mxu0 0.0
    %579 = vmatpush1.msra.mxu0 0.0
    %580 = vmatprep.subr.mxu0 0.0
    %581 = vmatpush1.msra.mxu0 0.0
    %582 = vmatprep.subr.mxu0 0.0
    %583 = vmatpush1.msra.mxu0 0.0
    %584 = vmatprep.subr.mxu0 0.0
    %585 = vmatpush1.msra.mxu0 0.0
    %586 = vmatprep.subr.mxu0 0.0
    %587 = vmatpush1.msra.mxu0 0.0
    %588 = vmatprep.subr.mxu0 0.0
    %589 = vmatpush1.msra.mxu0 0.0
    %590 = vmatprep.subr.mxu0 0.0
    %591 = vmatpush1.msra.mxu0 0.0
    %592 = vmatprep.subr.mxu0 0.0
    %593 = vmatpush1.msra.mxu0 0.0
    %594 = vmatprep.subr.mxu0 0.0
    %595 = vmatpush1.msra.mxu0 0.0
    %596 = vmatprep.subr.mxu0 0.0
    %597 = vmatpush1.msra.mxu0 0.0
    %598 = vmatprep.subr.mxu0 0.0
    %599 = vmatpush1.msra.mxu0 0.0
    %600 = vmatprep.subr.mxu0 0.0
    %601 = vmatpush1.msra.mxu0 0.0
    %602 = vmatprep.subr.mxu0 0.0
    %603 = vmatpush1.msra.mxu0 0.0
    %604 = vmatprep.subr.mxu0 0.0
    %605 = vmatpush1.msra.mxu0 0.0
    %606 = vmatprep.subr.mxu0 0.0
    %607 = vmatpush1.msra.mxu0 0.0
    %608 = vmatprep.subr.mxu0 0.0
    %609 = vmatpush1.msra.mxu0 0.0
    %610 = vmatprep.subr.mxu0 0.0
    %611 = vmatpush1.msra.mxu0 0.0
    %612 = vmatprep.subr.mxu0 0.0
    %613 = vmatpush1.msra.mxu0 0.0
    %614 = vmatprep.subr.mxu0 0.0
    %615 = vmatpush1.msra.mxu0 0.0
    %616 = vmatprep.subr.mxu0 0.0
    %617 = vmatpush1.msra.mxu0 0.0
    %618 = vmatprep.subr.mxu0 0.0
    %619 = vmatpush1.msra.mxu0 0.0
    %620 = vmatprep.subr.mxu0 0.0
    %621 = vmatpush1.msra.mxu0 0.0
    %622 = vmatprep.subr.mxu0 0.0
    %623 = vmatpush1.msra.mxu0 0.0
    %624 = vmatprep.subr.mxu0 0.0
    %625 = vmatpush1.msra.mxu0 0.0
    %626 = vmatprep.subr.mxu0 0.0
    %627 = vmatpush1.msra.mxu0 0.0
    %628 = vmatprep.subr.mxu0 0.0
    %629 = vmatpush1.msra.mxu0 0.0
    %630 = vmatprep.mubr.f32.mxu0 0.0
    %631 = vmatmul.mubr.f32.gmra.mrb[0].mxu0 %v564
    %v632 = vpop.f32.mrb[0].mxu0
    %v633 = vadd.f32 %v560, %v632
    %v634 = vpop.f32.mrb[0].mxu0
    %635 = vdwg.mxu0
    %636 = vrot.lane.b32.xlu0 %v142, 112
    %v637 = vpop.permute.xlu0 %636
    %638 = vrot.lane.b32.xlu0 %v142, 80
    %v639 = vpop.permute.xlu0 %638
    %v640 = vsel %vm153, %v637, 0
    %v642 = vsel %vm153, %v639, 0
    %644 = vmatprep.subr.mxu0 0.0
    %645 = vmatpush1.xpose.msra.mxu0 %v642
    %646 = vmatprep.subr.mxu0 0.0
    %647 = vmatpush1.xpose.msra.mxu0 0.0
    %648 = vmatprep.subr.mxu0 0.0
    %649 = vmatpush1.xpose.msra.mxu0 0.0
    %650 = vmatprep.subr.mxu0 0.0
    %651 = vmatpush1.xpose.msra.mxu0 0.0
    %652 = vmatprep.subr.mxu0 0.0
    %653 = vmatpush1.xpose.msra.mxu0 0.0
    %654 = vmatprep.subr.mxu0 0.0
    %655 = vmatpush1.xpose.msra.mxu0 0.0
    %656 = vmatprep.subr.mxu0 0.0
    %657 = vmatpush1.xpose.msra.mxu0 0.0
    %658 = vmatprep.subr.mxu0 0.0
    %659 = vmatpush1.xpose.msra.mxu0 0.0
    %660 = vmatprep.subr.mxu0 0.0
    %661 = vmatpush1.xpose.msra.mxu0 0.0
    %662 = vmatprep.subr.mxu0 0.0
    %663 = vmatpush1.xpose.msra.mxu0 0.0
    %664 = vmatprep.subr.mxu0 0.0
    %665 = vmatpush1.xpose.msra.mxu0 0.0
    %666 = vmatprep.subr.mxu0 0.0
    %667 = vmatpush1.xpose.msra.mxu0 0.0
    %668 = vmatprep.subr.mxu0 0.0
    %669 = vmatpush1.xpose.msra.mxu0 0.0
    %670 = vmatprep.subr.mxu0 0.0
    %671 = vmatpush1.xpose.msra.mxu0 0.0
    %672 = vmatprep.subr.mxu0 0.0
    %673 = vmatpush1.xpose.msra.mxu0 0.0
    %674 = vmatprep.subr.mxu0 0.0
    %675 = vmatpush1.xpose.msra.mxu0 0.0
    %676 = vmatprep.subr.mxu0 0.0
    %677 = vmatpush1.xpose.msra.mxu0 0.0
    %678 = vmatprep.subr.mxu0 0.0
    %679 = vmatpush1.xpose.msra.mxu0 0.0
    %680 = vmatprep.subr.mxu0 0.0
    %681 = vmatpush1.xpose.msra.mxu0 0.0
    %682 = vmatprep.subr.mxu0 0.0
    %683 = vmatpush1.xpose.msra.mxu0 0.0
    %684 = vmatprep.subr.mxu0 0.0
    %685 = vmatpush1.xpose.msra.mxu0 0.0
    %686 = vmatprep.subr.mxu0 0.0
    %687 = vmatpush1.xpose.msra.mxu0 0.0
    %688 = vmatprep.subr.mxu0 0.0
    %689 = vmatpush1.xpose.msra.mxu0 0.0
    %690 = vmatprep.subr.mxu0 0.0
    %691 = vmatpush1.xpose.msra.mxu0 0.0
    %692 = vmatprep.subr.mxu0 0.0
    %693 = vmatpush1.xpose.msra.mxu0 0.0
    %694 = vmatprep.subr.mxu0 0.0
    %695 = vmatpush1.xpose.msra.mxu0 0.0
    %696 = vmatprep.subr.mxu0 0.0
    %697 = vmatpush1.xpose.msra.mxu0 0.0
    %698 = vmatprep.subr.mxu0 0.0
    %699 = vmatpush1.xpose.msra.mxu0 0.0
    %700 = vmatprep.subr.mxu0 0.0
    %701 = vmatpush1.xpose.msra.mxu0 0.0
    %702 = vmatprep.subr.mxu0 0.0
    %703 = vmatpush1.xpose.msra.mxu0 0.0
    %704 = vmatprep.subr.mxu0 0.0
    %705 = vmatpush1.xpose.msra.mxu0 0.0
    %706 = vmatprep.subr.mxu0 0.0
    %707 = vmatpush1.xpose.msra.mxu0 0.0
    %708 = vmatprep.mubr.f32.mxu0 0.0
    %709 = vmatmul.mubr.f32.gmra.mrb[0].mxu0 %v640
    %v710 = vpop.f32.mrb[0].mxu0
    %v711 = vadd.f32 0.0, %v710
    %v712 = vpop.f32.mrb[0].mxu0
    %713 = vdwg.mxu0
    %v714 = vmul.f32 %v711, 0.35355338
    %v715 = vadd.f32 %v714, %v233
    %v716 = vsel %vm153, %v715, -inf
    %717 = vmax.xlane.f32.xlu0 %v716
    %v718 = vpop.xlane.xlu0 %717
    %v719 = vsub.f32 %v715, %v718
    %v720 = vmul.f32 %v719, 1.442695
    %v721 = vpow.pop %v720
    %v722 = vsel %vm153, %v721, 0.0
    %723 = vadd.xlane.f32.xlu0 %v722
    %v724 = vpop.xlane.xlu0 %723
    %v725 = vrcp.pop %v724
    %v726 = vmul.f32 %v721, %v725
    %727 = vrot.lane.b32.xlu0 %v142, 48
    %v728 = vpop.permute.xlu0 %727
    %v731 = vsel %vm153, %v726, 0
    %733 = vmatprep.subr.mxu0 0.0
    %734 = vmatpush1.msra.mxu0 %v728
    %735 = vmatprep.subr.mxu0 0.0
    %736 = vmatpush1.msra.mxu0 0.0
    %737 = vmatprep.subr.mxu0 0.0
    %738 = vmatpush1.msra.mxu0 0.0
    %739 = vmatprep.subr.mxu0 0.0
    %740 = vmatpush1.msra.mxu0 0.0
    %741 = vmatprep.subr.mxu0 0.0
    %742 = vmatpush1.msra.mxu0 0.0
    %743 = vmatprep.subr.mxu0 0.0
    %744 = vmatpush1.msra.mxu0 0.0
    %745 = vmatprep.subr.mxu0 0.0
    %746 = vmatpush1.msra.mxu0 0.0
    %747 = vmatprep.subr.mxu0 0.0
    %748 = vmatpush1.msra.mxu0 0.0
    %749 = vmatprep.subr.mxu0 0.0
    %750 = vmatpush1.msra.mxu0 0.0
    %751 = vmatprep.subr.mxu0 0.0
    %752 = vmatpush1.msra.mxu0 0.0
    %753 = vmatprep.subr.mxu0 0.0
    %754 = vmatpush1.msra.mxu0 0.0
    %755 = vmatprep.subr.mxu0 0.0
    %756 = vmatpush1.msra.mxu0 0.0
    %757 = vmatprep.subr.mxu0 0.0
    %758 = vmatpush1.msra.mxu0 0.0
    %759 = vmatprep.subr.mxu0 0.0
    %760 = vmatpush1.msra.mxu0 0.0
    %761 = vmatprep.subr.mxu0 0.0
    %762 = vmatpush1.msra.mxu0 0.0
    %763 = vmatprep.subr.mxu0 0.0
    %764 = vmatpush1.msra.mxu0 0.0
    %765 = vmatprep.subr.mxu0 0.0
    %766 = vmatpush1.msra.mxu0 0.0
    %767 = vmatprep.subr.mxu0 0.0
    %768 = vmatpush1.msra.mxu0 0.0
    %769 = vmatprep.subr.mxu0 0.0
    %770 = vmatpush1.msra.mxu0 0.0
    %771 = vmatprep.subr.mxu0 0.0
    %772 = vmatpush1.msra.mxu0 0.0
    %773 = vmatprep.subr.mxu0 0.0
    %774 = vmatpush1.msra.mxu0 0.0
    %775 = vmatprep.subr.mxu0 0.0
    %776 = vmatpush1.msra.mxu0 0.0
    %777 = vmatprep.subr.mxu0 0.0
    %778 = vmatpush1.msra.mxu0 0.0
    %779 = vmatprep.subr.mxu0 0.0
    %780 = vmatpush1.msra.mxu0 0.0
    %781 = vmatprep.subr.mxu0 0.0
    %782 = vmatpush1.msra.mxu0 0.0
    %783 = vmatprep.subr.mxu0 0.0
    %784 = vmatpush1.msra.mxu0 0.0
    %785 = vmatprep.subr.mxu0 0.0
    %786 = vmatpush1.msra.mxu0 0.0
    %787 = vmatprep.subr.mxu0 0.0
    %788 = vmatpush1.msra.mxu0 0.0
    %789 = vmatprep.subr.mxu0 0.0
    %790 = vmatpush1.msra.mxu0 0.0
    %791 = vmatprep.subr.mxu0 0.0
    %792 = vmatpush1.msra.mxu0 0.0
    %793 = vmatprep.subr.mxu0 0.0
    %794 = vmatpush1.msra.mxu0 0.0
    %795 = vmatprep.subr.mxu0 0.0
    %796 = vmatpush1.msra.mxu0 0.0
    %797 = vmatprep.mubr.f32.mxu0 0.0
    %798 = vmatmul.mubr.f32.gmra.mrb[0].mxu0 %v731
    %v799 = vpop.f32.mrb[0].mxu0
    %v800 = vadd.f32 0.0, %v799
    %v801 = vpop.f32.mrb[0].mxu0
    %802 = vdwg.mxu0
    %v804 = vsel %vm153, %v800, 0
    %806 = vmatprep.subr.mxu0 0.0
    %807 = vmatpush1.msra.mxu0 %v59
    %808 = vmatprep.subr.mxu0 0.0
    %809 = vmatpush1.msra.mxu0 0.0
    %810 = vmatprep.subr.mxu0 0.0
    %811 = vmatpush1.msra.mxu0 0.0
    %812 = vmatprep.subr.mxu0 0.0
    %813 = vmatpush1.msra.mxu0 0.0
    %814 = vmatprep.subr.mxu0 0.0
    %815 = vmatpush1.msra.mxu0 0.0
    %816 = vmatprep.subr.mxu0 0.0
    %817 = vmatpush1.msra.mxu0 0.0
    %818 = vmatprep.subr.mxu0 0.0
    %819 = vmatpush1.msra.mxu0 0.0
    %820 = vmatprep.subr.mxu0 0.0
    %821 = vmatpush1.msra.mxu0 0.0
    %822 = vmatprep.subr.mxu0 0.0
    %823 = vmatpush1.msra.mxu0 0.0
    %824 = vmatprep.subr.mxu0 0.0
    %825 = vmatpush1.msra.mxu0 0.0
    %826 = vmatprep.subr.mxu0 0.0
    %827 = vmatpush1.msra.mxu0 0.0
    %828 = vmatprep.subr.mxu0 0.0
    %829 = vmatpush1.msra.mxu0 0.0
    %830 = vmatprep.subr.mxu0 0.0
    %831 = vmatpush1.msra.mxu0 0.0
    %832 = vmatprep.subr.mxu0 0.0
    %833 = vmatpush1.msra.mxu0 0.0
    %834 = vmatprep.subr.mxu0 0.0
    %835 = vmatpush1.msra.mxu0 0.0
    %836 = vmatprep.subr.mxu0 0.0
    %837 = vmatpush1.msra.mxu0 0.0
    %838 = vmatprep.subr.mxu0 0.0
    %839 = vmatpush1.msra.mxu0 0.0
    %840 = vmatprep.subr.mxu0 0.0
    %841 = vmatpush1.msra.mxu0 0.0
    %842 = vmatprep.subr.mxu0 0.0
    %843 = vmatpush1.msra.mxu0 0.0
    %844 = vmatprep.subr.mxu0 0.0
    %845 = vmatpush1.msra.mxu0 0.0
    %846 = vmatprep.subr.mxu0 0.0
    %847 = vmatpush1.msra.mxu0 0.0
    %848 = vmatprep.subr.mxu0 0.0
    %849 = vmatpush1.msra.mxu0 0.0
    %850 = vmatprep.subr.mxu0 0.0
    %851 = vmatpush1.msra.mxu0 0.0
    %852 = vmatprep.subr.mxu0 0.0
    %853 = vmatpush1.msra.mxu0 0.0
    %854 = vmatprep.subr.mxu0 0.0
    %855 = vmatpush1.msra.mxu0 0.0
    %856 = vmatprep.subr.mxu0 0.0
    %857 = vmatpush1.msra.mxu0 0.0
    %858 = vmatprep.subr.mxu0 0.0
    %859 = vmatpush1.msra.mxu0 0.0
    %860 = vmatprep.subr.mxu0 0.0
    %861 = vmatpush1.msra.mxu0 0.0
    %862 = vmatprep.subr.mxu0 0.0
    %863 = vmatpush1.msra.mxu0 0.0
    %864 = vmatprep.subr.mxu0 0.0
    %865 = vmatpush1.msra.mxu0 0.0
    %866 = vmatprep.subr.mxu0 0.0
    %867 = vmatpush1.msra.mxu0 0.0
    %868 = vmatprep.subr.mxu0 0.0
    %869 = vmatpush1.msra.mxu0 0.0
    %870 = vmatprep.mubr.f32.mxu0 0.0
    %871 = vmatmul.mubr.f32.gmra.mrb[0].mxu0 %v804
    %v872 = vpop.f32.mrb[0].mxu0
    %v873 = vadd.f32 0.0, %v872
    %v874 = vpop.f32.mrb[0].mxu0
    %875 = vdwg.mxu0
    %v876 = vadd.f32 %v633, %v873
    %877 = vrot.lane.b32.xlu0 %v142, 104
    %v878 = vpop.permute.xlu0 %877
    %879 = vrot.lane.b32.xlu0 %v142, 72
    %v880 = vpop.permute.xlu0 %879
    %v881 = vsel %vm153, %v878, 0
    %v883 = vsel %vm153, %v880, 0
    %885 = vmatprep.subr.mxu0 0.0
    %886 = vmatpush1.xpose.msra.mxu0 %v883
    %887 = vmatprep.subr.mxu0 0.0
    %888 = vmatpush1.xpose.msra.mxu0 0.0
    %889 = vmatprep.subr.mxu0 0.0
    %890 = vmatpush1.xpose.msra.mxu0 0.0
    %891 = vmatprep.subr.mxu0 0.0
    %892 = vmatpush1.xpose.msra.mxu0 0.0
    %893 = vmatprep.subr.mxu0 0.0
    %894 = vmatpush1.xpose.msra.mxu0 0.0
    %895 = vmatprep.subr.mxu0 0.0
    %896 = vmatpush1.xpose.msra.mxu0 0.0
    %897 = vmatprep.subr.mxu0 0.0
    %898 = vmatpush1.xpose.msra.mxu0 0.0
    %899 = vmatprep.subr.mxu0 0.0
    %900 = vmatpush1.xpose.msra.mxu0 0.0
    %901 = vmatprep.subr.mxu0 0.0
    %902 = vmatpush1.xpose.msra.mxu0 0.0
    %903 = vmatprep.subr.mxu0 0.0
    %904 = vmatpush1.xpose.msra.mxu0 0.0
    %905 = vmatprep.subr.mxu0 0.0
    %906 = vmatpush1.xpose.msra.mxu0 0.0
    %907 = vmatprep.subr.mxu0 0.0
    %908 = vmatpush1.xpose.msra.mxu0 0.0
    %909 = vmatprep.subr.mxu0 0.0
    %910 = vmatpush1.xpose.msra.mxu0 0.0
    %911 = vmatprep.subr.mxu0 0.0
    %912 = vmatpush1.xpose.msra.mxu0 0.0
    %913 = vmatprep.subr.mxu0 0.0
    %914 = vmatpush1.xpose.msra.mxu0 0.0
    %915 = vmatprep.subr.mxu0 0.0
    %916 = vmatpush1.xpose.msra.mxu0 0.0
    %917 = vmatprep.subr.mxu0 0.0
    %918 = vmatpush1.xpose.msra.mxu0 0.0
    %919 = vmatprep.subr.mxu0 0.0
    %920 = vmatpush1.xpose.msra.mxu0 0.0
    %921 = vmatprep.subr.mxu0 0.0
    %922 = vmatpush1.xpose.msra.mxu0 0.0
    %923 = vmatprep.subr.mxu0 0.0
    %924 = vmatpush1.xpose.msra.mxu0 0.0
    %925 = vmatprep.subr.mxu0 0.0
    %926 = vmatpush1.xpose.msra.mxu0 0.0
    %927 = vmatprep.subr.mxu0 0.0
    %928 = vmatpush1.xpose.msra.mxu0 0.0
    %929 = vmatprep.subr.mxu0 0.0
    %930 = vmatpush1.xpose.msra.mxu0 0.0
    %931 = vmatprep.subr.mxu0 0.0
    %932 = vmatpush1.xpose.msra.mxu0 0.0
    %933 = vmatprep.subr.mxu0 0.0
    %934 = vmatpush1.xpose.msra.mxu0 0.0
    %935 = vmatprep.subr.mxu0 0.0
    %936 = vmatpush1.xpose.msra.mxu0 0.0
    %937 = vmatprep.subr.mxu0 0.0
    %938 = vmatpush1.xpose.msra.mxu0 0.0
    %939 = vmatprep.subr.mxu0 0.0
    %940 = vmatpush1.xpose.msra.mxu0 0.0
    %941 = vmatprep.subr.mxu0 0.0
    %942 = vmatpush1.xpose.msra.mxu0 0.0
    %943 = vmatprep.subr.mxu0 0.0
    %944 = vmatpush1.xpose.msra.mxu0 0.0
    %945 = vmatprep.subr.mxu0 0.0
    %946 = vmatpush1.xpose.msra.mxu0 0.0
    %947 = vmatprep.subr.mxu0 0.0
    %948 = vmatpush1.xpose.msra.mxu0 0.0
    %949 = vmatprep.mubr.f32.mxu0 0.0
    %950 = vmatmul.mubr.f32.gmra.mrb[0].mxu0 %v881
    %v951 = vpop.f32.mrb[0].mxu0
    %v952 = vadd.f32 0.0, %v951
    %v953 = vpop.f32.mrb[0].mxu0
    %954 = vdwg.mxu0
    %v955 = vmul.f32 %v952, 0.35355338
    %v956 = vadd.f32 %v955, %v233
    %v957 = vsel %vm153, %v956, -inf
    %958 = vmax.xlane.f32.xlu0 %v957
    %v959 = vpop.xlane.xlu0 %958
    %v960 = vsub.f32 %v956, %v959
    %v961 = vmul.f32 %v960, 1.442695
    %v962 = vpow.pop %v961
    %v963 = vsel %vm153, %v962, 0.0
    %964 = vadd.xlane.f32.xlu0 %v963
    %v965 = vpop.xlane.xlu0 %964
    %v966 = vrcp.pop %v965
    %v967 = vmul.f32 %v962, %v966
    %968 = vrot.lane.b32.xlu0 %v142, 40
    %v969 = vpop.permute.xlu0 %968
    %v972 = vsel %vm153, %v967, 0
    %974 = vmatprep.subr.mxu0 0.0
    %975 = vmatpush1.msra.mxu0 %v969
    %976 = vmatprep.subr.mxu0 0.0
    %977 = vmatpush1.msra.mxu0 0.0
    %978 = vmatprep.subr.mxu0 0.0
    %979 = vmatpush1.msra.mxu0 0.0
    %980 = vmatprep.subr.mxu0 0.0
    %981 = vmatpush1.msra.mxu0 0.0
    %982 = vmatprep.subr.mxu0 0.0
    %983 = vmatpush1.msra.mxu0 0.0
    %984 = vmatprep.subr.mxu0 0.0
    %985 = vmatpush1.msra.mxu0 0.0
    %986 = vmatprep.subr.mxu0 0.0
    %987 = vmatpush1.msra.mxu0 0.0
    %988 = vmatprep.subr.mxu0 0.0
    %989 = vmatpush1.msra.mxu0 0.0
    %990 = vmatprep.subr.mxu0 0.0
    %991 = vmatpush1.msra.mxu0 0.0
    %992 = vmatprep.subr.mxu0 0.0
    %993 = vmatpush1.msra.mxu0 0.0
    %994 = vmatprep.subr.mxu0 0.0
    %995 = vmatpush1.msra.mxu0 0.0
    %996 = vmatprep.subr.mxu0 0.0
    %997 = vmatpush1.msra.mxu0 0.0
    %998 = vmatprep.subr.mxu0 0.0
    %999 = vmatpush1.msra.mxu0 0.0
    %1000 = vmatprep.subr.mxu0 0.0
    %1001 = vmatpush1.msra.mxu0 0.0
    %1002 = vmatprep.subr.mxu0 0.0
    %1003 = vmatpush1.msra.mxu0 0.0
    %1004 = vmatprep.subr.mxu0 0.0
    %1005 = vmatpush1.msra.mxu0 0.0
    %1006 = vmatprep.subr.mxu0 0.0
    %1007 = vmatpush1.msra.mxu0 0.0
    %1008 = vmatprep.subr.mxu0 0.0
    %1009 = vmatpush1.msra.mxu0 0.0
    %1010 = vmatprep.subr.mxu0 0.0
    %1011 = vmatpush1.msra.mxu0 0.0
    %1012 = vmatprep.subr.mxu0 0.0
    %1013 = vmatpush1.msra.mxu0 0.0
    %1014 = vmatprep.subr.mxu0 0.0
    %1015 = vmatpush1.msra.mxu0 0.0
    %1016 = vmatprep.subr.mxu0 0.0
    %1017 = vmatpush1.msra.mxu0 0.0
    %1018 = vmatprep.subr.mxu0 0.0
    %1019 = vmatpush1.msra.mxu0 0.0
    %1020 = vmatprep.subr.mxu0 0.0
    %1021 = vmatpush1.msra.mxu0 0.0
    %1022 = vmatprep.subr.mxu0 0.0
    %1023 = vmatpush1.msra.mxu0 0.0
    %1024 = vmatprep.subr.mxu0 0.0
    %1025 = vmatpush1.msra.mxu0 0.0
    %1026 = vmatprep.subr.mxu0 0.0
    %1027 = vmatpush1.msra.mxu0 0.0
    %1028 = vmatprep.subr.mxu0 0.0
    %1029 = vmatpush1.msra.mxu0 0.0
    %1030 = vmatprep.subr.mxu0 0.0
    %1031 = vmatpush1.msra.mxu0 0.0
    %1032 = vmatprep.subr.mxu0 0.0
    %1033 = vmatpush1.msra.mxu0 0.0
    %1034 = vmatprep.subr.mxu0 0.0
    %1035 = vmatpush1.msra.mxu0 0.0
    %1036 = vmatprep.subr.mxu0 0.0
    %1037 = vmatpush1.msra.mxu0 0.0
    %1038 = vmatprep.mubr.f32.mxu0 0.0
    %1039 = vmatmul.mubr.f32.gmra.mrb[0].mxu0 %v972
    %v1040 = vpop.f32.mrb[0].mxu0
    %v1041 = vadd.f32 0.0, %v1040
    %v1042 = vpop.f32.mrb[0].mxu0
    %1043 = vdwg.mxu0
    %v1045 = vsel %vm153, %v1041, 0
    %1047 = vmatprep.subr.mxu0 0.0
    %1048 = vmatpush1.msra.mxu0 %v60
    %1049 = vmatprep.subr.mxu0 0.0
    %1050 = vmatpush1.msra.mxu0 0.0
    %1051 = vmatprep.subr.mxu0 0.0
    %1052 = vmatpush1.msra.mxu0 0.0
    %1053 = vmatprep.subr.mxu0 0.0
    %1054 = vmatpush1.msra.mxu0 0.0
    %1055 = vmatprep.subr.mxu0 0.0
    %1056 = vmatpush1.msra.mxu0 0.0
    %1057 = vmatprep.subr.mxu0 0.0
    %1058 = vmatpush1.msra.mxu0 0.0
    %1059 = vmatprep.subr.mxu0 0.0
    %1060 = vmatpush1.msra.mxu0 0.0
    %1061 = vmatprep.subr.mxu0 0.0
    %1062 = vmatpush1.msra.mxu0 0.0
    %1063 = vmatprep.subr.mxu0 0.0
    %1064 = vmatpush1.msra.mxu0 0.0
    %1065 = vmatprep.subr.mxu0 0.0
    %1066 = vmatpush1.msra.mxu0 0.0
    %1067 = vmatprep.subr.mxu0 0.0
    %1068 = vmatpush1.msra.mxu0 0.0
    %1069 = vmatprep.subr.mxu0 0.0
    %1070 = vmatpush1.msra.mxu0 0.0
    %1071 = vmatprep.subr.mxu0 0.0
    %1072 = vmatpush1.msra.mxu0 0.0
    %1073 = vmatprep.subr.mxu0 0.0
    %1074 = vmatpush1.msra.mxu0 0.0
    %1075 = vmatprep.subr.mxu0 0.0
    %1076 = vmatpush1.msra.mxu0 0.0
    %1077 = vmatprep.subr.mxu0 0.0
    %1078 = vmatpush1.msra.mxu0 0.0
    %1079 = vmatprep.subr.mxu0 0.0
    %1080 = vmatpush1.msra.mxu0 0.0
    %1081 = vmatprep.subr.mxu0 0.0
    %1082 = vmatpush1.msra.mxu0 0.0
    %1083 = vmatprep.subr.mxu0 0.0
    %1084 = vmatpush1.msra.mxu0 0.0
    %1085 = vmatprep.subr.mxu0 0.0
    %1086 = vmatpush1.msra.mxu0 0.0
    %1087 = vmatprep.subr.mxu0 0.0
    %1088 = vmatpush1.msra.mxu0 0.0
    %1089 = vmatprep.subr.mxu0 0.0
    %1090 = vmatpush1.msra.mxu0 0.0
    %1091 = vmatprep.subr.mxu0 0.0
    %1092 = vmatpush1.msra.mxu0 0.0
    %1093 = vmatprep.subr.mxu0 0.0
    %1094 = vmatpush1.msra.mxu0 0.0
    %1095 = vmatprep.subr.mxu0 0.0
    %1096 = vmatpush1.msra.mxu0 0.0
    %1097 = vmatprep.subr.mxu0 0.0
    %1098 = vmatpush1.msra.mxu0 0.0
    %1099 = vmatprep.subr.mxu0 0.0
    %1100 = vmatpush1.msra.mxu0 0.0
    %1101 = vmatprep.subr.mxu0 0.0
    %1102 = vmatpush1.msra.mxu0 0.0
    %1103 = vmatprep.subr.mxu0 0.0
    %1104 = vmatpush1.msra.mxu0 0.0
    %1105 = vmatprep.subr.mxu0 0.0
    %1106 = vmatpush1.msra.mxu0 0.0
    %1107 = vmatprep.subr.mxu0 0.0
    %1108 = vmatpush1.msra.mxu0 0.0
    %1109 = vmatprep.subr.mxu0 0.0
    %1110 = vmatpush1.msra.mxu0 0.0
    %1111 = vmatprep.mubr.f32.mxu0 0.0
    %1112 = vmatmul.mubr.f32.gmra.mrb[0].mxu0 %v1045
    %v1113 = vpop.f32.mrb[0].mxu0
    %v1114 = vadd.f32 0.0, %v1113
    %v1115 = vpop.f32.mrb[0].mxu0
    %1116 = vdwg.mxu0
    %v1117 = vadd.f32 %v876, %v1114
    %1119 = vrot.lane.b32.xlu0 %v147, 96
    %v1120 = vpop.permute.xlu0 %1119
    %v1121 = vsel %vm153, %v147, 0
    %v1123 = vsel %vm153, %v1120, 0
    %1125 = vmatprep.subr.mxu0 0.0
    %1126 = vmatpush1.xpose.msra.mxu0 %v1123
    %1127 = vmatprep.subr.mxu0 0.0
    %1128 = vmatpush1.xpose.msra.mxu0 0.0
    %1129 = vmatprep.subr.mxu0 0.0
    %1130 = vmatpush1.xpose.msra.mxu0 0.0
    %1131 = vmatprep.subr.mxu0 0.0
    %1132 = vmatpush1.xpose.msra.mxu0 0.0
    %1133 = vmatprep.subr.mxu0 0.0
    %1134 = vmatpush1.xpose.msra.mxu0 0.0
    %1135 = vmatprep.subr.mxu0 0.0
    %1136 = vmatpush1.xpose.msra.mxu0 0.0
    %1137 = vmatprep.subr.mxu0 0.0
    %1138 = vmatpush1.xpose.msra.mxu0 0.0
    %1139 = vmatprep.subr.mxu0 0.0
    %1140 = vmatpush1.xpose.msra.mxu0 0.0
    %1141 = vmatprep.subr.mxu0 0.0
    %1142 = vmatpush1.xpose.msra.mxu0 0.0
    %1143 = vmatprep.subr.mxu0 0.0
    %1144 = vmatpush1.xpose.msra.mxu0 0.0
    %1145 = vmatprep.subr.mxu0 0.0
    %1146 = vmatpush1.xpose.msra.mxu0 0.0
    %1147 = vmatprep.subr.mxu0 0.0
    %1148 = vmatpush1.xpose.msra.mxu0 0.0
    %1149 = vmatprep.subr.mxu0 0.0
    %1150 = vmatpush1.xpose.msra.mxu0 0.0
    %1151 = vmatprep.subr.mxu0 0.0
    %1152 = vmatpush1.xpose.msra.mxu0 0.0
    %1153 = vmatprep.subr.mxu0 0.0
    %1154 = vmatpush1.xpose.msra.mxu0 0.0
    %1155 = vmatprep.subr.mxu0 0.0
    %1156 = vmatpush1.xpose.msra.mxu0 0.0
    %1157 = vmatprep.subr.mxu0 0.0
    %1158 = vmatpush1.xpose.msra.mxu0 0.0
    %1159 = vmatprep.subr.mxu0 0.0
    %1160 = vmatpush1.xpose.msra.mxu0 0.0
    %1161 = vmatprep.subr.mxu0 0.0
    %1162 = vmatpush1.xpose.msra.mxu0 0.0
    %1163 = vmatprep.subr.mxu0 0.0
    %1164 = vmatpush1.xpose.msra.mxu0 0.0
    %1165 = vmatprep.subr.mxu0 0.0
    %1166 = vmatpush1.xpose.msra.mxu0 0.0
    %1167 = vmatprep.subr.mxu0 0.0
    %1168 = vmatpush1.xpose.msra.mxu0 0.0
    %1169 = vmatprep.subr.mxu0 0.0
    %1170 = vmatpush1.xpose.msra.mxu0 0.0
    %1171 = vmatprep.subr.mxu0 0.0
    %1172 = vmatpush1.xpose.msra.mxu0 0.0
    %1173 = vmatprep.subr.mxu0 0.0
    %1174 = vmatpush1.xpose.msra.mxu0 0.0
    %1175 = vmatprep.subr.mxu0 0.0
    %1176 = vmatpush1.xpose.msra.mxu0 0.0
    %1177 = vmatprep.subr.mxu0 0.0
    %1178 = vmatpush1.xpose.msra.mxu0 0.0
    %1179 = vmatprep.subr.mxu0 0.0
    %1180 = vmatpush1.xpose.msra.mxu0 0.0
    %1181 = vmatprep.subr.mxu0 0.0
    %1182 = vmatpush1.xpose.msra.mxu0 0.0
    %1183 = vmatprep.subr.mxu0 0.0
    %1184 = vmatpush1.xpose.msra.mxu0 0.0
    %1185 = vmatprep.subr.mxu0 0.0
    %1186 = vmatpush1.xpose.msra.mxu0 0.0
    %1187 = vmatprep.subr.mxu0 0.0
    %1188 = vmatpush1.xpose.msra.mxu0 0.0
    %1189 = vmatprep.mubr.f32.mxu0 0.0
    %1190 = vmatmul.mubr.f32.gmra.mrb[0].mxu0 %v1121
    %v1191 = vpop.f32.mrb[0].mxu0
    %v1192 = vadd.f32 0.0, %v1191
    %v1193 = vpop.f32.mrb[0].mxu0
    %1194 = vdwg.mxu0
    %v1195 = vmul.f32 %v1192, 0.35355338
    %v1197 = vlaneseq
    %v1198 = vshrl.u32 %v1197, 7
    %v1199 = vsub.s32 0, %v1198
    %v1200 = vrot.slane %v46, %v1199
    %v1202 = vadd.f32 %v1195, %v1200
    %v1203 = vsel %vm153, %v1202, -inf
    %1204 = vmax.xlane.f32.xlu0 %v1203
    %v1205 = vpop.xlane.xlu0 %1204
    %v1206 = vsub.f32 %v1202, %v1205
    %v1207 = vmul.f32 %v1206, 1.442695
    %v1208 = vpow.pop %v1207
    %v1209 = vsel %vm153, %v1208, 0.0
    %1210 = vadd.xlane.f32.xlu0 %v1209
    %v1211 = vpop.xlane.xlu0 %1210
    %v1212 = vrcp.pop %v1211
    %v1213 = vmul.f32 %v1208, %v1212
    %1214 = vrot.lane.b32.xlu0 %v147, 64
    %v1215 = vpop.permute.xlu0 %1214
    %v1218 = vsel %vm153, %v1213, 0
    %1220 = vmatprep.subr.mxu0 0.0
    %1221 = vmatpush1.msra.mxu0 %v1215
    %1222 = vmatprep.subr.mxu0 0.0
    %1223 = vmatpush1.msra.mxu0 0.0
    %1224 = vmatprep.subr.mxu0 0.0
    %1225 = vmatpush1.msra.mxu0 0.0
    %1226 = vmatprep.subr.mxu0 0.0
    %1227 = vmatpush1.msra.mxu0 0.0
    %1228 = vmatprep.subr.mxu0 0.0
    %1229 = vmatpush1.msra.mxu0 0.0
    %1230 = vmatprep.subr.mxu0 0.0
    %1231 = vmatpush1.msra.mxu0 0.0
    %1232 = vmatprep.subr.mxu0 0.0
    %1233 = vmatpush1.msra.mxu0 0.0
    %1234 = vmatprep.subr.mxu0 0.0
    %1235 = vmatpush1.msra.mxu0 0.0
    %1236 = vmatprep.subr.mxu0 0.0
    %1237 = vmatpush1.msra.mxu0 0.0
    %1238 = vmatprep.subr.mxu0 0.0
    %1239 = vmatpush1.msra.mxu0 0.0
    %1240 = vmatprep.subr.mxu0 0.0
    %1241 = vmatpush1.msra.mxu0 0.0
    %1242 = vmatprep.subr.mxu0 0.0
    %1243 = vmatpush1.msra.mxu0 0.0
    %1244 = vmatprep.subr.mxu0 0.0
    %1245 = vmatpush1.msra.mxu0 0.0
    %1246 = vmatprep.subr.mxu0 0.0
    %1247 = vmatpush1.msra.mxu0 0.0
    %1248 = vmatprep.subr.mxu0 0.0
    %1249 = vmatpush1.msra.mxu0 0.0
    %1250 = vmatprep.subr.mxu0 0.0
    %1251 = vmatpush1.msra.mxu0 0.0
    %1252 = vmatprep.subr.mxu0 0.0
    %1253 = vmatpush1.msra.mxu0 0.0
    %1254 = vmatprep.subr.mxu0 0.0
    %1255 = vmatpush1.msra.mxu0 0.0
    %1256 = vmatprep.subr.mxu0 0.0
    %1257 = vmatpush1.msra.mxu0 0.0
    %1258 = vmatprep.subr.mxu0 0.0
    %1259 = vmatpush1.msra.mxu0 0.0
    %1260 = vmatprep.subr.mxu0 0.0
    %1261 = vmatpush1.msra.mxu0 0.0
    %1262 = vmatprep.subr.mxu0 0.0
    %1263 = vmatpush1.msra.mxu0 0.0
    %1264 = vmatprep.subr.mxu0 0.0
    %1265 = vmatpush1.msra.mxu0 0.0
    %1266 = vmatprep.subr.mxu0 0.0
    %1267 = vmatpush1.msra.mxu0 0.0
    %1268 = vmatprep.subr.mxu0 0.0
    %1269 = vmatpush1.msra.mxu0 0.0
    %1270 = vmatprep.subr.mxu0 0.0
    %1271 = vmatpush1.msra.mxu0 0.0
    %1272 = vmatprep.subr.mxu0 0.0
    %1273 = vmatpush1.msra.mxu0 0.0
    %1274 = vmatprep.subr.mxu0 0.0
    %1275 = vmatpush1.msra.mxu0 0.0
    %1276 = vmatprep.subr.mxu0 0.0
    %1277 = vmatpush1.msra.mxu0 0.0
    %1278 = vmatprep.subr.mxu0 0.0
    %1279 = vmatpush1.msra.mxu0 0.0
    %1280 = vmatprep.subr.mxu0 0.0
    %1281 = vmatpush1.msra.mxu0 0.0
    %1282 = vmatprep.subr.mxu0 0.0
    %1283 = vmatpush1.msra.mxu0 0.0
    %1284 = vmatprep.mubr.f32.mxu0 0.0
    %1285 = vmatmul.mubr.f32.gmra.mrb[0].mxu0 %v1218
    %v1286 = vpop.f32.mrb[0].mxu0
    %v1287 = vadd.f32 0.0, %v1286
    %v1288 = vpop.f32.mrb[0].mxu0
    %1289 = vdwg.mxu0
    %1290 = vrot.lane.b32.xlu0 %v147, 120
    %v1291 = vpop.permute.xlu0 %1290
    %1292 = vrot.lane.b32.xlu0 %v147, 88
    %v1293 = vpop.permute.xlu0 %1292
    %v1294 = vsel %vm153, %v1291, 0
    %v1296 = vsel %vm153, %v1293, 0
    %1298 = vmatprep.subr.mxu0 0.0
    %1299 = vmatpush1.xpose.msra.mxu0 %v1296
    %1300 = vmatprep.subr.mxu0 0.0
    %1301 = vmatpush1.xpose.msra.mxu0 0.0
    %1302 = vmatprep.subr.mxu0 0.0
    %1303 = vmatpush1.xpose.msra.mxu0 0.0
    %1304 = vmatprep.subr.mxu0 0.0
    %1305 = vmatpush1.xpose.msra.mxu0 0.0
    %1306 = vmatprep.subr.mxu0 0.0
    %1307 = vmatpush1.xpose.msra.mxu0 0.0
    %1308 = vmatprep.subr.mxu0 0.0
    %1309 = vmatpush1.xpose.msra.mxu0 0.0
    %1310 = vmatprep.subr.mxu0 0.0
    %1311 = vmatpush1.xpose.msra.mxu0 0.0
    %1312 = vmatprep.subr.mxu0 0.0
    %1313 = vmatpush1.xpose.msra.mxu0 0.0
    %1314 = vmatprep.subr.mxu0 0.0
    %1315 = vmatpush1.xpose.msra.mxu0 0.0
    %1316 = vmatprep.subr.mxu0 0.0
    %1317 = vmatpush1.xpose.msra.mxu0 0.0
    %1318 = vmatprep.subr.mxu0 0.0
    %1319 = vmatpush1.xpose.msra.mxu0 0.0
    %1320 = vmatprep.subr.mxu0 0.0
    %1321 = vmatpush1.xpose.msra.mxu0 0.0
    %1322 = vmatprep.subr.mxu0 0.0
    %1323 = vmatpush1.xpose.msra.mxu0 0.0
    %1324 = vmatprep.subr.mxu0 0.0
    %1325 = vmatpush1.xpose.msra.mxu0 0.0
    %1326 = vmatprep.subr.mxu0 0.0
    %1327 = vmatpush1.xpose.msra.mxu0 0.0
    %1328 = vmatprep.subr.mxu0 0.0
    %1329 = vmatpush1.xpose.msra.mxu0 0.0
    %1330 = vmatprep.subr.mxu0 0.0
    %1331 = vmatpush1.xpose.msra.mxu0 0.0
    %1332 = vmatprep.subr.mxu0 0.0
    %1333 = vmatpush1.xpose.msra.mxu0 0.0
    %1334 = vmatprep.subr.mxu0 0.0
    %1335 = vmatpush1.xpose.msra.mxu0 0.0
    %1336 = vmatprep.subr.mxu0 0.0
    %1337 = vmatpush1.xpose.msra.mxu0 0.0
    %1338 = vmatprep.subr.mxu0 0.0
    %1339 = vmatpush1.xpose.msra.mxu0 0.0
    %1340 = vmatprep.subr.mxu0 0.0
    %1341 = vmatpush1.xpose.msra.mxu0 0.0
    %1342 = vmatprep.subr.mxu0 0.0
    %1343 = vmatpush1.xpose.msra.mxu0 0.0
    %1344 = vmatprep.subr.mxu0 0.0
    %1345 = vmatpush1.xpose.msra.mxu0 0.0
    %1346 = vmatprep.subr.mxu0 0.0
    %1347 = vmatpush1.xpose.msra.mxu0 0.0
    %1348 = vmatprep.subr.mxu0 0.0
    %1349 = vmatpush1.xpose.msra.mxu0 0.0
    %1350 = vmatprep.subr.mxu0 0.0
    %1351 = vmatpush1.xpose.msra.mxu0 0.0
    %1352 = vmatprep.subr.mxu0 0.0
    %1353 = vmatpush1.xpose.msra.mxu0 0.0
    %1354 = vmatprep.subr.mxu0 0.0
    %1355 = vmatpush1.xpose.msra.mxu0 0.0
    %1356 = vmatprep.subr.mxu0 0.0
    %1357 = vmatpush1.xpose.msra.mxu0 0.0
    %1358 = vmatprep.subr.mxu0 0.0
    %1359 = vmatpush1.xpose.msra.mxu0 0.0
    %1360 = vmatprep.subr.mxu0 0.0
    %1361 = vmatpush1.xpose.msra.mxu0 0.0
    %1362 = vmatprep.mubr.f32.mxu0 0.0
    %1363 = vmatmul.mubr.f32.gmra.mrb[0].mxu0 %v1294
    %v1364 = vpop.f32.mrb[0].mxu0
    %v1365 = vadd.f32 0.0, %v1364
    %v1366 = vpop.f32.mrb[0].mxu0
    %1367 = vdwg.mxu0
    %v1368 = vmul.f32 %v1365, 0.35355338
    %v1369 = vadd.f32 %v1368, %v1200
    %v1370 = vsel %vm153, %v1369, -inf
    %1371 = vmax.xlane.f32.xlu0 %v1370
    %v1372 = vpop.xlane.xlu0 %1371
    %v1373 = vsub.f32 %v1369, %v1372
    %v1374 = vmul.f32 %v1373, 1.442695
    %v1375 = vpow.pop %v1374
    %v1376 = vsel %vm153, %v1375, 0.0
    %1377 = vadd.xlane.f32.xlu0 %v1376
    %v1378 = vpop.xlane.xlu0 %1377
    %v1379 = vrcp.pop %v1378
    %v1380 = vmul.f32 %v1375, %v1379
    %1381 = vrot.lane.b32.xlu0 %v147, 56
    %v1382 = vpop.permute.xlu0 %1381
    %v1385 = vsel %vm153, %v1380, 0
    %1387 = vmatprep.subr.mxu0 0.0
    %1388 = vmatpush1.msra.mxu0 %v1382
    %1389 = vmatprep.subr.mxu0 0.0
    %1390 = vmatpush1.msra.mxu0 0.0
    %1391 = vmatprep.subr.mxu0 0.0
    %1392 = vmatpush1.msra.mxu0 0.0
    %1393 = vmatprep.subr.mxu0 0.0
    %1394 = vmatpush1.msra.mxu0 0.0
    %1395 = vmatprep.subr.mxu0 0.0
    %1396 = vmatpush1.msra.mxu0 0.0
    %1397 = vmatprep.subr.mxu0 0.0
    %1398 = vmatpush1.msra.mxu0 0.0
    %1399 = vmatprep.subr.mxu0 0.0
    %1400 = vmatpush1.msra.mxu0 0.0
    %1401 = vmatprep.subr.mxu0 0.0
    %1402 = vmatpush1.msra.mxu0 0.0
    %1403 = vmatprep.subr.mxu0 0.0
    %1404 = vmatpush1.msra.mxu0 0.0
    %1405 = vmatprep.subr.mxu0 0.0
    %1406 = vmatpush1.msra.mxu0 0.0
    %1407 = vmatprep.subr.mxu0 0.0
    %1408 = vmatpush1.msra.mxu0 0.0
    %1409 = vmatprep.subr.mxu0 0.0
    %1410 = vmatpush1.msra.mxu0 0.0
    %1411 = vmatprep.subr.mxu0 0.0
    %1412 = vmatpush1.msra.mxu0 0.0
    %1413 = vmatprep.subr.mxu0 0.0
    %1414 = vmatpush1.msra.mxu0 0.0
    %1415 = vmatprep.subr.mxu0 0.0
    %1416 = vmatpush1.msra.mxu0 0.0
    %1417 = vmatprep.subr.mxu0 0.0
    %1418 = vmatpush1.msra.mxu0 0.0
    %1419 = vmatprep.subr.mxu0 0.0
    %1420 = vmatpush1.msra.mxu0 0.0
    %1421 = vmatprep.subr.mxu0 0.0
    %1422 = vmatpush1.msra.mxu0 0.0
    %1423 = vmatprep.subr.mxu0 0.0
    %1424 = vmatpush1.msra.mxu0 0.0
    %1425 = vmatprep.subr.mxu0 0.0
    %1426 = vmatpush1.msra.mxu0 0.0
    %1427 = vmatprep.subr.mxu0 0.0
    %1428 = vmatpush1.msra.mxu0 0.0
    %1429 = vmatprep.subr.mxu0 0.0
    %1430 = vmatpush1.msra.mxu0 0.0
    %1431 = vmatprep.subr.mxu0 0.0
    %1432 = vmatpush1.msra.mxu0 0.0
    %1433 = vmatprep.subr.mxu0 0.0
    %1434 = vmatpush1.msra.mxu0 0.0
    %1435 = vmatprep.subr.mxu0 0.0
    %1436 = vmatpush1.msra.mxu0 0.0
    %1437 = vmatprep.subr.mxu0 0.0
    %1438 = vmatpush1.msra.mxu0 0.0
    %1439 = vmatprep.subr.mxu0 0.0
    %1440 = vmatpush1.msra.mxu0 0.0
    %1441 = vmatprep.subr.mxu0 0.0
    %1442 = vmatpush1.msra.mxu0 0.0
    %1443 = vmatprep.subr.mxu0 0.0
    %1444 = vmatpush1.msra.mxu0 0.0
    %1445 = vmatprep.subr.mxu0 0.0
    %1446 = vmatpush1.msra.mxu0 0.0
    %1447 = vmatprep.subr.mxu0 0.0
    %1448 = vmatpush1.msra.mxu0 0.0
    %1449 = vmatprep.subr.mxu0 0.0
    %1450 = vmatpush1.msra.mxu0 0.0
    %1451 = vmatprep.mubr.f32.mxu0 0.0
    %1452 = vmatmul.mubr.f32.gmra.mrb[0].mxu0 %v1385
    %v1453 = vpop.f32.mrb[0].mxu0
    %v1454 = vadd.f32 0.0, %v1453
    %v1455 = vpop.f32.mrb[0].mxu0
    %1456 = vdwg.mxu0
    %v1458 = vsel %vm153, %v1454, 0
    %1460 = vmatprep.subr.mxu0 0.0
    %1461 = vmatpush1.msra.mxu0 %v58
    %1462 = vmatprep.subr.mxu0 0.0
    %1463 = vmatpush1.msra.mxu0 0.0
    %1464 = vmatprep.subr.mxu0 0.0
    %1465 = vmatpush1.msra.mxu0 0.0
    %1466 = vmatprep.subr.mxu0 0.0
    %1467 = vmatpush1.msra.mxu0 0.0
    %1468 = vmatprep.subr.mxu0 0.0
    %1469 = vmatpush1.msra.mxu0 0.0
    %1470 = vmatprep.subr.mxu0 0.0
    %1471 = vmatpush1.msra.mxu0 0.0
    %1472 = vmatprep.subr.mxu0 0.0
    %1473 = vmatpush1.msra.mxu0 0.0
    %1474 = vmatprep.subr.mxu0 0.0
    %1475 = vmatpush1.msra.mxu0 0.0
    %1476 = vmatprep.subr.mxu0 0.0
    %1477 = vmatpush1.msra.mxu0 0.0
    %1478 = vmatprep.subr.mxu0 0.0
    %1479 = vmatpush1.msra.mxu0 0.0
    %1480 = vmatprep.subr.mxu0 0.0
    %1481 = vmatpush1.msra.mxu0 0.0
    %1482 = vmatprep.subr.mxu0 0.0
    %1483 = vmatpush1.msra.mxu0 0.0
    %1484 = vmatprep.subr.mxu0 0.0
    %1485 = vmatpush1.msra.mxu0 0.0
    %1486 = vmatprep.subr.mxu0 0.0
    %1487 = vmatpush1.msra.mxu0 0.0
    %1488 = vmatprep.subr.mxu0 0.0
    %1489 = vmatpush1.msra.mxu0 0.0
    %1490 = vmatprep.subr.mxu0 0.0
    %1491 = vmatpush1.msra.mxu0 0.0
    %1492 = vmatprep.subr.mxu0 0.0
    %1493 = vmatpush1.msra.mxu0 0.0
    %1494 = vmatprep.subr.mxu0 0.0
    %1495 = vmatpush1.msra.mxu0 0.0
    %1496 = vmatprep.subr.mxu0 0.0
    %1497 = vmatpush1.msra.mxu0 0.0
    %1498 = vmatprep.subr.mxu0 0.0
    %1499 = vmatpush1.msra.mxu0 0.0
    %1500 = vmatprep.subr.mxu0 0.0
    %1501 = vmatpush1.msra.mxu0 0.0
    %1502 = vmatprep.subr.mxu0 0.0
    %1503 = vmatpush1.msra.mxu0 0.0
    %1504 = vmatprep.subr.mxu0 0.0
    %1505 = vmatpush1.msra.mxu0 0.0
    %1506 = vmatprep.subr.mxu0 0.0
    %1507 = vmatpush1.msra.mxu0 0.0
    %1508 = vmatprep.subr.mxu0 0.0
    %1509 = vmatpush1.msra.mxu0 0.0
    %1510 = vmatprep.subr.mxu0 0.0
    %1511 = vmatpush1.msra.mxu0 0.0
    %1512 = vmatprep.subr.mxu0 0.0
    %1513 = vmatpush1.msra.mxu0 0.0
    %1514 = vmatprep.subr.mxu0 0.0
    %1515 = vmatpush1.msra.mxu0 0.0
    %1516 = vmatprep.subr.mxu0 0.0
    %1517 = vmatpush1.msra.mxu0 0.0
    %1518 = vmatprep.subr.mxu0 0.0
    %1519 = vmatpush1.msra.mxu0 0.0
    %1520 = vmatprep.subr.mxu0 0.0
    %1521 = vmatpush1.msra.mxu0 0.0
    %1522 = vmatprep.subr.mxu0 0.0
    %1523 = vmatpush1.msra.mxu0 0.0
    %1524 = vmatprep.mubr.f32.mxu0 0.0
    %1525 = vmatmul.mubr.f32.gmra.mrb[0].mxu0 %v1458
    %v1526 = vpop.f32.mrb[0].mxu0
    %v1527 = vadd.f32 0.0, %v1526
    %v1528 = vpop.f32.mrb[0].mxu0
    %1529 = vdwg.mxu0
    %v1531 = vsel %vm153, %v1287, 0
    %1533 = vmatprep.subr.mxu0 0.0
    %1534 = vmatpush1.msra.mxu0 %v57
    %1535 = vmatprep.subr.mxu0 0.0
    %1536 = vmatpush1.msra.mxu0 0.0
    %1537 = vmatprep.subr.mxu0 0.0
    %1538 = vmatpush1.msra.mxu0 0.0
    %1539 = vmatprep.subr.mxu0 0.0
    %1540 = vmatpush1.msra.mxu0 0.0
    %1541 = vmatprep.subr.mxu0 0.0
    %1542 = vmatpush1.msra.mxu0 0.0
    %1543 = vmatprep.subr.mxu0 0.0
    %1544 = vmatpush1.msra.mxu0 0.0
    %1545 = vmatprep.subr.mxu0 0.0
    %1546 = vmatpush1.msra.mxu0 0.0
    %1547 = vmatprep.subr.mxu0 0.0
    %1548 = vmatpush1.msra.mxu0 0.0
    %1549 = vmatprep.subr.mxu0 0.0
    %1550 = vmatpush1.msra.mxu0 0.0
    %1551 = vmatprep.subr.mxu0 0.0
    %1552 = vmatpush1.msra.mxu0 0.0
    %1553 = vmatprep.subr.mxu0 0.0
    %1554 = vmatpush1.msra.mxu0 0.0
    %1555 = vmatprep.subr.mxu0 0.0
    %1556 = vmatpush1.msra.mxu0 0.0
    %1557 = vmatprep.subr.mxu0 0.0
    %1558 = vmatpush1.msra.mxu0 0.0
    %1559 = vmatprep.subr.mxu0 0.0
    %1560 = vmatpush1.msra.mxu0 0.0
    %1561 = vmatprep.subr.mxu0 0.0
    %1562 = vmatpush1.msra.mxu0 0.0
    %1563 = vmatprep.subr.mxu0 0.0
    %1564 = vmatpush1.msra.mxu0 0.0
    %1565 = vmatprep.subr.mxu0 0.0
    %1566 = vmatpush1.msra.mxu0 0.0
    %1567 = vmatprep.subr.mxu0 0.0
    %1568 = vmatpush1.msra.mxu0 0.0
    %1569 = vmatprep.subr.mxu0 0.0
    %1570 = vmatpush1.msra.mxu0 0.0
    %1571 = vmatprep.subr.mxu0 0.0
    %1572 = vmatpush1.msra.mxu0 0.0
    %1573 = vmatprep.subr.mxu0 0.0
    %1574 = vmatpush1.msra.mxu0 0.0
    %1575 = vmatprep.subr.mxu0 0.0
    %1576 = vmatpush1.msra.mxu0 0.0
    %1577 = vmatprep.subr.mxu0 0.0
    %1578 = vmatpush1.msra.mxu0 0.0
    %1579 = vmatprep.subr.mxu0 0.0
    %1580 = vmatpush1.msra.mxu0 0.0
    %1581 = vmatprep.subr.mxu0 0.0
    %1582 = vmatpush1.msra.mxu0 0.0
    %1583 = vmatprep.subr.mxu0 0.0
    %1584 = vmatpush1.msra.mxu0 0.0
    %1585 = vmatprep.subr.mxu0 0.0
    %1586 = vmatpush1.msra.mxu0 0.0
    %1587 = vmatprep.subr.mxu0 0.0
    %1588 = vmatpush1.msra.mxu0 0.0
    %1589 = vmatprep.subr.mxu0 0.0
    %1590 = vmatpush1.msra.mxu0 0.0
    %1591 = vmatprep.subr.mxu0 0.0
    %1592 = vmatpush1.msra.mxu0 0.0
    %1593 = vmatprep.subr.mxu0 0.0
    %1594 = vmatpush1.msra.mxu0 0.0
    %1595 = vmatprep.subr.mxu0 0.0
    %1596 = vmatpush1.msra.mxu0 0.0
    %1597 = vmatprep.mubr.f32.mxu0 0.0
    %1598 = vmatmul.mubr.f32.gmra.mrb[0].mxu0 %v1531
    %v1599 = vpop.f32.mrb[0].mxu0
    %v1600 = vadd.f32 %v1527, %v1599
    %v1601 = vpop.f32.mrb[0].mxu0
    %1602 = vdwg.mxu0
    %1603 = vrot.lane.b32.xlu0 %v147, 112
    %v1604 = vpop.permute.xlu0 %1603
    %1605 = vrot.lane.b32.xlu0 %v147, 80
    %v1606 = vpop.permute.xlu0 %1605
    %v1607 = vsel %vm153, %v1604, 0
    %v1609 = vsel %vm153, %v1606, 0
    %1611 = vmatprep.subr.mxu0 0.0
    %1612 = vmatpush1.xpose.msra.mxu0 %v1609
    %1613 = vmatprep.subr.mxu0 0.0
    %1614 = vmatpush1.xpose.msra.mxu0 0.0
    %1615 = vmatprep.subr.mxu0 0.0
    %1616 = vmatpush1.xpose.msra.mxu0 0.0
    %1617 = vmatprep.subr.mxu0 0.0
    %1618 = vmatpush1.xpose.msra.mxu0 0.0
    %1619 = vmatprep.subr.mxu0 0.0
    %1620 = vmatpush1.xpose.msra.mxu0 0.0
    %1621 = vmatprep.subr.mxu0 0.0
    %1622 = vmatpush1.xpose.msra.mxu0 0.0
    %1623 = vmatprep.subr.mxu0 0.0
    %1624 = vmatpush1.xpose.msra.mxu0 0.0
    %1625 = vmatprep.subr.mxu0 0.0
    %1626 = vmatpush1.xpose.msra.mxu0 0.0
    %1627 = vmatprep.subr.mxu0 0.0
    %1628 = vmatpush1.xpose.msra.mxu0 0.0
    %1629 = vmatprep.subr.mxu0 0.0
    %1630 = vmatpush1.xpose.msra.mxu0 0.0
    %1631 = vmatprep.subr.mxu0 0.0
    %1632 = vmatpush1.xpose.msra.mxu0 0.0
    %1633 = vmatprep.subr.mxu0 0.0
    %1634 = vmatpush1.xpose.msra.mxu0 0.0
    %1635 = vmatprep.subr.mxu0 0.0
    %1636 = vmatpush1.xpose.msra.mxu0 0.0
    %1637 = vmatprep.subr.mxu0 0.0
    %1638 = vmatpush1.xpose.msra.mxu0 0.0
    %1639 = vmatprep.subr.mxu0 0.0
    %1640 = vmatpush1.xpose.msra.mxu0 0.0
    %1641 = vmatprep.subr.mxu0 0.0
    %1642 = vmatpush1.xpose.msra.mxu0 0.0
    %1643 = vmatprep.subr.mxu0 0.0
    %1644 = vmatpush1.xpose.msra.mxu0 0.0
    %1645 = vmatprep.subr.mxu0 0.0
    %1646 = vmatpush1.xpose.msra.mxu0 0.0
    %1647 = vmatprep.subr.mxu0 0.0
    %1648 = vmatpush1.xpose.msra.mxu0 0.0
    %1649 = vmatprep.subr.mxu0 0.0
    %1650 = vmatpush1.xpose.msra.mxu0 0.0
    %1651 = vmatprep.subr.mxu0 0.0
    %1652 = vmatpush1.xpose.msra.mxu0 0.0
    %1653 = vmatprep.subr.mxu0 0.0
    %1654 = vmatpush1.xpose.msra.mxu0 0.0
    %1655 = vmatprep.subr.mxu0 0.0
    %1656 = vmatpush1.xpose.msra.mxu0 0.0
    %1657 = vmatprep.subr.mxu0 0.0
    %1658 = vmatpush1.xpose.msra.mxu0 0.0
    %1659 = vmatprep.subr.mxu0 0.0
    %1660 = vmatpush1.xpose.msra.mxu0 0.0
    %1661 = vmatprep.subr.mxu0 0.0
    %1662 = vmatpush1.xpose.msra.mxu0 0.0
    %1663 = vmatprep.subr.mxu0 0.0
    %1664 = vmatpush1.xpose.msra.mxu0 0.0
    %1665 = vmatprep.subr.mxu0 0.0
    %1666 = vmatpush1.xpose.msra.mxu0 0.0
    %1667 = vmatprep.subr.mxu0 0.0
    %1668 = vmatpush1.xpose.msra.mxu0 0.0
    %1669 = vmatprep.subr.mxu0 0.0
    %1670 = vmatpush1.xpose.msra.mxu0 0.0
    %1671 = vmatprep.subr.mxu0 0.0
    %1672 = vmatpush1.xpose.msra.mxu0 0.0
    %1673 = vmatprep.subr.mxu0 0.0
    %1674 = vmatpush1.xpose.msra.mxu0 0.0
    %1675 = vmatprep.mubr.f32.mxu0 0.0
    %1676 = vmatmul.mubr.f32.gmra.mrb[0].mxu0 %v1607
    %v1677 = vpop.f32.mrb[0].mxu0
    %v1678 = vadd.f32 0.0, %v1677
    %v1679 = vpop.f32.mrb[0].mxu0
    %1680 = vdwg.mxu0
    %v1681 = vmul.f32 %v1678, 0.35355338
    %v1682 = vadd.f32 %v1681, %v1200
    %v1683 = vsel %vm153, %v1682, -inf
    %1684 = vmax.xlane.f32.xlu0 %v1683
    %v1685 = vpop.xlane.xlu0 %1684
    %v1686 = vsub.f32 %v1682, %v1685
    %v1687 = vmul.f32 %v1686, 1.442695
    %v1688 = vpow.pop %v1687
    %v1689 = vsel %vm153, %v1688, 0.0
    %1690 = vadd.xlane.f32.xlu0 %v1689
    %v1691 = vpop.xlane.xlu0 %1690
    %v1692 = vrcp.pop %v1691
    %v1693 = vmul.f32 %v1688, %v1692
    %1694 = vrot.lane.b32.xlu0 %v147, 48
    %v1695 = vpop.permute.xlu0 %1694
    %v1698 = vsel %vm153, %v1693, 0
    %1700 = vmatprep.subr.mxu0 0.0
    %1701 = vmatpush1.msra.mxu0 %v1695
    %1702 = vmatprep.subr.mxu0 0.0
    %1703 = vmatpush1.msra.mxu0 0.0
    %1704 = vmatprep.subr.mxu0 0.0
    %1705 = vmatpush1.msra.mxu0 0.0
    %1706 = vmatprep.subr.mxu0 0.0
    %1707 = vmatpush1.msra.mxu0 0.0
    %1708 = vmatprep.subr.mxu0 0.0
    %1709 = vmatpush1.msra.mxu0 0.0
    %1710 = vmatprep.subr.mxu0 0.0
    %1711 = vmatpush1.msra.mxu0 0.0
    %1712 = vmatprep.subr.mxu0 0.0
    %1713 = vmatpush1.msra.mxu0 0.0
    %1714 = vmatprep.subr.mxu0 0.0
    %1715 = vmatpush1.msra.mxu0 0.0
    %1716 = vmatprep.subr.mxu0 0.0
    %1717 = vmatpush1.msra.mxu0 0.0
    %1718 = vmatprep.subr.mxu0 0.0
    %1719 = vmatpush1.msra.mxu0 0.0
    %1720 = vmatprep.subr.mxu0 0.0
    %1721 = vmatpush1.msra.mxu0 0.0
    %1722 = vmatprep.subr.mxu0 0.0
    %1723 = vmatpush1.msra.mxu0 0.0
    %1724 = vmatprep.subr.mxu0 0.0
    %1725 = vmatpush1.msra.mxu0 0.0
    %1726 = vmatprep.subr.mxu0 0.0
    %1727 = vmatpush1.msra.mxu0 0.0
    %1728 = vmatprep.subr.mxu0 0.0
    %1729 = vmatpush1.msra.mxu0 0.0
    %1730 = vmatprep.subr.mxu0 0.0
    %1731 = vmatpush1.msra.mxu0 0.0
    %1732 = vmatprep.subr.mxu0 0.0
    %1733 = vmatpush1.msra.mxu0 0.0
    %1734 = vmatprep.subr.mxu0 0.0
    %1735 = vmatpush1.msra.mxu0 0.0
    %1736 = vmatprep.subr.mxu0 0.0
    %1737 = vmatpush1.msra.mxu0 0.0
    %1738 = vmatprep.subr.mxu0 0.0
    %1739 = vmatpush1.msra.mxu0 0.0
    %1740 = vmatprep.subr.mxu0 0.0
    %1741 = vmatpush1.msra.mxu0 0.0
    %1742 = vmatprep.subr.mxu0 0.0
    %1743 = vmatpush1.msra.mxu0 0.0
    %1744 = vmatprep.subr.mxu0 0.0
    %1745 = vmatpush1.msra.mxu0 0.0
    %1746 = vmatprep.subr.mxu0 0.0
    %1747 = vmatpush1.msra.mxu0 0.0
    %1748 = vmatprep.subr.mxu0 0.0
    %1749 = vmatpush1.msra.mxu0 0.0
    %1750 = vmatprep.subr.mxu0 0.0
    %1751 = vmatpush1.msra.mxu0 0.0
    %1752 = vmatprep.subr.mxu0 0.0
    %1753 = vmatpush1.msra.mxu0 0.0
    %1754 = vmatprep.subr.mxu0 0.0
    %1755 = vmatpush1.msra.mxu0 0.0
    %1756 = vmatprep.subr.mxu0 0.0
    %1757 = vmatpush1.msra.mxu0 0.0
    %1758 = vmatprep.subr.mxu0 0.0
    %1759 = vmatpush1.msra.mxu0 0.0
    %1760 = vmatprep.subr.mxu0 0.0
    %1761 = vmatpush1.msra.mxu0 0.0
    %1762 = vmatprep.subr.mxu0 0.0
    %1763 = vmatpush1.msra.mxu0 0.0
    %1764 = vmatprep.mubr.f32.mxu0 0.0
    %1765 = vmatmul.mubr.f32.gmra.mrb[0].mxu0 %v1698
    %v1766 = vpop.f32.mrb[0].mxu0
    %v1767 = vadd.f32 0.0, %v1766
    %v1768 = vpop.f32.mrb[0].mxu0
    %1769 = vdwg.mxu0
    %v1771 = vsel %vm153, %v1767, 0
    %1773 = vmatprep.subr.mxu0 0.0
    %1774 = vmatpush1.msra.mxu0 %v59
    %1775 = vmatprep.subr.mxu0 0.0
    %1776 = vmatpush1.msra.mxu0 0.0
    %1777 = vmatprep.subr.mxu0 0.0
    %1778 = vmatpush1.msra.mxu0 0.0
    %1779 = vmatprep.subr.mxu0 0.0
    %1780 = vmatpush1.msra.mxu0 0.0
    %1781 = vmatprep.subr.mxu0 0.0
    %1782 = vmatpush1.msra.mxu0 0.0
    %1783 = vmatprep.subr.mxu0 0.0
    %1784 = vmatpush1.msra.mxu0 0.0
    %1785 = vmatprep.subr.mxu0 0.0
    %1786 = vmatpush1.msra.mxu0 0.0
    %1787 = vmatprep.subr.mxu0 0.0
    %1788 = vmatpush1.msra.mxu0 0.0
    %1789 = vmatprep.subr.mxu0 0.0
    %1790 = vmatpush1.msra.mxu0 0.0
    %1791 = vmatprep.subr.mxu0 0.0
    %1792 = vmatpush1.msra.mxu0 0.0
    %1793 = vmatprep.subr.mxu0 0.0
    %1794 = vmatpush1.msra.mxu0 0.0
    %1795 = vmatprep.subr.mxu0 0.0
    %1796 = vmatpush1.msra.mxu0 0.0
    %1797 = vmatprep.subr.mxu0 0.0
    %1798 = vmatpush1.msra.mxu0 0.0
    %1799 = vmatprep.subr.mxu0 0.0
    %1800 = vmatpush1.msra.mxu0 0.0
    %1801 = vmatprep.subr.mxu0 0.0
    %1802 = vmatpush1.msra.mxu0 0.0
    %1803 = vmatprep.subr.mxu0 0.0
    %1804 = vmatpush1.msra.mxu0 0.0
    %1805 = vmatprep.subr.mxu0 0.0
    %1806 = vmatpush1.msra.mxu0 0.0
    %1807 = vmatprep.subr.mxu0 0.0
    %1808 = vmatpush1.msra.mxu0 0.0
    %1809 = vmatprep.subr.mxu0 0.0
    %1810 = vmatpush1.msra.mxu0 0.0
    %1811 = vmatprep.subr.mxu0 0.0
    %1812 = vmatpush1.msra.mxu0 0.0
    %1813 = vmatprep.subr.mxu0 0.0
    %1814 = vmatpush1.msra.mxu0 0.0
    %1815 = vmatprep.subr.mxu0 0.0
    %1816 = vmatpush1.msra.mxu0 0.0
    %1817 = vmatprep.subr.mxu0 0.0
    %1818 = vmatpush1.msra.mxu0 0.0
    %1819 = vmatprep.subr.mxu0 0.0
    %1820 = vmatpush1.msra.mxu0 0.0
    %1821 = vmatprep.subr.mxu0 0.0
    %1822 = vmatpush1.msra.mxu0 0.0
    %1823 = vmatprep.subr.mxu0 0.0
    %1824 = vmatpush1.msra.mxu0 0.0
    %1825 = vmatprep.subr.mxu0 0.0
    %1826 = vmatpush1.msra.mxu0 0.0
    %1827 = vmatprep.subr.mxu0 0.0
    %1828 = vmatpush1.msra.mxu0 0.0
    %1829 = vmatprep.subr.mxu0 0.0
    %1830 = vmatpush1.msra.mxu0 0.0
    %1831 = vmatprep.subr.mxu0 0.0
    %1832 = vmatpush1.msra.mxu0 0.0
    %1833 = vmatprep.subr.mxu0 0.0
    %1834 = vmatpush1.msra.mxu0 0.0
    %1835 = vmatprep.subr.mxu0 0.0
    %1836 = vmatpush1.msra.mxu0 0.0
    %1837 = vmatprep.mubr.f32.mxu0 0.0
    %1838 = vmatmul.mubr.f32.gmra.mrb[0].mxu0 %v1771
    %v1839 = vpop.f32.mrb[0].mxu0
    %v1840 = vadd.f32 0.0, %v1839
    %v1841 = vpop.f32.mrb[0].mxu0
    %1842 = vdwg.mxu0
    %v1843 = vadd.f32 %v1600, %v1840
    %1844 = vrot.lane.b32.xlu0 %v147, 104
    %v1845 = vpop.permute.xlu0 %1844
    %1846 = vrot.lane.b32.xlu0 %v147, 72
    %v1847 = vpop.permute.xlu0 %1846
    %v1848 = vsel %vm153, %v1845, 0
    %v1850 = vsel %vm153, %v1847, 0
    %1852 = vmatprep.subr.mxu0 0.0
    %1853 = vmatpush1.xpose.msra.mxu0 %v1850
    %1854 = vmatprep.subr.mxu0 0.0
    %1855 = vmatpush1.xpose.msra.mxu0 0.0
    %1856 = vmatprep.subr.mxu0 0.0
    %1857 = vmatpush1.xpose.msra.mxu0 0.0
    %1858 = vmatprep.subr.mxu0 0.0
    %1859 = vmatpush1.xpose.msra.mxu0 0.0
    %1860 = vmatprep.subr.mxu0 0.0
    %1861 = vmatpush1.xpose.msra.mxu0 0.0
    %1862 = vmatprep.subr.mxu0 0.0
    %1863 = vmatpush1.xpose.msra.mxu0 0.0
    %1864 = vmatprep.subr.mxu0 0.0
    %1865 = vmatpush1.xpose.msra.mxu0 0.0
    %1866 = vmatprep.subr.mxu0 0.0
    %1867 = vmatpush1.xpose.msra.mxu0 0.0
    %1868 = vmatprep.subr.mxu0 0.0
    %1869 = vmatpush1.xpose.msra.mxu0 0.0
    %1870 = vmatprep.subr.mxu0 0.0
    %1871 = vmatpush1.xpose.msra.mxu0 0.0
    %1872 = vmatprep.subr.mxu0 0.0
    %1873 = vmatpush1.xpose.msra.mxu0 0.0
    %1874 = vmatprep.subr.mxu0 0.0
    %1875 = vmatpush1.xpose.msra.mxu0 0.0
    %1876 = vmatprep.subr.mxu0 0.0
    %1877 = vmatpush1.xpose.msra.mxu0 0.0
    %1878 = vmatprep.subr.mxu0 0.0
    %1879 = vmatpush1.xpose.msra.mxu0 0.0
    %1880 = vmatprep.subr.mxu0 0.0
    %1881 = vmatpush1.xpose.msra.mxu0 0.0
    %1882 = vmatprep.subr.mxu0 0.0
    %1883 = vmatpush1.xpose.msra.mxu0 0.0
    %1884 = vmatprep.subr.mxu0 0.0
    %1885 = vmatpush1.xpose.msra.mxu0 0.0
    %1886 = vmatprep.subr.mxu0 0.0
    %1887 = vmatpush1.xpose.msra.mxu0 0.0
    %1888 = vmatprep.subr.mxu0 0.0
    %1889 = vmatpush1.xpose.msra.mxu0 0.0
    %1890 = vmatprep.subr.mxu0 0.0
    %1891 = vmatpush1.xpose.msra.mxu0 0.0
    %1892 = vmatprep.subr.mxu0 0.0
    %1893 = vmatpush1.xpose.msra.mxu0 0.0
    %1894 = vmatprep.subr.mxu0 0.0
    %1895 = vmatpush1.xpose.msra.mxu0 0.0
    %1896 = vmatprep.subr.mxu0 0.0
    %1897 = vmatpush1.xpose.msra.mxu0 0.0
    %1898 = vmatprep.subr.mxu0 0.0
    %1899 = vmatpush1.xpose.msra.mxu0 0.0
    %1900 = vmatprep.subr.mxu0 0.0
    %1901 = vmatpush1.xpose.msra.mxu0 0.0
    %1902 = vmatprep.subr.mxu0 0.0
    %1903 = vmatpush1.xpose.msra.mxu0 0.0
    %1904 = vmatprep.subr.mxu0 0.0
    %1905 = vmatpush1.xpose.msra.mxu0 0.0
    %1906 = vmatprep.subr.mxu0 0.0
    %1907 = vmatpush1.xpose.msra.mxu0 0.0
    %1908 = vmatprep.subr.mxu0 0.0
    %1909 = vmatpush1.xpose.msra.mxu0 0.0
    %1910 = vmatprep.subr.mxu0 0.0
    %1911 = vmatpush1.xpose.msra.mxu0 0.0
    %1912 = vmatprep.subr.mxu0 0.0
    %1913 = vmatpush1.xpose.msra.mxu0 0.0
    %1914 = vmatprep.subr.mxu0 0.0
    %1915 = vmatpush1.xpose.msra.mxu0 0.0
    %1916 = vmatprep.mubr.f32.mxu0 0.0
    %1917 = vmatmul.mubr.f32.gmra.mrb[0].mxu0 %v1848
    %v1918 = vpop.f32.mrb[0].mxu0
    %v1919 = vadd.f32 0.0, %v1918
    %v1920 = vpop.f32.mrb[0].mxu0
    %1921 = vdwg.mxu0
    %v1922 = vmul.f32 %v1919, 0.35355338
    %v1923 = vadd.f32 %v1922, %v1200
    %v1924 = vsel %vm153, %v1923, -inf
    %1925 = vmax.xlane.f32.xlu0 %v1924
    %v1926 = vpop.xlane.xlu0 %1925
    %v1927 = vsub.f32 %v1923, %v1926
    %v1928 = vmul.f32 %v1927, 1.442695
    %v1929 = vpow.pop %v1928
    %v1930 = vsel %vm153, %v1929, 0.0
    %1931 = vadd.xlane.f32.xlu0 %v1930
    %v1932 = vpop.xlane.xlu0 %1931
    %v1933 = vrcp.pop %v1932
    %v1934 = vmul.f32 %v1929, %v1933
    %1935 = vrot.lane.b32.xlu0 %v147, 40
    %v1936 = vpop.permute.xlu0 %1935
    %v1939 = vsel %vm153, %v1934, 0
    %1941 = vmatprep.subr.mxu0 0.0
    %1942 = vmatpush1.msra.mxu0 %v1936
    %1943 = vmatprep.subr.mxu0 0.0
    %1944 = vmatpush1.msra.mxu0 0.0
    %1945 = vmatprep.subr.mxu0 0.0
    %1946 = vmatpush1.msra.mxu0 0.0
    %1947 = vmatprep.subr.mxu0 0.0
    %1948 = vmatpush1.msra.mxu0 0.0
    %1949 = vmatprep.subr.mxu0 0.0
    %1950 = vmatpush1.msra.mxu0 0.0
    %1951 = vmatprep.subr.mxu0 0.0
    %1952 = vmatpush1.msra.mxu0 0.0
    %1953 = vmatprep.subr.mxu0 0.0
    %1954 = vmatpush1.msra.mxu0 0.0
    %1955 = vmatprep.subr.mxu0 0.0
    %1956 = vmatpush1.msra.mxu0 0.0
    %1957 = vmatprep.subr.mxu0 0.0
    %1958 = vmatpush1.msra.mxu0 0.0
    %1959 = vmatprep.subr.mxu0 0.0
    %1960 = vmatpush1.msra.mxu0 0.0
    %1961 = vmatprep.subr.mxu0 0.0
    %1962 = vmatpush1.msra.mxu0 0.0
    %1963 = vmatprep.subr.mxu0 0.0
    %1964 = vmatpush1.msra.mxu0 0.0
    %1965 = vmatprep.subr.mxu0 0.0
    %1966 = vmatpush1.msra.mxu0 0.0
    %1967 = vmatprep.subr.mxu0 0.0
    %1968 = vmatpush1.msra.mxu0 0.0
    %1969 = vmatprep.subr.mxu0 0.0
    %1970 = vmatpush1.msra.mxu0 0.0
    %1971 = vmatprep.subr.mxu0 0.0
    %1972 = vmatpush1.msra.mxu0 0.0
    %1973 = vmatprep.subr.mxu0 0.0
    %1974 = vmatpush1.msra.mxu0 0.0
    %1975 = vmatprep.subr.mxu0 0.0
    %1976 = vmatpush1.msra.mxu0 0.0
    %1977 = vmatprep.subr.mxu0 0.0
    %1978 = vmatpush1.msra.mxu0 0.0
    %1979 = vmatprep.subr.mxu0 0.0
    %1980 = vmatpush1.msra.mxu0 0.0
    %1981 = vmatprep.subr.mxu0 0.0
    %1982 = vmatpush1.msra.mxu0 0.0
    %1983 = vmatprep.subr.mxu0 0.0
    %1984 = vmatpush1.msra.mxu0 0.0
    %1985 = vmatprep.subr.mxu0 0.0
    %1986 = vmatpush1.msra.mxu0 0.0
    %1987 = vmatprep.subr.mxu0 0.0
    %1988 = vmatpush1.msra.mxu0 0.0
    %1989 = vmatprep.subr.mxu0 0.0
    %1990 = vmatpush1.msra.mxu0 0.0
    %1991 = vmatprep.subr.mxu0 0.0
    %1992 = vmatpush1.msra.mxu0 0.0
    %1993 = vmatprep.subr.mxu0 0.0
    %1994 = vmatpush1.msra.mxu0 0.0
    %1995 = vmatprep.subr.mxu0 0.0
    %1996 = vmatpush1.msra.mxu0 0.0
    %1997 = vmatprep.subr.mxu0 0.0
    %1998 = vmatpush1.msra.mxu0 0.0
    %1999 = vmatprep.subr.mxu0 0.0
    %2000 = vmatpush1.msra.mxu0 0.0
    %2001 = vmatprep.subr.mxu0 0.0
    %2002 = vmatpush1.msra.mxu0 0.0
    %2003 = vmatprep.subr.mxu0 0.0
    %2004 = vmatpush1.msra.mxu0 0.0
    %2005 = vmatprep.mubr.f32.mxu0 0.0
    %2006 = vmatmul.mubr.f32.gmra.mrb[0].mxu0 %v1939
    %v2007 = vpop.f32.mrb[0].mxu0
    %v2008 = vadd.f32 0.0, %v2007
    %v2009 = vpop.f32.mrb[0].mxu0
    %2010 = vdwg.mxu0
    %v2012 = vsel %vm153, %v2008, 0
    %2014 = vmatprep.subr.mxu0 0.0
    %2015 = vmatpush1.msra.mxu0 %v60
    %2016 = vmatprep.subr.mxu0 0.0
    %2017 = vmatpush1.msra.mxu0 0.0
    %2018 = vmatprep.subr.mxu0 0.0
    %2019 = vmatpush1.msra.mxu0 0.0
    %2020 = vmatprep.subr.mxu0 0.0
    %2021 = vmatpush1.msra.mxu0 0.0
    %2022 = vmatprep.subr.mxu0 0.0
    %2023 = vmatpush1.msra.mxu0 0.0
    %2024 = vmatprep.subr.mxu0 0.0
    %2025 = vmatpush1.msra.mxu0 0.0
    %2026 = vmatprep.subr.mxu0 0.0
    %2027 = vmatpush1.msra.mxu0 0.0
    %2028 = vmatprep.subr.mxu0 0.0
    %2029 = vmatpush1.msra.mxu0 0.0
    %2030 = vmatprep.subr.mxu0 0.0
    %2031 = vmatpush1.msra.mxu0 0.0
    %2032 = vmatprep.subr.mxu0 0.0
    %2033 = vmatpush1.msra.mxu0 0.0
    %2034 = vmatprep.subr.mxu0 0.0
    %2035 = vmatpush1.msra.mxu0 0.0
    %2036 = vmatprep.subr.mxu0 0.0
    %2037 = vmatpush1.msra.mxu0 0.0
    %2038 = vmatprep.subr.mxu0 0.0
    %2039 = vmatpush1.msra.mxu0 0.0
    %2040 = vmatprep.subr.mxu0 0.0
    %2041 = vmatpush1.msra.mxu0 0.0
    %2042 = vmatprep.subr.mxu0 0.0
    %2043 = vmatpush1.msra.mxu0 0.0
    %2044 = vmatprep.subr.mxu0 0.0
    %2045 = vmatpush1.msra.mxu0 0.0
    %2046 = vmatprep.subr.mxu0 0.0
    %2047 = vmatpush1.msra.mxu0 0.0
    %2048 = vmatprep.subr.mxu0 0.0
    %2049 = vmatpush1.msra.mxu0 0.0
    %2050 = vmatprep.subr.mxu0 0.0
    %2051 = vmatpush1.msra.mxu0 0.0
    %2052 = vmatprep.subr.mxu0 0.0
    %2053 = vmatpush1.msra.mxu0 0.0
    %2054 = vmatprep.subr.mxu0 0.0
    %2055 = vmatpush1.msra.mxu0 0.0
    %2056 = vmatprep.subr.mxu0 0.0
    %2057 = vmatpush1.msra.mxu0 0.0
    %2058 = vmatprep.subr.mxu0 0.0
    %2059 = vmatpush1.msra.mxu0 0.0
    %2060 = vmatprep.subr.mxu0 0.0
    %2061 = vmatpush1.msra.mxu0 0.0
    %2062 = vmatprep.subr.mxu0 0.0
    %2063 = vmatpush1.msra.mxu0 0.0
    %2064 = vmatprep.subr.mxu0 0.0
    %2065 = vmatpush1.msra.mxu0 0.0
    %2066 = vmatprep.subr.mxu0 0.0
    %2067 = vmatpush1.msra.mxu0 0.0
    %2068 = vmatprep.subr.mxu0 0.0
    %2069 = vmatpush1.msra.mxu0 0.0
    %2070 = vmatprep.subr.mxu0 0.0
    %2071 = vmatpush1.msra.mxu0 0.0
    %2072 = vmatprep.subr.mxu0 0.0
    %2073 = vmatpush1.msra.mxu0 0.0
    %2074 = vmatprep.subr.mxu0 0.0
    %2075 = vmatpush1.msra.mxu0 0.0
    %2076 = vmatprep.subr.mxu0 0.0
    %2077 = vmatpush1.msra.mxu0 0.0
    %2078 = vmatprep.mubr.f32.mxu0 0.0
    %2079 = vmatmul.mubr.f32.gmra.mrb[0].mxu0 %v2012
    %v2080 = vpop.f32.mrb[0].mxu0
    %v2081 = vadd.f32 0.0, %v2080
    %v2082 = vpop.f32.mrb[0].mxu0
    %2083 = vdwg.mxu0
    %v2084 = vadd.f32 %v1843, %v2081
    %v2085 = vlaneseq
    %v2086 = vshrl.u32 %v2085, 7
    %v2087 = vsub.s32 0, %v2086
    %v2088 = vrot.slane %v61, %v2087
    %v2089 = vadd.f32 %v1117, %v2088
    %v2090 = vadd.f32 %v2084, %v2088
    %v2091 = vadd.f32 %v50, %v2089
    %v2092 = vadd.f32 %v51, %v2090
    %v2093 = vsel %vm68, %v2091, 0.0
    %2094 = vadd.xlane.f32.xlu0 %v2093
    %v2095 = vpop.xlane.xlu0 %2094
    %v2096 = vsel %vm68, %v2092, 0.0
    %2097 = vadd.xlane.f32.xlu0 %v2096
    %v2098 = vpop.xlane.xlu0 %2097
    %v2099 = vrcp.pop 32.0
    %v2100 = vmul.f32 %v2095, %v2099
    %v2101 = vmul.f32 %v2098, %v2099
    %v2102 = vmul.f32 %v2091, %v2091
    %v2103 = vmul.f32 %v2092, %v2092
    %v2104 = vsel %vm68, %v2102, 0.0
    %2105 = vadd.xlane.f32.xlu0 %v2104
    %v2106 = vpop.xlane.xlu0 %2105
    %v2107 = vsel %vm68, %v2103, 0.0
    %2108 = vadd.xlane.f32.xlu0 %v2107
    %v2109 = vpop.xlane.xlu0 %2108
    %v2110 = vmul.f32 %v2106, %v2099
    %v2111 = vmul.f32 %v2109, %v2099
    %v2112 = vmul.f32 %v2100, %v2100
    %v2113 = vmul.f32 %v2101, %v2101
    %v2114 = vsub.f32 %v2110, %v2112
    %v2115 = vsub.f32 %v2111, %v2113
    %v2116 = vsub.f32 %v2091, %v2100
    %v2117 = vsub.f32 %v2092, %v2101
    %v2118 = vadd.f32 %v2114, 1e-05
    %v2119 = vadd.f32 %v2115, 1e-05
    %v2120 = vrsqrt.pop %v2118
    %v2121 = vrsqrt.pop %v2119
    %v2122 = vmul.f32 %v2116, %v2120
    %v2123 = vmul.f32 %v2117, %v2121
    %v2124 = vlaneseq
    %v2125 = vshrl.u32 %v2124, 7
    %v2126 = vsub.s32 0, %v2125
    %v2127 = vrot.slane %v62, %v2126
    %v2128 = vmul.f32 %v2122, %v2127
    %v2129 = vmul.f32 %v2123, %v2127
    %v2130 = vlaneseq
    %v2131 = vshrl.u32 %v2130, 7
    %v2132 = vsub.s32 0, %v2131
    %v2133 = vrot.slane %v63, %v2132
    %v2134 = vadd.f32 %v2128, %v2133
    %v2135 = vadd.f32 %v2129, %v2133
    %v2136 = vld [vmem:[#allocation5 + $0x68] sm:$0xff]
    %v2137 = vld [vmem:[#allocation5 + $0x70] sm:$0xff]
    %v2138 = vld [vmem:[#allocation5 + $0x78] sm:$0xff]
    %v2139 = vld [vmem:[#allocation5 + $0x80] sm:$0xff]
    %v2140 = vld [vmem:[#allocation5 + $0x88] sm:$0x1]
    %v2141 = vld [vmem:[#allocation5 + $0x90] sm:$0xff]
    %v2142 = vld [vmem:[#allocation5 + $0x98] sm:$0xff]
    %v2143 = vld [vmem:[#allocation5 + $0xa0] sm:$0xff]
    %v2144 = vld [vmem:[#allocation5 + $0xa8] sm:$0xff]
    %v2145 = vld [vmem:[#allocation5 + $0xb0] sm:$0x1]
    %v2146 = vld [vmem:[#allocation5 + $0xb8] sm:$0x1]
    %v2147 = vld [vmem:[#allocation5 + $0xc0] sm:$0x1]
    %v2148 = vlaneseq
    %v2149 = vshrl.u32 %v2148, 7
    %v2150 = vsub.s32 0, %v2149
    %v2151 = vrot.slane %v2140, %v2150
    %v2153 = vsel %vm68, %v2134, 0
    %v2156 = vsel %vm68, %v2135, 0
    %2158 = vmatprep.subr.mxu0 0.0
    %2159 = vmatpush1.msra.mxu0 %v2136
    %2160 = vmatprep.subr.mxu0 0.0
    %2161 = vmatpush1.msra.mxu0 %v2137
    %2162 = vmatprep.subr.mxu0 0.0
    %2163 = vmatpush1.msra.mxu0 %v2138
    %2164 = vmatprep.subr.mxu0 0.0
    %2165 = vmatpush1.msra.mxu0 %v2139
    %2166 = vmatprep.subr.mxu0 0.0
    %2167 = vmatpush1.msra.mxu0 0.0
    %2168 = vmatprep.subr.mxu0 0.0
    %2169 = vmatpush1.msra.mxu0 0.0
    %2170 = vmatprep.subr.mxu0 0.0
    %2171 = vmatpush1.msra.mxu0 0.0
    %2172 = vmatprep.subr.mxu0 0.0
    %2173 = vmatpush1.msra.mxu0 0.0
    %2174 = vmatprep.subr.mxu0 0.0
    %2175 = vmatpush1.msra.mxu0 0.0
    %2176 = vmatprep.subr.mxu0 0.0
    %2177 = vmatpush1.msra.mxu0 0.0
    %2178 = vmatprep.subr.mxu0 0.0
    %2179 = vmatpush1.msra.mxu0 0.0
    %2180 = vmatprep.subr.mxu0 0.0
    %2181 = vmatpush1.msra.mxu0 0.0
    %2182 = vmatprep.subr.mxu0 0.0
    %2183 = vmatpush1.msra.mxu0 0.0
    %2184 = vmatprep.subr.mxu0 0.0
    %2185 = vmatpush1.msra.mxu0 0.0
    %2186 = vmatprep.subr.mxu0 0.0
    %2187 = vmatpush1.msra.mxu0 0.0
    %2188 = vmatprep.subr.mxu0 0.0
    %2189 = vmatpush1.msra.mxu0 0.0
    %2190 = vmatprep.subr.mxu0 0.0
    %2191 = vmatpush1.msra.mxu0 0.0
    %2192 = vmatprep.subr.mxu0 0.0
    %2193 = vmatpush1.msra.mxu0 0.0
    %2194 = vmatprep.subr.mxu0 0.0
    %2195 = vmatpush1.msra.mxu0 0.0
    %2196 = vmatprep.subr.mxu0 0.0
    %2197 = vmatpush1.msra.mxu0 0.0
    %2198 = vmatprep.subr.mxu0 0.0
    %2199 = vmatpush1.msra.mxu0 0.0
    %2200 = vmatprep.subr.mxu0 0.0
    %2201 = vmatpush1.msra.mxu0 0.0
    %2202 = vmatprep.subr.mxu0 0.0
    %2203 = vmatpush1.msra.mxu0 0.0
    %2204 = vmatprep.subr.mxu0 0.0
    %2205 = vmatpush1.msra.mxu0 0.0
    %2206 = vmatprep.subr.mxu0 0.0
    %2207 = vmatpush1.msra.mxu0 0.0
    %2208 = vmatprep.subr.mxu0 0.0
    %2209 = vmatpush1.msra.mxu0 0.0
    %2210 = vmatprep.subr.mxu0 0.0
    %2211 = vmatpush1.msra.mxu0 0.0
    %2212 = vmatprep.subr.mxu0 0.0
    %2213 = vmatpush1.msra.mxu0 0.0
    %2214 = vmatprep.subr.mxu0 0.0
    %2215 = vmatpush1.msra.mxu0 0.0
    %2216 = vmatprep.subr.mxu0 0.0
    %2217 = vmatpush1.msra.mxu0 0.0
    %2218 = vmatprep.subr.mxu0 0.0
    %2219 = vmatpush1.msra.mxu0 0.0
    %2220 = vmatprep.subr.mxu0 0.0
    %2221 = vmatpush1.msra.mxu0 0.0
    %2222 = vmatprep.mubr.f32.mxu0 0.0
    %2223 = vmatmul.mubr.f32.gmra.mrb[0].mxu0 %v2153
    %v2224 = vpop.f32.mrb[0].mxu0
    %v2225 = vadd.f32 %v2151, %v2224
    %v2226 = vpop.f32.mrb[0].mxu0
    %2227 = vmatprep.mubr.f32.mxu0 0.0
    %2228 = vmatmul.mubr.f32.gmra.mrb[0].mxu0 %v2156
    %v2229 = vpop.f32.mrb[0].mxu0
    %v2230 = vadd.f32 %v2151, %v2229
    %v2231 = vpop.f32.mrb[0].mxu0
    %2232 = vdwg.mxu0
    %2234 = vrot.lane.b32.xlu0 %v2225, 96
    %v2235 = vpop.permute.xlu0 %2234
    %v2236 = vsel %vm153, %v2225, 0
    %v2238 = vsel %vm153, %v2235, 0
    %2240 = vmatprep.subr.mxu0 0.0
    %2241 = vmatpush1.xpose.msra.mxu0 %v2238
    %2242 = vmatprep.subr.mxu0 0.0
    %2243 = vmatpush1.xpose.msra.mxu0 0.0
    %2244 = vmatprep.subr.mxu0 0.0
    %2245 = vmatpush1.xpose.msra.mxu0 0.0
    %2246 = vmatprep.subr.mxu0 0.0
    %2247 = vmatpush1.xpose.msra.mxu0 0.0
    %2248 = vmatprep.subr.mxu0 0.0
    %2249 = vmatpush1.xpose.msra.mxu0 0.0
    %2250 = vmatprep.subr.mxu0 0.0
    %2251 = vmatpush1.xpose.msra.mxu0 0.0
    %2252 = vmatprep.subr.mxu0 0.0
    %2253 = vmatpush1.xpose.msra.mxu0 0.0
    %2254 = vmatprep.subr.mxu0 0.0
    %2255 = vmatpush1.xpose.msra.mxu0 0.0
    %2256 = vmatprep.subr.mxu0 0.0
    %2257 = vmatpush1.xpose.msra.mxu0 0.0
    %2258 = vmatprep.subr.mxu0 0.0
    %2259 = vmatpush1.xpose.msra.mxu0 0.0
    %2260 = vmatprep.subr.mxu0 0.0
    %2261 = vmatpush1.xpose.msra.mxu0 0.0
    %2262 = vmatprep.subr.mxu0 0.0
    %2263 = vmatpush1.xpose.msra.mxu0 0.0
    %2264 = vmatprep.subr.mxu0 0.0
    %2265 = vmatpush1.xpose.msra.mxu0 0.0
    %2266 = vmatprep.subr.mxu0 0.0
    %2267 = vmatpush1.xpose.msra.mxu0 0.0
    %2268 = vmatprep.subr.mxu0 0.0
    %2269 = vmatpush1.xpose.msra.mxu0 0.0
    %2270 = vmatprep.subr.mxu0 0.0
    %2271 = vmatpush1.xpose.msra.mxu0 0.0
    %2272 = vmatprep.subr.mxu0 0.0
    %2273 = vmatpush1.xpose.msra.mxu0 0.0
    %2274 = vmatprep.subr.mxu0 0.0
    %2275 = vmatpush1.xpose.msra.mxu0 0.0
    %2276 = vmatprep.subr.mxu0 0.0
    %2277 = vmatpush1.xpose.msra.mxu0 0.0
    %2278 = vmatprep.subr.mxu0 0.0
    %2279 = vmatpush1.xpose.msra.mxu0 0.0
    %2280 = vmatprep.subr.mxu0 0.0
    %2281 = vmatpush1.xpose.msra.mxu0 0.0
    %2282 = vmatprep.subr.mxu0 0.0
    %2283 = vmatpush1.xpose.msra.mxu0 0.0
    %2284 = vmatprep.subr.mxu0 0.0
    %2285 = vmatpush1.xpose.msra.mxu0 0.0
    %2286 = vmatprep.subr.mxu0 0.0
    %2287 = vmatpush1.xpose.msra.mxu0 0.0
    %2288 = vmatprep.subr.mxu0 0.0
    %2289 = vmatpush1.xpose.msra.mxu0 0.0
    %2290 = vmatprep.subr.mxu0 0.0
    %2291 = vmatpush1.xpose.msra.mxu0 0.0
    %2292 = vmatprep.subr.mxu0 0.0
    %2293 = vmatpush1.xpose.msra.mxu0 0.0
    %2294 = vmatprep.subr.mxu0 0.0
    %2295 = vmatpush1.xpose.msra.mxu0 0.0
    %2296 = vmatprep.subr.mxu0 0.0
    %2297 = vmatpush1.xpose.msra.mxu0 0.0
    %2298 = vmatprep.subr.mxu0 0.0
    %2299 = vmatpush1.xpose.msra.mxu0 0.0
    %2300 = vmatprep.subr.mxu0 0.0
    %2301 = vmatpush1.xpose.msra.mxu0 0.0
    %2302 = vmatprep.subr.mxu0 0.0
    %2303 = vmatpush1.xpose.msra.mxu0 0.0
    %2304 = vmatprep.mubr.f32.mxu0 0.0
    %2305 = vmatmul.mubr.f32.gmra.mrb[0].mxu0 %v2236
    %v2306 = vpop.f32.mrb[0].mxu0
    %v2307 = vadd.f32 0.0, %v2306
    %v2308 = vpop.f32.mrb[0].mxu0
    %2309 = vdwg.mxu0
    %v2310 = vmul.f32 %v2307, 0.35355338
    %v2311 = vadd.f32 %v2310, %v233
    %v2312 = vsel %vm153, %v2311, -inf
    %2313 = vmax.xlane.f32.xlu0 %v2312
    %v2314 = vpop.xlane.xlu0 %2313
    %v2315 = vsub.f32 %v2311, %v2314
    %v2316 = vmul.f32 %v2315, 1.442695
    %v2317 = vpow.pop %v2316
    %v2318 = vsel %vm153, %v2317, 0.0
    %2319 = vadd.xlane.f32.xlu0 %v2318
    %v2320 = vpop.xlane.xlu0 %2319
    %v2321 = vrcp.pop %v2320
    %v2322 = vmul.f32 %v2317, %v2321
    %2323 = vrot.lane.b32.xlu0 %v2225, 64
    %v2324 = vpop.permute.xlu0 %2323
    %v2327 = vsel %vm153, %v2322, 0
    %2329 = vmatprep.subr.mxu0 0.0
    %2330 = vmatpush1.msra.mxu0 %v2324
    %2331 = vmatprep.subr.mxu0 0.0
    %2332 = vmatpush1.msra.mxu0 0.0
    %2333 = vmatprep.subr.mxu0 0.0
    %2334 = vmatpush1.msra.mxu0 0.0
    %2335 = vmatprep.subr.mxu0 0.0
    %2336 = vmatpush1.msra.mxu0 0.0
    %2337 = vmatprep.subr.mxu0 0.0
    %2338 = vmatpush1.msra.mxu0 0.0
    %2339 = vmatprep.subr.mxu0 0.0
    %2340 = vmatpush1.msra.mxu0 0.0
    %2341 = vmatprep.subr.mxu0 0.0
    %2342 = vmatpush1.msra.mxu0 0.0
    %2343 = vmatprep.subr.mxu0 0.0
    %2344 = vmatpush1.msra.mxu0 0.0
    %2345 = vmatprep.subr.mxu0 0.0
    %2346 = vmatpush1.msra.mxu0 0.0
    %2347 = vmatprep.subr.mxu0 0.0
    %2348 = vmatpush1.msra.mxu0 0.0
    %2349 = vmatprep.subr.mxu0 0.0
    %2350 = vmatpush1.msra.mxu0 0.0
    %2351 = vmatprep.subr.mxu0 0.0
    %2352 = vmatpush1.msra.mxu0 0.0
    %2353 = vmatprep.subr.mxu0 0.0
    %2354 = vmatpush1.msra.mxu0 0.0
    %2355 = vmatprep.subr.mxu0 0.0
    %2356 = vmatpush1.msra.mxu0 0.0
    %2357 = vmatprep.subr.mxu0 0.0
    %2358 = vmatpush1.msra.mxu0 0.0
    %2359 = vmatprep.subr.mxu0 0.0
    %2360 = vmatpush1.msra.mxu0 0.0
    %2361 = vmatprep.subr.mxu0 0.0
    %2362 = vmatpush1.msra.mxu0 0.0
    %2363 = vmatprep.subr.mxu0 0.0
    %2364 = vmatpush1.msra.mxu0 0.0
    %2365 = vmatprep.subr.mxu0 0.0
    %2366 = vmatpush1.msra.mxu0 0.0
    %2367 = vmatprep.subr.mxu0 0.0
    %2368 = vmatpush1.msra.mxu0 0.0
    %2369 = vmatprep.subr.mxu0 0.0
    %2370 = vmatpush1.msra.mxu0 0.0
    %2371 = vmatprep.subr.mxu0 0.0
    %2372 = vmatpush1.msra.mxu0 0.0
    %2373 = vmatprep.subr.mxu0 0.0
    %2374 = vmatpush1.msra.mxu0 0.0
    %2375 = vmatprep.subr.mxu0 0.0
    %2376 = vmatpush1.msra.mxu0 0.0
    %2377 = vmatprep.subr.mxu0 0.0
    %2378 = vmatpush1.msra.mxu0 0.0
    %2379 = vmatprep.subr.mxu0 0.0
    %2380 = vmatpush1.msra.mxu0 0.0
    %2381 = vmatprep.subr.mxu0 0.0
    %2382 = vmatpush1.msra.mxu0 0.0
    %2383 = vmatprep.subr.mxu0 0.0
    %2384 = vmatpush1.msra.mxu0 0.0
    %2385 = vmatprep.subr.mxu0 0.0
    %2386 = vmatpush1.msra.mxu0 0.0
    %2387 = vmatprep.subr.mxu0 0.0
    %2388 = vmatpush1.msra.mxu0 0.0
    %2389 = vmatprep.subr.mxu0 0.0
    %2390 = vmatpush1.msra.mxu0 0.0
    %2391 = vmatprep.subr.mxu0 0.0
    %2392 = vmatpush1.msra.mxu0 0.0
    %2393 = vmatprep.mubr.f32.mxu0 0.0
    %2394 = vmatmul.mubr.f32.gmra.mrb[0].mxu0 %v2327
    %v2395 = vpop.f32.mrb[0].mxu0
    %v2396 = vadd.f32 0.0, %v2395
    %v2397 = vpop.f32.mrb[0].mxu0
    %2398 = vdwg.mxu0
    %2399 = vrot.lane.b32.xlu0 %v2225, 120
    %v2400 = vpop.permute.xlu0 %2399
    %2401 = vrot.lane.b32.xlu0 %v2225, 88
    %v2402 = vpop.permute.xlu0 %2401
    %v2403 = vsel %vm153, %v2400, 0
    %v2405 = vsel %vm153, %v2402, 0
    %2407 = vmatprep.subr.mxu0 0.0
    %2408 = vmatpush1.xpose.msra.mxu0 %v2405
    %2409 = vmatprep.subr.mxu0 0.0
    %2410 = vmatpush1.xpose.msra.mxu0 0.0
    %2411 = vmatprep.subr.mxu0 0.0
    %2412 = vmatpush1.xpose.msra.mxu0 0.0
    %2413 = vmatprep.subr.mxu0 0.0
    %2414 = vmatpush1.xpose.msra.mxu0 0.0
    %2415 = vmatprep.subr.mxu0 0.0
    %2416 = vmatpush1.xpose.msra.mxu0 0.0
    %2417 = vmatprep.subr.mxu0 0.0
    %2418 = vmatpush1.xpose.msra.mxu0 0.0
    %2419 = vmatprep.subr.mxu0 0.0
    %2420 = vmatpush1.xpose.msra.mxu0 0.0
    %2421 = vmatprep.subr.mxu0 0.0
    %2422 = vmatpush1.xpose.msra.mxu0 0.0
    %2423 = vmatprep.subr.mxu0 0.0
    %2424 = vmatpush1.xpose.msra.mxu0 0.0
    %2425 = vmatprep.subr.mxu0 0.0
    %2426 = vmatpush1.xpose.msra.mxu0 0.0
    %2427 = vmatprep.subr.mxu0 0.0
    %2428 = vmatpush1.xpose.msra.mxu0 0.0
    %2429 = vmatprep.subr.mxu0 0.0
    %2430 = vmatpush1.xpose.msra.mxu0 0.0
    %2431 = vmatprep.subr.mxu0 0.0
    %2432 = vmatpush1.xpose.msra.mxu0 0.0
    %2433 = vmatprep.subr.mxu0 0.0
    %2434 = vmatpush1.xpose.msra.mxu0 0.0
    %2435 = vmatprep.subr.mxu0 0.0
    %2436 = vmatpush1.xpose.msra.mxu0 0.0
    %2437 = vmatprep.subr.mxu0 0.0
    %2438 = vmatpush1.xpose.msra.mxu0 0.0
    %2439 = vmatprep.subr.mxu0 0.0
    %2440 = vmatpush1.xpose.msra.mxu0 0.0
    %2441 = vmatprep.subr.mxu0 0.0
    %2442 = vmatpush1.xpose.msra.mxu0 0.0
    %2443 = vmatprep.subr.mxu0 0.0
    %2444 = vmatpush1.xpose.msra.mxu0 0.0
    %2445 = vmatprep.subr.mxu0 0.0
    %2446 = vmatpush1.xpose.msra.mxu0 0.0
    %2447 = vmatprep.subr.mxu0 0.0
    %2448 = vmatpush1.xpose.msra.mxu0 0.0
    %2449 = vmatprep.subr.mxu0 0.0
    %2450 = vmatpush1.xpose.msra.mxu0 0.0
    %2451 = vmatprep.subr.mxu0 0.0
    %2452 = vmatpush1.xpose.msra.mxu0 0.0
    %2453 = vmatprep.subr.mxu0 0.0
    %2454 = vmatpush1.xpose.msra.mxu0 0.0
    %2455 = vmatprep.subr.mxu0 0.0
    %2456 = vmatpush1.xpose.msra.mxu0 0.0
    %2457 = vmatprep.subr.mxu0 0.0
    %2458 = vmatpush1.xpose.msra.mxu0 0.0
    %2459 = vmatprep.subr.mxu0 0.0
    %2460 = vmatpush1.xpose.msra.mxu0 0.0
    %2461 = vmatprep.subr.mxu0 0.0
    %2462 = vmatpush1.xpose.msra.mxu0 0.0
    %2463 = vmatprep.subr.mxu0 0.0
    %2464 = vmatpush1.xpose.msra.mxu0 0.0
    %2465 = vmatprep.subr.mxu0 0.0
    %2466 = vmatpush1.xpose.msra.mxu0 0.0
    %2467 = vmatprep.subr.mxu0 0.0
    %2468 = vmatpush1.xpose.msra.mxu0 0.0
    %2469 = vmatprep.subr.mxu0 0.0
    %2470 = vmatpush1.xpose.msra.mxu0 0.0
    %2471 = vmatprep.mubr.f32.mxu0 0.0
    %2472 = vmatmul.mubr.f32.gmra.mrb[0].mxu0 %v2403
    %v2473 = vpop.f32.mrb[0].mxu0
    %v2474 = vadd.f32 0.0, %v2473
    %v2475 = vpop.f32.mrb[0].mxu0
    %2476 = vdwg.mxu0
    %v2477 = vmul.f32 %v2474, 0.35355338
    %v2478 = vadd.f32 %v2477, %v233
    %v2479 = vsel %vm153, %v2478, -inf
    %2480 = vmax.xlane.f32.xlu0 %v2479
    %v2481 = vpop.xlane.xlu0 %2480
    %v2482 = vsub.f32 %v2478, %v2481
    %v2483 = vmul.f32 %v2482, 1.442695
    %v2484 = vpow.pop %v2483
    %v2485 = vsel %vm153, %v2484, 0.0
    %2486 = vadd.xlane.f32.xlu0 %v2485
    %v2487 = vpop.xlane.xlu0 %2486
    %v2488 = vrcp.pop %v2487
    %v2489 = vmul.f32 %v2484, %v2488
    %2490 = vrot.lane.b32.xlu0 %v2225, 56
    %v2491 = vpop.permute.xlu0 %2490
    %v2494 = vsel %vm153, %v2489, 0
    %2496 = vmatprep.subr.mxu0 0.0
    %2497 = vmatpush1.msra.mxu0 %v2491
    %2498 = vmatprep.subr.mxu0 0.0
    %2499 = vmatpush1.msra.mxu0 0.0
    %2500 = vmatprep.subr.mxu0 0.0
    %2501 = vmatpush1.msra.mxu0 0.0
    %2502 = vmatprep.subr.mxu0 0.0
    %2503 = vmatpush1.msra.mxu0 0.0
    %2504 = vmatprep.subr.mxu0 0.0
    %2505 = vmatpush1.msra.mxu0 0.0
    %2506 = vmatprep.subr.mxu0 0.0
    %2507 = vmatpush1.msra.mxu0 0.0
    %2508 = vmatprep.subr.mxu0 0.0
    %2509 = vmatpush1.msra.mxu0 0.0
    %2510 = vmatprep.subr.mxu0 0.0
    %2511 = vmatpush1.msra.mxu0 0.0
    %2512 = vmatprep.subr.mxu0 0.0
    %2513 = vmatpush1.msra.mxu0 0.0
    %2514 = vmatprep.subr.mxu0 0.0
    %2515 = vmatpush1.msra.mxu0 0.0
    %2516 = vmatprep.subr.mxu0 0.0
    %2517 = vmatpush1.msra.mxu0 0.0
    %2518 = vmatprep.subr.mxu0 0.0
    %2519 = vmatpush1.msra.mxu0 0.0
    %2520 = vmatprep.subr.mxu0 0.0
    %2521 = vmatpush1.msra.mxu0 0.0
    %2522 = vmatprep.subr.mxu0 0.0
    %2523 = vmatpush1.msra.mxu0 0.0
    %2524 = vmatprep.subr.mxu0 0.0
    %2525 = vmatpush1.msra.mxu0 0.0
    %2526 = vmatprep.subr.mxu0 0.0
    %2527 = vmatpush1.msra.mxu0 0.0
    %2528 = vmatprep.subr.mxu0 0.0
    %2529 = vmatpush1.msra.mxu0 0.0
    %2530 = vmatprep.subr.mxu0 0.0
    %2531 = vmatpush1.msra.mxu0 0.0
    %2532 = vmatprep.subr.mxu0 0.0
    %2533 = vmatpush1.msra.mxu0 0.0
    %2534 = vmatprep.subr.mxu0 0.0
    %2535 = vmatpush1.msra.mxu0 0.0
    %2536 = vmatprep.subr.mxu0 0.0
    %2537 = vmatpush1.msra.mxu0 0.0
    %2538 = vmatprep.subr.mxu0 0.0
    %2539 = vmatpush1.msra.mxu0 0.0
    %2540 = vmatprep.subr.mxu0 0.0
    %2541 = vmatpush1.msra.mxu0 0.0
    %2542 = vmatprep.subr.mxu0 0.0
    %2543 = vmatpush1.msra.mxu0 0.0
    %2544 = vmatprep.subr.mxu0 0.0
    %2545 = vmatpush1.msra.mxu0 0.0
    %2546 = vmatprep.subr.mxu0 0.0
    %2547 = vmatpush1.msra.mxu0 0.0
    %2548 = vmatprep.subr.mxu0 0.0
    %2549 = vmatpush1.msra.mxu0 0.0
    %2550 = vmatprep.subr.mxu0 0.0
    %2551 = vmatpush1.msra.mxu0 0.0
    %2552 = vmatprep.subr.mxu0 0.0
    %2553 = vmatpush1.msra.mxu0 0.0
    %2554 = vmatprep.subr.mxu0 0.0
    %2555 = vmatpush1.msra.mxu0 0.0
    %2556 = vmatprep.subr.mxu0 0.0
    %2557 = vmatpush1.msra.mxu0 0.0
    %2558 = vmatprep.subr.mxu0 0.0
    %2559 = vmatpush1.msra.mxu0 0.0
    %2560 = vmatprep.mubr.f32.mxu0 0.0
    %2561 = vmatmul.mubr.f32.gmra.mrb[0].mxu0 %v2494
    %v2562 = vpop.f32.mrb[0].mxu0
    %v2563 = vadd.f32 0.0, %v2562
    %v2564 = vpop.f32.mrb[0].mxu0
    %2565 = vdwg.mxu0
    %v2567 = vsel %vm153, %v2563, 0
    %2569 = vmatprep.subr.mxu0 0.0
    %2570 = vmatpush1.msra.mxu0 %v2142
    %2571 = vmatprep.subr.mxu0 0.0
    %2572 = vmatpush1.msra.mxu0 0.0
    %2573 = vmatprep.subr.mxu0 0.0
    %2574 = vmatpush1.msra.mxu0 0.0
    %2575 = vmatprep.subr.mxu0 0.0
    %2576 = vmatpush1.msra.mxu0 0.0
    %2577 = vmatprep.subr.mxu0 0.0
    %2578 = vmatpush1.msra.mxu0 0.0
    %2579 = vmatprep.subr.mxu0 0.0
    %2580 = vmatpush1.msra.mxu0 0.0
    %2581 = vmatprep.subr.mxu0 0.0
    %2582 = vmatpush1.msra.mxu0 0.0
    %2583 = vmatprep.subr.mxu0 0.0
    %2584 = vmatpush1.msra.mxu0 0.0
    %2585 = vmatprep.subr.mxu0 0.0
    %2586 = vmatpush1.msra.mxu0 0.0
    %2587 = vmatprep.subr.mxu0 0.0
    %2588 = vmatpush1.msra.mxu0 0.0
    %2589 = vmatprep.subr.mxu0 0.0
    %2590 = vmatpush1.msra.mxu0 0.0
    %2591 = vmatprep.subr.mxu0 0.0
    %2592 = vmatpush1.msra.mxu0 0.0
    %2593 = vmatprep.subr.mxu0 0.0
    %2594 = vmatpush1.msra.mxu0 0.0
    %2595 = vmatprep.subr.mxu0 0.0
    %2596 = vmatpush1.msra.mxu0 0.0
    %2597 = vmatprep.subr.mxu0 0.0
    %2598 = vmatpush1.msra.mxu0 0.0
    %2599 = vmatprep.subr.mxu0 0.0
    %2600 = vmatpush1.msra.mxu0 0.0
    %2601 = vmatprep.subr.mxu0 0.0
    %2602 = vmatpush1.msra.mxu0 0.0
    %2603 = vmatprep.subr.mxu0 0.0
    %2604 = vmatpush1.msra.mxu0 0.0
    %2605 = vmatprep.subr.mxu0 0.0
    %2606 = vmatpush1.msra.mxu0 0.0
    %2607 = vmatprep.subr.mxu0 0.0
    %2608 = vmatpush1.msra.mxu0 0.0
    %2609 = vmatprep.subr.mxu0 0.0
    %2610 = vmatpush1.msra.mxu0 0.0
    %2611 = vmatprep.subr.mxu0 0.0
    %2612 = vmatpush1.msra.mxu0 0.0
    %2613 = vmatprep.subr.mxu0 0.0
    %2614 = vmatpush1.msra.mxu0 0.0
    %2615 = vmatprep.subr.mxu0 0.0
    %2616 = vmatpush1.msra.mxu0 0.0
    %2617 = vmatprep.subr.mxu0 0.0
    %2618 = vmatpush1.msra.mxu0 0.0
    %2619 = vmatprep.subr.mxu0 0.0
    %2620 = vmatpush1.msra.mxu0 0.0
    %2621 = vmatprep.subr.mxu0 0.0
    %2622 = vmatpush1.msra.mxu0 0.0
    %2623 = vmatprep.subr.mxu0 0.0
    %2624 = vmatpush1.msra.mxu0 0.0
    %2625 = vmatprep.subr.mxu0 0.0
    %2626 = vmatpush1.msra.mxu0 0.0
    %2627 = vmatprep.subr.mxu0 0.0
    %2628 = vmatpush1.msra.mxu0 0.0
    %2629 = vmatprep.subr.mxu0 0.0
    %2630 = vmatpush1.msra.mxu0 0.0
    %2631 = vmatprep.subr.mxu0 0.0
    %2632 = vmatpush1.msra.mxu0 0.0
    %2633 = vmatprep.mubr.f32.mxu0 0.0
    %2634 = vmatmul.mubr.f32.gmra.mrb[0].mxu0 %v2567
    %v2635 = vpop.f32.mrb[0].mxu0
    %v2636 = vadd.f32 0.0, %v2635
    %v2637 = vpop.f32.mrb[0].mxu0
    %2638 = vdwg.mxu0
    %v2640 = vsel %vm153, %v2396, 0
    %2642 = vmatprep.subr.mxu0 0.0
    %2643 = vmatpush1.msra.mxu0 %v2141
    %2644 = vmatprep.subr.mxu0 0.0
    %2645 = vmatpush1.msra.mxu0 0.0
    %2646 = vmatprep.subr.mxu0 0.0
    %2647 = vmatpush1.msra.mxu0 0.0
    %2648 = vmatprep.subr.mxu0 0.0
    %2649 = vmatpush1.msra.mxu0 0.0
    %2650 = vmatprep.subr.mxu0 0.0
    %2651 = vmatpush1.msra.mxu0 0.0
    %2652 = vmatprep.subr.mxu0 0.0
    %2653 = vmatpush1.msra.mxu0 0.0
    %2654 = vmatprep.subr.mxu0 0.0
    %2655 = vmatpush1.msra.mxu0 0.0
    %2656 = vmatprep.subr.mxu0 0.0
    %2657 = vmatpush1.msra.mxu0 0.0
    %2658 = vmatprep.subr.mxu0 0.0
    %2659 = vmatpush1.msra.mxu0 0.0
    %2660 = vmatprep.subr.mxu0 0.0
    %2661 = vmatpush1.msra.mxu0 0.0
    %2662 = vmatprep.subr.mxu0 0.0
    %2663 = vmatpush1.msra.mxu0 0.0
    %2664 = vmatprep.subr.mxu0 0.0
    %2665 = vmatpush1.msra.mxu0 0.0
    %2666 = vmatprep.subr.mxu0 0.0
    %2667 = vmatpush1.msra.mxu0 0.0
    %2668 = vmatprep.subr.mxu0 0.0
    %2669 = vmatpush1.msra.mxu0 0.0
    %2670 = vmatprep.subr.mxu0 0.0
    %2671 = vmatpush1.msra.mxu0 0.0
    %2672 = vmatprep.subr.mxu0 0.0
    %2673 = vmatpush1.msra.mxu0 0.0
    %2674 = vmatprep.subr.mxu0 0.0
    %2675 = vmatpush1.msra.mxu0 0.0
    %2676 = vmatprep.subr.mxu0 0.0
    %2677 = vmatpush1.msra.mxu0 0.0
    %2678 = vmatprep.subr.mxu0 0.0
    %2679 = vmatpush1.msra.mxu0 0.0
    %2680 = vmatprep.subr.mxu0 0.0
    %2681 = vmatpush1.msra.mxu0 0.0
    %2682 = vmatprep.subr.mxu0 0.0
    %2683 = vmatpush1.msra.mxu0 0.0
    %2684 = vmatprep.subr.mxu0 0.0
    %2685 = vmatpush1.msra.mxu0 0.0
    %2686 = vmatprep.subr.mxu0 0.0
    %2687 = vmatpush1.msra.mxu0 0.0
    %2688 = vmatprep.subr.mxu0 0.0
    %2689 = vmatpush1.msra.mxu0 0.0
    %2690 = vmatprep.subr.mxu0 0.0
    %2691 = vmatpush1.msra.mxu0 0.0
    %2692 = vmatprep.subr.mxu0 0.0
    %2693 = vmatpush1.msra.mxu0 0.0
    %2694 = vmatprep.subr.mxu0 0.0
    %2695 = vmatpush1.msra.mxu0 0.0
    %2696 = vmatprep.subr.mxu0 0.0
    %2697 = vmatpush1.msra.mxu0 0.0
    %2698 = vmatprep.subr.mxu0 0.0
    %2699 = vmatpush1.msra.mxu0 0.0
    %2700 = vmatprep.subr.mxu0 0.0
    %2701 = vmatpush1.msra.mxu0 0.0
    %2702 = vmatprep.subr.mxu0 0.0
    %2703 = vmatpush1.msra.mxu0 0.0
    %2704 = vmatprep.subr.mxu0 0.0
    %2705 = vmatpush1.msra.mxu0 0.0
    %2706 = vmatprep.mubr.f32.mxu0 0.0
    %2707 = vmatmul.mubr.f32.gmra.mrb[0].mxu0 %v2640
    %v2708 = vpop.f32.mrb[0].mxu0
    %v2709 = vadd.f32 %v2636, %v2708
    %v2710 = vpop.f32.mrb[0].mxu0
    %2711 = vdwg.mxu0
    %2712 = vrot.lane.b32.xlu0 %v2225, 112
    %v2713 = vpop.permute.xlu0 %2712
    %2714 = vrot.lane.b32.xlu0 %v2225, 80
    %v2715 = vpop.permute.xlu0 %2714
    %v2716 = vsel %vm153, %v2713, 0
    %v2718 = vsel %vm153, %v2715, 0
    %2720 = vmatprep.subr.mxu0 0.0
    %2721 = vmatpush1.xpose.msra.mxu0 %v2718
    %2722 = vmatprep.subr.mxu0 0.0
    %2723 = vmatpush1.xpose.msra.mxu0 0.0
    %2724 = vmatprep.subr.mxu0 0.0
    %2725 = vmatpush1.xpose.msra.mxu0 0.0
    %2726 = vmatprep.subr.mxu0 0.0
    %2727 = vmatpush1.xpose.msra.mxu0 0.0
    %2728 = vmatprep.subr.mxu0 0.0
    %2729 = vmatpush1.xpose.msra.mxu0 0.0
    %2730 = vmatprep.subr.mxu0 0.0
    %2731 = vmatpush1.xpose.msra.mxu0 0.0
    %2732 = vmatprep.subr.mxu0 0.0
    %2733 = vmatpush1.xpose.msra.mxu0 0.0
    %2734 = vmatprep.subr.mxu0 0.0
    %2735 = vmatpush1.xpose.msra.mxu0 0.0
    %2736 = vmatprep.subr.mxu0 0.0
    %2737 = vmatpush1.xpose.msra.mxu0 0.0
    %2738 = vmatprep.subr.mxu0 0.0
    %2739 = vmatpush1.xpose.msra.mxu0 0.0
    %2740 = vmatprep.subr.mxu0 0.0
    %2741 = vmatpush1.xpose.msra.mxu0 0.0
    %2742 = vmatprep.subr.mxu0 0.0
    %2743 = vmatpush1.xpose.msra.mxu0 0.0
    %2744 = vmatprep.subr.mxu0 0.0
    %2745 = vmatpush1.xpose.msra.mxu0 0.0
    %2746 = vmatprep.subr.mxu0 0.0
    %2747 = vmatpush1.xpose.msra.mxu0 0.0
    %2748 = vmatprep.subr.mxu0 0.0
    %2749 = vmatpush1.xpose.msra.mxu0 0.0
    %2750 = vmatprep.subr.mxu0 0.0
    %2751 = vmatpush1.xpose.msra.mxu0 0.0
    %2752 = vmatprep.subr.mxu0 0.0
    %2753 = vmatpush1.xpose.msra.mxu0 0.0
    %2754 = vmatprep.subr.mxu0 0.0
    %2755 = vmatpush1.xpose.msra.mxu0 0.0
    %2756 = vmatprep.subr.mxu0 0.0
    %2757 = vmatpush1.xpose.msra.mxu0 0.0
    %2758 = vmatprep.subr.mxu0 0.0
    %2759 = vmatpush1.xpose.msra.mxu0 0.0
    %2760 = vmatprep.subr.mxu0 0.0
    %2761 = vmatpush1.xpose.msra.mxu0 0.0
    %2762 = vmatprep.subr.mxu0 0.0
    %2763 = vmatpush1.xpose.msra.mxu0 0.0
    %2764 = vmatprep.subr.mxu0 0.0
    %2765 = vmatpush1.xpose.msra.mxu0 0.0
    %2766 = vmatprep.subr.mxu0 0.0
    %2767 = vmatpush1.xpose.msra.mxu0 0.0
    %2768 = vmatprep.subr.mxu0 0.0
    %2769 = vmatpush1.xpose.msra.mxu0 0.0
    %2770 = vmatprep.subr.mxu0 0.0
    %2771 = vmatpush1.xpose.msra.mxu0 0.0
    %2772 = vmatprep.subr.mxu0 0.0
    %2773 = vmatpush1.xpose.msra.mxu0 0.0
    %2774 = vmatprep.subr.mxu0 0.0
    %2775 = vmatpush1.xpose.msra.mxu0 0.0
    %2776 = vmatprep.subr.mxu0 0.0
    %2777 = vmatpush1.xpose.msra.mxu0 0.0
    %2778 = vmatprep.subr.mxu0 0.0
    %2779 = vmatpush1.xpose.msra.mxu0 0.0
    %2780 = vmatprep.subr.mxu0 0.0
    %2781 = vmatpush1.xpose.msra.mxu0 0.0
    %2782 = vmatprep.subr.mxu0 0.0
    %2783 = vmatpush1.xpose.msra.mxu0 0.0
    %2784 = vmatprep.mubr.f32.mxu0 0.0
    %2785 = vmatmul.mubr.f32.gmra.mrb[0].mxu0 %v2716
    %v2786 = vpop.f32.mrb[0].mxu0
    %v2787 = vadd.f32 0.0, %v2786
    %v2788 = vpop.f32.mrb[0].mxu0
    %2789 = vdwg.mxu0
    %v2790 = vmul.f32 %v2787, 0.35355338
    %v2791 = vadd.f32 %v2790, %v233
    %v2792 = vsel %vm153, %v2791, -inf
    %2793 = vmax.xlane.f32.xlu0 %v2792
    %v2794 = vpop.xlane.xlu0 %2793
    %v2795 = vsub.f32 %v2791, %v2794
    %v2796 = vmul.f32 %v2795, 1.442695
    %v2797 = vpow.pop %v2796
    %v2798 = vsel %vm153, %v2797, 0.0
    %2799 = vadd.xlane.f32.xlu0 %v2798
    %v2800 = vpop.xlane.xlu0 %2799
    %v2801 = vrcp.pop %v2800
    %v2802 = vmul.f32 %v2797, %v2801
    %2803 = vrot.lane.b32.xlu0 %v2225, 48
    %v2804 = vpop.permute.xlu0 %2803
    %v2807 = vsel %vm153, %v2802, 0
    %2809 = vmatprep.subr.mxu0 0.0
    %2810 = vmatpush1.msra.mxu0 %v2804
    %2811 = vmatprep.subr.mxu0 0.0
    %2812 = vmatpush1.msra.mxu0 0.0
    %2813 = vmatprep.subr.mxu0 0.0
    %2814 = vmatpush1.msra.mxu0 0.0
    %2815 = vmatprep.subr.mxu0 0.0
    %2816 = vmatpush1.msra.mxu0 0.0
    %2817 = vmatprep.subr.mxu0 0.0
    %2818 = vmatpush1.msra.mxu0 0.0
    %2819 = vmatprep.subr.mxu0 0.0
    %2820 = vmatpush1.msra.mxu0 0.0
    %2821 = vmatprep.subr.mxu0 0.0
    %2822 = vmatpush1.msra.mxu0 0.0
    %2823 = vmatprep.subr.mxu0 0.0
    %2824 = vmatpush1.msra.mxu0 0.0
    %2825 = vmatprep.subr.mxu0 0.0
    %2826 = vmatpush1.msra.mxu0 0.0
    %2827 = vmatprep.subr.mxu0 0.0
    %2828 = vmatpush1.msra.mxu0 0.0
    %2829 = vmatprep.subr.mxu0 0.0
    %2830 = vmatpush1.msra.mxu0 0.0
    %2831 = vmatprep.subr.mxu0 0.0
    %2832 = vmatpush1.msra.mxu0 0.0
    %2833 = vmatprep.subr.mxu0 0.0
    %2834 = vmatpush1.msra.mxu0 0.0
    %2835 = vmatprep.subr.mxu0 0.0
    %2836 = vmatpush1.msra.mxu0 0.0
    %2837 = vmatprep.subr.mxu0 0.0
    %2838 = vmatpush1.msra.mxu0 0.0
    %2839 = vmatprep.subr.mxu0 0.0
    %2840 = vmatpush1.msra.mxu0 0.0
    %2841 = vmatprep.subr.mxu0 0.0
    %2842 = vmatpush1.msra.mxu0 0.0
    %2843 = vmatprep.subr.mxu0 0.0
    %2844 = vmatpush1.msra.mxu0 0.0
    %2845 = vmatprep.subr.mxu0 0.0
    %2846 = vmatpush1.msra.mxu0 0.0
    %2847 = vmatprep.subr.mxu0 0.0
    %2848 = vmatpush1.msra.mxu0 0.0
    %2849 = vmatprep.subr.mxu0 0.0
    %2850 = vmatpush1.msra.mxu0 0.0
    %2851 = vmatprep.subr.mxu0 0.0
    %2852 = vmatpush1.msra.mxu0 0.0
    %2853 = vmatprep.subr.mxu0 0.0
    %2854 = vmatpush1.msra.mxu0 0.0
    %2855 = vmatprep.subr.mxu0 0.0
    %2856 = vmatpush1.msra.mxu0 0.0
    %2857 = vmatprep.subr.mxu0 0.0
    %2858 = vmatpush1.msra.mxu0 0.0
    %2859 = vmatprep.subr.mxu0 0.0
    %2860 = vmatpush1.msra.mxu0 0.0
    %2861 = vmatprep.subr.mxu0 0.0
    %2862 = vmatpush1.msra.mxu0 0.0
    %2863 = vmatprep.subr.mxu0 0.0
    %2864 = vmatpush1.msra.mxu0 0.0
    %2865 = vmatprep.subr.mxu0 0.0
    %2866 = vmatpush1.msra.mxu0 0.0
    %2867 = vmatprep.subr.mxu0 0.0
    %2868 = vmatpush1.msra.mxu0 0.0
    %2869 = vmatprep.subr.mxu0 0.0
    %2870 = vmatpush1.msra.mxu0 0.0
    %2871 = vmatprep.subr.mxu0 0.0
    %2872 = vmatpush1.msra.mxu0 0.0
    %2873 = vmatprep.mubr.f32.mxu0 0.0
    %2874 = vmatmul.mubr.f32.gmra.mrb[0].mxu0 %v2807
    %v2875 = vpop.f32.mrb[0].mxu0
    %v2876 = vadd.f32 0.0, %v2875
    %v2877 = vpop.f32.mrb[0].mxu0
    %2878 = vdwg.mxu0
    %v2880 = vsel %vm153, %v2876, 0
    %2882 = vmatprep.subr.mxu0 0.0
    %2883 = vmatpush1.msra.mxu0 %v2143
    %2884 = vmatprep.subr.mxu0 0.0
    %2885 = vmatpush1.msra.mxu0 0.0
    %2886 = vmatprep.subr.mxu0 0.0
    %2887 = vmatpush1.msra.mxu0 0.0
    %2888 = vmatprep.subr.mxu0 0.0
    %2889 = vmatpush1.msra.mxu0 0.0
    %2890 = vmatprep.subr.mxu0 0.0
    %2891 = vmatpush1.msra.mxu0 0.0
    %2892 = vmatprep.subr.mxu0 0.0
    %2893 = vmatpush1.msra.mxu0 0.0
    %2894 = vmatprep.subr.mxu0 0.0
    %2895 = vmatpush1.msra.mxu0 0.0
    %2896 = vmatprep.subr.mxu0 0.0
    %2897 = vmatpush1.msra.mxu0 0.0
    %2898 = vmatprep.subr.mxu0 0.0
    %2899 = vmatpush1.msra.mxu0 0.0
    %2900 = vmatprep.subr.mxu0 0.0
    %2901 = vmatpush1.msra.mxu0 0.0
    %2902 = vmatprep.subr.mxu0 0.0
    %2903 = vmatpush1.msra.mxu0 0.0
    %2904 = vmatprep.subr.mxu0 0.0
    %2905 = vmatpush1.msra.mxu0 0.0
    %2906 = vmatprep.subr.mxu0 0.0
    %2907 = vmatpush1.msra.mxu0 0.0
    %2908 = vmatprep.subr.mxu0 0.0
    %2909 = vmatpush1.msra.mxu0 0.0
    %2910 = vmatprep.subr.mxu0 0.0
    %2911 = vmatpush1.msra.mxu0 0.0
    %2912 = vmatprep.subr.mxu0 0.0
    %2913 = vmatpush1.msra.mxu0 0.0
    %2914 = vmatprep.subr.mxu0 0.0
    %2915 = vmatpush1.msra.mxu0 0.0
    %2916 = vmatprep.subr.mxu0 0.0
    %2917 = vmatpush1.msra.mxu0 0.0
    %2918 = vmatprep.subr.mxu0 0.0
    %2919 = vmatpush1.msra.mxu0 0.0
    %2920 = vmatprep.subr.mxu0 0.0
    %2921 = vmatpush1.msra.mxu0 0.0
    %2922 = vmatprep.subr.mxu0 0.0
    %2923 = vmatpush1.msra.mxu0 0.0
    %2924 = vmatprep.subr.mxu0 0.0
    %2925 = vmatpush1.msra.mxu0 0.0
    %2926 = vmatprep.subr.mxu0 0.0
    %2927 = vmatpush1.msra.mxu0 0.0
    %2928 = vmatprep.subr.mxu0 0.0
    %2929 = vmatpush1.msra.mxu0 0.0
    %2930 = vmatprep.subr.mxu0 0.0
    %2931 = vmatpush1.msra.mxu0 0.0
    %2932 = vmatprep.subr.mxu0 0.0
    %2933 = vmatpush1.msra.mxu0 0.0
    %2934 = vmatprep.subr.mxu0 0.0
    %2935 = vmatpush1.msra.mxu0 0.0
    %2936 = vmatprep.subr.mxu0 0.0
    %2937 = vmatpush1.msra.mxu0 0.0
    %2938 = vmatprep.subr.mxu0 0.0
    %2939 = vmatpush1.msra.mxu0 0.0
    %2940 = vmatprep.subr.mxu0 0.0
    %2941 = vmatpush1.msra.mxu0 0.0
    %2942 = vmatprep.subr.mxu0 0.0
    %2943 = vmatpush1.msra.mxu0 0.0
    %2944 = vmatprep.subr.mxu0 0.0
    %2945 = vmatpush1.msra.mxu0 0.0
    %2946 = vmatprep.mubr.f32.mxu0 0.0
    %2947 = vmatmul.mubr.f32.gmra.mrb[0].mxu0 %v2880
    %v2948 = vpop.f32.mrb[0].mxu0
    %v2949 = vadd.f32 0.0, %v2948
    %v2950 = vpop.f32.mrb[0].mxu0
    %2951 = vdwg.mxu0
    %v2952 = vadd.f32 %v2709, %v2949
    %2953 = vrot.lane.b32.xlu0 %v2225, 104
    %v2954 = vpop.permute.xlu0 %2953
    %2955 = vrot.lane.b32.xlu0 %v2225, 72
    %v2956 = vpop.permute.xlu0 %2955
    %v2957 = vsel %vm153, %v2954, 0
    %v2959 = vsel %vm153, %v2956, 0
    %2961 = vmatprep.subr.mxu0 0.0
    %2962 = vmatpush1.xpose.msra.mxu0 %v2959
    %2963 = vmatprep.subr.mxu0 0.0
    %2964 = vmatpush1.xpose.msra.mxu0 0.0
    %2965 = vmatprep.subr.mxu0 0.0
    %2966 = vmatpush1.xpose.msra.mxu0 0.0
    %2967 = vmatprep.subr.mxu0 0.0
    %2968 = vmatpush1.xpose.msra.mxu0 0.0
    %2969 = vmatprep.subr.mxu0 0.0
    %2970 = vmatpush1.xpose.msra.mxu0 0.0
    %2971 = vmatprep.subr.mxu0 0.0
    %2972 = vmatpush1.xpose.msra.mxu0 0.0
    %2973 = vmatprep.subr.mxu0 0.0
    %2974 = vmatpush1.xpose.msra.mxu0 0.0
    %2975 = vmatprep.subr.mxu0 0.0
    %2976 = vmatpush1.xpose.msra.mxu0 0.0
    %2977 = vmatprep.subr.mxu0 0.0
    %2978 = vmatpush1.xpose.msra.mxu0 0.0
    %2979 = vmatprep.subr.mxu0 0.0
    %2980 = vmatpush1.xpose.msra.mxu0 0.0
    %2981 = vmatprep.subr.mxu0 0.0
    %2982 = vmatpush1.xpose.msra.mxu0 0.0
    %2983 = vmatprep.subr.mxu0 0.0
    %2984 = vmatpush1.xpose.msra.mxu0 0.0
    %2985 = vmatprep.subr.mxu0 0.0
    %2986 = vmatpush1.xpose.msra.mxu0 0.0
    %2987 = vmatprep.subr.mxu0 0.0
    %2988 = vmatpush1.xpose.msra.mxu0 0.0
    %2989 = vmatprep.subr.mxu0 0.0
    %2990 = vmatpush1.xpose.msra.mxu0 0.0
    %2991 = vmatprep.subr.mxu0 0.0
    %2992 = vmatpush1.xpose.msra.mxu0 0.0
    %2993 = vmatprep.subr.mxu0 0.0
    %2994 = vmatpush1.xpose.msra.mxu0 0.0
    %2995 = vmatprep.subr.mxu0 0.0
    %2996 = vmatpush1.xpose.msra.mxu0 0.0
    %2997 = vmatprep.subr.mxu0 0.0
    %2998 = vmatpush1.xpose.msra.mxu0 0.0
    %2999 = vmatprep.subr.mxu0 0.0
    %3000 = vmatpush1.xpose.msra.mxu0 0.0
    %3001 = vmatprep.subr.mxu0 0.0
    %3002 = vmatpush1.xpose.msra.mxu0 0.0
    %3003 = vmatprep.subr.mxu0 0.0
    %3004 = vmatpush1.xpose.msra.mxu0 0.0
    %3005 = vmatprep.subr.mxu0 0.0
    %3006 = vmatpush1.xpose.msra.mxu0 0.0
    %3007 = vmatprep.subr.mxu0 0.0
    %3008 = vmatpush1.xpose.msra.mxu0 0.0
    %3009 = vmatprep.subr.mxu0 0.0
    %3010 = vmatpush1.xpose.msra.mxu0 0.0
    %3011 = vmatprep.subr.mxu0 0.0
    %3012 = vmatpush1.xpose.msra.mxu0 0.0
    %3013 = vmatprep.subr.mxu0 0.0
    %3014 = vmatpush1.xpose.msra.mxu0 0.0
    %3015 = vmatprep.subr.mxu0 0.0
    %3016 = vmatpush1.xpose.msra.mxu0 0.0
    %3017 = vmatprep.subr.mxu0 0.0
    %3018 = vmatpush1.xpose.msra.mxu0 0.0
    %3019 = vmatprep.subr.mxu0 0.0
    %3020 = vmatpush1.xpose.msra.mxu0 0.0
    %3021 = vmatprep.subr.mxu0 0.0
    %3022 = vmatpush1.xpose.msra.mxu0 0.0
    %3023 = vmatprep.subr.mxu0 0.0
    %3024 = vmatpush1.xpose.msra.mxu0 0.0
    %3025 = vmatprep.mubr.f32.mxu0 0.0
    %3026 = vmatmul.mubr.f32.gmra.mrb[0].mxu0 %v2957
    %v3027 = vpop.f32.mrb[0].mxu0
    %v3028 = vadd.f32 0.0, %v3027
    %v3029 = vpop.f32.mrb[0].mxu0
    %3030 = vdwg.mxu0
    %v3031 = vmul.f32 %v3028, 0.35355338
    %v3032 = vadd.f32 %v3031, %v233
    %v3033 = vsel %vm153, %v3032, -inf
    %3034 = vmax.xlane.f32.xlu0 %v3033
    %v3035 = vpop.xlane.xlu0 %3034
    %v3036 = vsub.f32 %v3032, %v3035
    %v3037 = vmul.f32 %v3036, 1.442695
    %v3038 = vpow.pop %v3037
    %v3039 = vsel %vm153, %v3038, 0.0
    %3040 = vadd.xlane.f32.xlu0 %v3039
    %v3041 = vpop.xlane.xlu0 %3040
    %v3042 = vrcp.pop %v3041
    %v3043 = vmul.f32 %v3038, %v3042
    %3044 = vrot.lane.b32.xlu0 %v2225, 40
    %v3045 = vpop.permute.xlu0 %3044
    %v3048 = vsel %vm153, %v3043, 0
    %3050 = vmatprep.subr.mxu0 0.0
    %3051 = vmatpush1.msra.mxu0 %v3045
    %3052 = vmatprep.subr.mxu0 0.0
    %3053 = vmatpush1.msra.mxu0 0.0
    %3054 = vmatprep.subr.mxu0 0.0
    %3055 = vmatpush1.msra.mxu0 0.0
    %3056 = vmatprep.subr.mxu0 0.0
    %3057 = vmatpush1.msra.mxu0 0.0
    %3058 = vmatprep.subr.mxu0 0.0
    %3059 = vmatpush1.msra.mxu0 0.0
    %3060 = vmatprep.subr.mxu0 0.0
    %3061 = vmatpush1.msra.mxu0 0.0
    %3062 = vmatprep.subr.mxu0 0.0
    %3063 = vmatpush1.msra.mxu0 0.0
    %3064 = vmatprep.subr.mxu0 0.0
    %3065 = vmatpush1.msra.mxu0 0.0
    %3066 = vmatprep.subr.mxu0 0.0
    %3067 = vmatpush1.msra.mxu0 0.0
    %3068 = vmatprep.subr.mxu0 0.0
    %3069 = vmatpush1.msra.mxu0 0.0
    %3070 = vmatprep.subr.mxu0 0.0
    %3071 = vmatpush1.msra.mxu0 0.0
    %3072 = vmatprep.subr.mxu0 0.0
    %3073 = vmatpush1.msra.mxu0 0.0
    %3074 = vmatprep.subr.mxu0 0.0
    %3075 = vmatpush1.msra.mxu0 0.0
    %3076 = vmatprep.subr.mxu0 0.0
    %3077 = vmatpush1.msra.mxu0 0.0
    %3078 = vmatprep.subr.mxu0 0.0
    %3079 = vmatpush1.msra.mxu0 0.0
    %3080 = vmatprep.subr.mxu0 0.0
    %3081 = vmatpush1.msra.mxu0 0.0
    %3082 = vmatprep.subr.mxu0 0.0
    %3083 = vmatpush1.msra.mxu0 0.0
    %3084 = vmatprep.subr.mxu0 0.0
    %3085 = vmatpush1.msra.mxu0 0.0
    %3086 = vmatprep.subr.mxu0 0.0
    %3087 = vmatpush1.msra.mxu0 0.0
    %3088 = vmatprep.subr.mxu0 0.0
    %3089 = vmatpush1.msra.mxu0 0.0
    %3090 = vmatprep.subr.mxu0 0.0
    %3091 = vmatpush1.msra.mxu0 0.0
    %3092 = vmatprep.subr.mxu0 0.0
    %3093 = vmatpush1.msra.mxu0 0.0
    %3094 = vmatprep.subr.mxu0 0.0
    %3095 = vmatpush1.msra.mxu0 0.0
    %3096 = vmatprep.subr.mxu0 0.0
    %3097 = vmatpush1.msra.mxu0 0.0
    %3098 = vmatprep.subr.mxu0 0.0
    %3099 = vmatpush1.msra.mxu0 0.0
    %3100 = vmatprep.subr.mxu0 0.0
    %3101 = vmatpush1.msra.mxu0 0.0
    %3102 = vmatprep.subr.mxu0 0.0
    %3103 = vmatpush1.msra.mxu0 0.0
    %3104 = vmatprep.subr.mxu0 0.0
    %3105 = vmatpush1.msra.mxu0 0.0
    %3106 = vmatprep.subr.mxu0 0.0
    %3107 = vmatpush1.msra.mxu0 0.0
    %3108 = vmatprep.subr.mxu0 0.0
    %3109 = vmatpush1.msra.mxu0 0.0
    %3110 = vmatprep.subr.mxu0 0.0
    %3111 = vmatpush1.msra.mxu0 0.0
    %3112 = vmatprep.subr.mxu0 0.0
    %3113 = vmatpush1.msra.mxu0 0.0
    %3114 = vmatprep.mubr.f32.mxu0 0.0
    %3115 = vmatmul.mubr.f32.gmra.mrb[0].mxu0 %v3048
    %v3116 = vpop.f32.mrb[0].mxu0
    %v3117 = vadd.f32 0.0, %v3116
    %v3118 = vpop.f32.mrb[0].mxu0
    %3119 = vdwg.mxu0
    %v3121 = vsel %vm153, %v3117, 0
    %3123 = vmatprep.subr.mxu0 0.0
    %3124 = vmatpush1.msra.mxu0 %v2144
    %3125 = vmatprep.subr.mxu0 0.0
    %3126 = vmatpush1.msra.mxu0 0.0
    %3127 = vmatprep.subr.mxu0 0.0
    %3128 = vmatpush1.msra.mxu0 0.0
    %3129 = vmatprep.subr.mxu0 0.0
    %3130 = vmatpush1.msra.mxu0 0.0
    %3131 = vmatprep.subr.mxu0 0.0
    %3132 = vmatpush1.msra.mxu0 0.0
    %3133 = vmatprep.subr.mxu0 0.0
    %3134 = vmatpush1.msra.mxu0 0.0
    %3135 = vmatprep.subr.mxu0 0.0
    %3136 = vmatpush1.msra.mxu0 0.0
    %3137 = vmatprep.subr.mxu0 0.0
    %3138 = vmatpush1.msra.mxu0 0.0
    %3139 = vmatprep.subr.mxu0 0.0
    %3140 = vmatpush1.msra.mxu0 0.0
    %3141 = vmatprep.subr.mxu0 0.0
    %3142 = vmatpush1.msra.mxu0 0.0
    %3143 = vmatprep.subr.mxu0 0.0
    %3144 = vmatpush1.msra.mxu0 0.0
    %3145 = vmatprep.subr.mxu0 0.0
    %3146 = vmatpush1.msra.mxu0 0.0
    %3147 = vmatprep.subr.mxu0 0.0
    %3148 = vmatpush1.msra.mxu0 0.0
    %3149 = vmatprep.subr.mxu0 0.0
    %3150 = vmatpush1.msra.mxu0 0.0
    %3151 = vmatprep.subr.mxu0 0.0
    %3152 = vmatpush1.msra.mxu0 0.0
    %3153 = vmatprep.subr.mxu0 0.0
    %3154 = vmatpush1.msra.mxu0 0.0
    %3155 = vmatprep.subr.mxu0 0.0
    %3156 = vmatpush1.msra.mxu0 0.0
    %3157 = vmatprep.subr.mxu0 0.0
    %3158 = vmatpush1.msra.mxu0 0.0
    %3159 = vmatprep.subr.mxu0 0.0
    %3160 = vmatpush1.msra.mxu0 0.0
    %3161 = vmatprep.subr.mxu0 0.0
    %3162 = vmatpush1.msra.mxu0 0.0
    %3163 = vmatprep.subr.mxu0 0.0
    %3164 = vmatpush1.msra.mxu0 0.0
    %3165 = vmatprep.subr.mxu0 0.0
    %3166 = vmatpush1.msra.mxu0 0.0
    %3167 = vmatprep.subr.mxu0 0.0
    %3168 = vmatpush1.msra.mxu0 0.0
    %3169 = vmatprep.subr.mxu0 0.0
    %3170 = vmatpush1.msra.mxu0 0.0
    %3171 = vmatprep.subr.mxu0 0.0
    %3172 = vmatpush1.msra.mxu0 0.0
    %3173 = vmatprep.subr.mxu0 0.0
    %3174 = vmatpush1.msra.mxu0 0.0
    %3175 = vmatprep.subr.mxu0 0.0
    %3176 = vmatpush1.msra.mxu0 0.0
    %3177 = vmatprep.subr.mxu0 0.0
    %3178 = vmatpush1.msra.mxu0 0.0
    %3179 = vmatprep.subr.mxu0 0.0
    %3180 = vmatpush1.msra.mxu0 0.0
    %3181 = vmatprep.subr.mxu0 0.0
    %3182 = vmatpush1.msra.mxu0 0.0
    %3183 = vmatprep.subr.mxu0 0.0
    %3184 = vmatpush1.msra.mxu0 0.0
    %3185 = vmatprep.subr.mxu0 0.0
    %3186 = vmatpush1.msra.mxu0 0.0
    %3187 = vmatprep.mubr.f32.mxu0 0.0
    %3188 = vmatmul.mubr.f32.gmra.mrb[0].mxu0 %v3121
    %v3189 = vpop.f32.mrb[0].mxu0
    %v3190 = vadd.f32 0.0, %v3189
    %v3191 = vpop.f32.mrb[0].mxu0
    %3192 = vdwg.mxu0
    %v3193 = vadd.f32 %v2952, %v3190
    %3195 = vrot.lane.b32.xlu0 %v2230, 96
    %v3196 = vpop.permute.xlu0 %3195
    %v3197 = vsel %vm153, %v2230, 0
    %v3199 = vsel %vm153, %v3196, 0
    %3201 = vmatprep.subr.mxu0 0.0
    %3202 = vmatpush1.xpose.msra.mxu0 %v3199
    %3203 = vmatprep.subr.mxu0 0.0
    %3204 = vmatpush1.xpose.msra.mxu0 0.0
    %3205 = vmatprep.subr.mxu0 0.0
    %3206 = vmatpush1.xpose.msra.mxu0 0.0
    %3207 = vmatprep.subr.mxu0 0.0
    %3208 = vmatpush1.xpose.msra.mxu0 0.0
    %3209 = vmatprep.subr.mxu0 0.0
    %3210 = vmatpush1.xpose.msra.mxu0 0.0
    %3211 = vmatprep.subr.mxu0 0.0
    %3212 = vmatpush1.xpose.msra.mxu0 0.0
    %3213 = vmatprep.subr.mxu0 0.0
    %3214 = vmatpush1.xpose.msra.mxu0 0.0
    %3215 = vmatprep.subr.mxu0 0.0
    %3216 = vmatpush1.xpose.msra.mxu0 0.0
    %3217 = vmatprep.subr.mxu0 0.0
    %3218 = vmatpush1.xpose.msra.mxu0 0.0
    %3219 = vmatprep.subr.mxu0 0.0
    %3220 = vmatpush1.xpose.msra.mxu0 0.0
    %3221 = vmatprep.subr.mxu0 0.0
    %3222 = vmatpush1.xpose.msra.mxu0 0.0
    %3223 = vmatprep.subr.mxu0 0.0
    %3224 = vmatpush1.xpose.msra.mxu0 0.0
    %3225 = vmatprep.subr.mxu0 0.0
    %3226 = vmatpush1.xpose.msra.mxu0 0.0
    %3227 = vmatprep.subr.mxu0 0.0
    %3228 = vmatpush1.xpose.msra.mxu0 0.0
    %3229 = vmatprep.subr.mxu0 0.0
    %3230 = vmatpush1.xpose.msra.mxu0 0.0
    %3231 = vmatprep.subr.mxu0 0.0
    %3232 = vmatpush1.xpose.msra.mxu0 0.0
    %3233 = vmatprep.subr.mxu0 0.0
    %3234 = vmatpush1.xpose.msra.mxu0 0.0
    %3235 = vmatprep.subr.mxu0 0.0
    %3236 = vmatpush1.xpose.msra.mxu0 0.0
    %3237 = vmatprep.subr.mxu0 0.0
    %3238 = vmatpush1.xpose.msra.mxu0 0.0
    %3239 = vmatprep.subr.mxu0 0.0
    %3240 = vmatpush1.xpose.msra.mxu0 0.0
    %3241 = vmatprep.subr.mxu0 0.0
    %3242 = vmatpush1.xpose.msra.mxu0 0.0
    %3243 = vmatprep.subr.mxu0 0.0
    %3244 = vmatpush1.xpose.msra.mxu0 0.0
    %3245 = vmatprep.subr.mxu0 0.0
    %3246 = vmatpush1.xpose.msra.mxu0 0.0
    %3247 = vmatprep.subr.mxu0 0.0
    %3248 = vmatpush1.xpose.msra.mxu0 0.0
    %3249 = vmatprep.subr.mxu0 0.0
    %3250 = vmatpush1.xpose.msra.mxu0 0.0
    %3251 = vmatprep.subr.mxu0 0.0
    %3252 = vmatpush1.xpose.msra.mxu0 0.0
    %3253 = vmatprep.subr.mxu0 0.0
    %3254 = vmatpush1.xpose.msra.mxu0 0.0
    %3255 = vmatprep.subr.mxu0 0.0
    %3256 = vmatpush1.xpose.msra.mxu0 0.0
    %3257 = vmatprep.subr.mxu0 0.0
    %3258 = vmatpush1.xpose.msra.mxu0 0.0
    %3259 = vmatprep.subr.mxu0 0.0
    %3260 = vmatpush1.xpose.msra.mxu0 0.0
    %3261 = vmatprep.subr.mxu0 0.0
    %3262 = vmatpush1.xpose.msra.mxu0 0.0
    %3263 = vmatprep.subr.mxu0 0.0
    %3264 = vmatpush1.xpose.msra.mxu0 0.0
    %3265 = vmatprep.mubr.f32.mxu0 0.0
    %3266 = vmatmul.mubr.f32.gmra.mrb[0].mxu0 %v3197
    %v3267 = vpop.f32.mrb[0].mxu0
    %v3268 = vadd.f32 0.0, %v3267
    %v3269 = vpop.f32.mrb[0].mxu0
    %3270 = vdwg.mxu0
    %v3271 = vmul.f32 %v3268, 0.35355338
    %v3272 = vadd.f32 %v3271, %v1200
    %v3273 = vsel %vm153, %v3272, -inf
    %3274 = vmax.xlane.f32.xlu0 %v3273
    %v3275 = vpop.xlane.xlu0 %3274
    %v3276 = vsub.f32 %v3272, %v3275
    %v3277 = vmul.f32 %v3276, 1.442695
    %v3278 = vpow.pop %v3277
    %v3279 = vsel %vm153, %v3278, 0.0
    %3280 = vadd.xlane.f32.xlu0 %v3279
    %v3281 = vpop.xlane.xlu0 %3280
    %v3282 = vrcp.pop %v3281
    %v3283 = vmul.f32 %v3278, %v3282
    %3284 = vrot.lane.b32.xlu0 %v2230, 64
    %v3285 = vpop.permute.xlu0 %3284
    %v3288 = vsel %vm153, %v3283, 0
    %3290 = vmatprep.subr.mxu0 0.0
    %3291 = vmatpush1.msra.mxu0 %v3285
    %3292 = vmatprep.subr.mxu0 0.0
    %3293 = vmatpush1.msra.mxu0 0.0
    %3294 = vmatprep.subr.mxu0 0.0
    %3295 = vmatpush1.msra.mxu0 0.0
    %3296 = vmatprep.subr.mxu0 0.0
    %3297 = vmatpush1.msra.mxu0 0.0
    %3298 = vmatprep.subr.mxu0 0.0
    %3299 = vmatpush1.msra.mxu0 0.0
    %3300 = vmatprep.subr.mxu0 0.0
    %3301 = vmatpush1.msra.mxu0 0.0
    %3302 = vmatprep.subr.mxu0 0.0
    %3303 = vmatpush1.msra.mxu0 0.0
    %3304 = vmatprep.subr.mxu0 0.0
    %3305 = vmatpush1.msra.mxu0 0.0
    %3306 = vmatprep.subr.mxu0 0.0
    %3307 = vmatpush1.msra.mxu0 0.0
    %3308 = vmatprep.subr.mxu0 0.0
    %3309 = vmatpush1.msra.mxu0 0.0
    %3310 = vmatprep.subr.mxu0 0.0
    %3311 = vmatpush1.msra.mxu0 0.0
    %3312 = vmatprep.subr.mxu0 0.0
    %3313 = vmatpush1.msra.mxu0 0.0
    %3314 = vmatprep.subr.mxu0 0.0
    %3315 = vmatpush1.msra.mxu0 0.0
    %3316 = vmatprep.subr.mxu0 0.0
    %3317 = vmatpush1.msra.mxu0 0.0
    %3318 = vmatprep.subr.mxu0 0.0
    %3319 = vmatpush1.msra.mxu0 0.0
    %3320 = vmatprep.subr.mxu0 0.0
    %3321 = vmatpush1.msra.mxu0 0.0
    %3322 = vmatprep.subr.mxu0 0.0
    %3323 = vmatpush1.msra.mxu0 0.0
    %3324 = vmatprep.subr.mxu0 0.0
    %3325 = vmatpush1.msra.mxu0 0.0
    %3326 = vmatprep.subr.mxu0 0.0
    %3327 = vmatpush1.msra.mxu0 0.0
    %3328 = vmatprep.subr.mxu0 0.0
    %3329 = vmatpush1.msra.mxu0 0.0
    %3330 = vmatprep.subr.mxu0 0.0
    %3331 = vmatpush1.msra.mxu0 0.0
    %3332 = vmatprep.subr.mxu0 0.0
    %3333 = vmatpush1.msra.mxu0 0.0
    %3334 = vmatprep.subr.mxu0 0.0
    %3335 = vmatpush1.msra.mxu0 0.0
    %3336 = vmatprep.subr.mxu0 0.0
    %3337 = vmatpush1.msra.mxu0 0.0
    %3338 = vmatprep.subr.mxu0 0.0
    %3339 = vmatpush1.msra.mxu0 0.0
    %3340 = vmatprep.subr.mxu0 0.0
    %3341 = vmatpush1.msra.mxu0 0.0
    %3342 = vmatprep.subr.mxu0 0.0
    %3343 = vmatpush1.msra.mxu0 0.0
    %3344 = vmatprep.subr.mxu0 0.0
    %3345 = vmatpush1.msra.mxu0 0.0
    %3346 = vmatprep.subr.mxu0 0.0
    %3347 = vmatpush1.msra.mxu0 0.0
    %3348 = vmatprep.subr.mxu0 0.0
    %3349 = vmatpush1.msra.mxu0 0.0
    %3350 = vmatprep.subr.mxu0 0.0
    %3351 = vmatpush1.msra.mxu0 0.0
    %3352 = vmatprep.subr.mxu0 0.0
    %3353 = vmatpush1.msra.mxu0 0.0
    %3354 = vmatprep.mubr.f32.mxu0 0.0
    %3355 = vmatmul.mubr.f32.gmra.mrb[0].mxu0 %v3288
    %v3356 = vpop.f32.mrb[0].mxu0
    %v3357 = vadd.f32 0.0, %v3356
    %v3358 = vpop.f32.mrb[0].mxu0
    %3359 = vdwg.mxu0
    %3360 = vrot.lane.b32.xlu0 %v2230, 120
    %v3361 = vpop.permute.xlu0 %3360
    %3362 = vrot.lane.b32.xlu0 %v2230, 88
    %v3363 = vpop.permute.xlu0 %3362
    %v3364 = vsel %vm153, %v3361, 0
    %v3366 = vsel %vm153, %v3363, 0
    %3368 = vmatprep.subr.mxu0 0.0
    %3369 = vmatpush1.xpose.msra.mxu0 %v3366
    %3370 = vmatprep.subr.mxu0 0.0
    %3371 = vmatpush1.xpose.msra.mxu0 0.0
    %3372 = vmatprep.subr.mxu0 0.0
    %3373 = vmatpush1.xpose.msra.mxu0 0.0
    %3374 = vmatprep.subr.mxu0 0.0
    %3375 = vmatpush1.xpose.msra.mxu0 0.0
    %3376 = vmatprep.subr.mxu0 0.0
    %3377 = vmatpush1.xpose.msra.mxu0 0.0
    %3378 = vmatprep.subr.mxu0 0.0
    %3379 = vmatpush1.xpose.msra.mxu0 0.0
    %3380 = vmatprep.subr.mxu0 0.0
    %3381 = vmatpush1.xpose.msra.mxu0 0.0
    %3382 = vmatprep.subr.mxu0 0.0
    %3383 = vmatpush1.xpose.msra.mxu0 0.0
    %3384 = vmatprep.subr.mxu0 0.0
    %3385 = vmatpush1.xpose.msra.mxu0 0.0
    %3386 = vmatprep.subr.mxu0 0.0
    %3387 = vmatpush1.xpose.msra.mxu0 0.0
    %3388 = vmatprep.subr.mxu0 0.0
    %3389 = vmatpush1.xpose.msra.mxu0 0.0
    %3390 = vmatprep.subr.mxu0 0.0
    %3391 = vmatpush1.xpose.msra.mxu0 0.0
    %3392 = vmatprep.subr.mxu0 0.0
    %3393 = vmatpush1.xpose.msra.mxu0 0.0
    %3394 = vmatprep.subr.mxu0 0.0
    %3395 = vmatpush1.xpose.msra.mxu0 0.0
    %3396 = vmatprep.subr.mxu0 0.0
    %3397 = vmatpush1.xpose.msra.mxu0 0.0
    %3398 = vmatprep.subr.mxu0 0.0
    %3399 = vmatpush1.xpose.msra.mxu0 0.0
    %3400 = vmatprep.subr.mxu0 0.0
    %3401 = vmatpush1.xpose.msra.mxu0 0.0
    %3402 = vmatprep.subr.mxu0 0.0
    %3403 = vmatpush1.xpose.msra.mxu0 0.0
    %3404 = vmatprep.subr.mxu0 0.0
    %3405 = vmatpush1.xpose.msra.mxu0 0.0
    %3406 = vmatprep.subr.mxu0 0.0
    %3407 = vmatpush1.xpose.msra.mxu0 0.0
    %3408 = vmatprep.subr.mxu0 0.0
    %3409 = vmatpush1.xpose.msra.mxu0 0.0
    %3410 = vmatprep.subr.mxu0 0.0
    %3411 = vmatpush1.xpose.msra.mxu0 0.0
    %3412 = vmatprep.subr.mxu0 0.0
    %3413 = vmatpush1.xpose.msra.mxu0 0.0
    %3414 = vmatprep.subr.mxu0 0.0
    %3415 = vmatpush1.xpose.msra.mxu0 0.0
    %3416 = vmatprep.subr.mxu0 0.0
    %3417 = vmatpush1.xpose.msra.mxu0 0.0
    %3418 = vmatprep.subr.mxu0 0.0
    %3419 = vmatpush1.xpose.msra.mxu0 0.0
    %3420 = vmatprep.subr.mxu0 0.0
    %3421 = vmatpush1.xpose.msra.mxu0 0.0
    %3422 = vmatprep.subr.mxu0 0.0
    %3423 = vmatpush1.xpose.msra.mxu0 0.0
    %3424 = vmatprep.subr.mxu0 0.0
    %3425 = vmatpush1.xpose.msra.mxu0 0.0
    %3426 = vmatprep.subr.mxu0 0.0
    %3427 = vmatpush1.xpose.msra.mxu0 0.0
    %3428 = vmatprep.subr.mxu0 0.0
    %3429 = vmatpush1.xpose.msra.mxu0 0.0
    %3430 = vmatprep.subr.mxu0 0.0
    %3431 = vmatpush1.xpose.msra.mxu0 0.0
    %3432 = vmatprep.mubr.f32.mxu0 0.0
    %3433 = vmatmul.mubr.f32.gmra.mrb[0].mxu0 %v3364
    %v3434 = vpop.f32.mrb[0].mxu0
    %v3435 = vadd.f32 0.0, %v3434
    %v3436 = vpop.f32.mrb[0].mxu0
    %3437 = vdwg.mxu0
    %v3438 = vmul.f32 %v3435, 0.35355338
    %v3439 = vadd.f32 %v3438, %v1200
    %v3440 = vsel %vm153, %v3439, -inf
    %3441 = vmax.xlane.f32.xlu0 %v3440
    %v3442 = vpop.xlane.xlu0 %3441
    %v3443 = vsub.f32 %v3439, %v3442
    %v3444 = vmul.f32 %v3443, 1.442695
    %v3445 = vpow.pop %v3444
    %v3446 = vsel %vm153, %v3445, 0.0
    %3447 = vadd.xlane.f32.xlu0 %v3446
    %v3448 = vpop.xlane.xlu0 %3447
    %v3449 = vrcp.pop %v3448
    %v3450 = vmul.f32 %v3445, %v3449
    %3451 = vrot.lane.b32.xlu0 %v2230, 56
    %v3452 = vpop.permute.xlu0 %3451
    %v3455 = vsel %vm153, %v3450, 0
    %3457 = vmatprep.subr.mxu0 0.0
    %3458 = vmatpush1.msra.mxu0 %v3452
    %3459 = vmatprep.subr.mxu0 0.0
    %3460 = vmatpush1.msra.mxu0 0.0
    %3461 = vmatprep.subr.mxu0 0.0
    %3462 = vmatpush1.msra.mxu0 0.0
    %3463 = vmatprep.subr.mxu0 0.0
    %3464 = vmatpush1.msra.mxu0 0.0
    %3465 = vmatprep.subr.mxu0 0.0
    %3466 = vmatpush1.msra.mxu0 0.0
    %3467 = vmatprep.subr.mxu0 0.0
    %3468 = vmatpush1.msra.mxu0 0.0
    %3469 = vmatprep.subr.mxu0 0.0
    %3470 = vmatpush1.msra.mxu0 0.0
    %3471 = vmatprep.subr.mxu0 0.0
    %3472 = vmatpush1.msra.mxu0 0.0
    %3473 = vmatprep.subr.mxu0 0.0
    %3474 = vmatpush1.msra.mxu0 0.0
    %3475 = vmatprep.subr.mxu0 0.0
    %3476 = vmatpush1.msra.mxu0 0.0
    %3477 = vmatprep.subr.mxu0 0.0
    %3478 = vmatpush1.msra.mxu0 0.0
    %3479 = vmatprep.subr.mxu0 0.0
    %3480 = vmatpush1.msra.mxu0 0.0
    %3481 = vmatprep.subr.mxu0 0.0
    %3482 = vmatpush1.msra.mxu0 0.0
    %3483 = vmatprep.subr.mxu0 0.0
    %3484 = vmatpush1.msra.mxu0 0.0
    %3485 = vmatprep.subr.mxu0 0.0
    %3486 = vmatpush1.msra.mxu0 0.0
    %3487 = vmatprep.subr.mxu0 0.0
    %3488 = vmatpush1.msra.mxu0 0.0
    %3489 = vmatprep.subr.mxu0 0.0
    %3490 = vmatpush1.msra.mxu0 0.0
    %3491 = vmatprep.subr.mxu0 0.0
    %3492 = vmatpush1.msra.mxu0 0.0
    %3493 = vmatprep.subr.mxu0 0.0
    %3494 = vmatpush1.msra.mxu0 0.0
    %3495 = vmatprep.subr.mxu0 0.0
    %3496 = vmatpush1.msra.mxu0 0.0
    %3497 = vmatprep.subr.mxu0 0.0
    %3498 = vmatpush1.msra.mxu0 0.0
    %3499 = vmatprep.subr.mxu0 0.0
    %3500 = vmatpush1.msra.mxu0 0.0
    %3501 = vmatprep.subr.mxu0 0.0
    %3502 = vmatpush1.msra.mxu0 0.0
    %3503 = vmatprep.subr.mxu0 0.0
    %3504 = vmatpush1.msra.mxu0 0.0
    %3505 = vmatprep.subr.mxu0 0.0
    %3506 = vmatpush1.msra.mxu0 0.0
    %3507 = vmatprep.subr.mxu0 0.0
    %3508 = vmatpush1.msra.mxu0 0.0
    %3509 = vmatprep.subr.mxu0 0.0
    %3510 = vmatpush1.msra.mxu0 0.0
    %3511 = vmatprep.subr.mxu0 0.0
    %3512 = vmatpush1.msra.mxu0 0.0
    %3513 = vmatprep.subr.mxu0 0.0
    %3514 = vmatpush1.msra.mxu0 0.0
    %3515 = vmatprep.subr.mxu0 0.0
    %3516 = vmatpush1.msra.mxu0 0.0
    %3517 = vmatprep.subr.mxu0 0.0
    %3518 = vmatpush1.msra.mxu0 0.0
    %3519 = vmatprep.subr.mxu0 0.0
    %3520 = vmatpush1.msra.mxu0 0.0
    %3521 = vmatprep.mubr.f32.mxu0 0.0
    %3522 = vmatmul.mubr.f32.gmra.mrb[0].mxu0 %v3455
    %v3523 = vpop.f32.mrb[0].mxu0
    %v3524 = vadd.f32 0.0, %v3523
    %v3525 = vpop.f32.mrb[0].mxu0
    %3526 = vdwg.mxu0
    %v3528 = vsel %vm153, %v3524, 0
    %3530 = vmatprep.subr.mxu0 0.0
    %3531 = vmatpush1.msra.mxu0 %v2142
    %3532 = vmatprep.subr.mxu0 0.0
    %3533 = vmatpush1.msra.mxu0 0.0
    %3534 = vmatprep.subr.mxu0 0.0
    %3535 = vmatpush1.msra.mxu0 0.0
    %3536 = vmatprep.subr.mxu0 0.0
    %3537 = vmatpush1.msra.mxu0 0.0
    %3538 = vmatprep.subr.mxu0 0.0
    %3539 = vmatpush1.msra.mxu0 0.0
    %3540 = vmatprep.subr.mxu0 0.0
    %3541 = vmatpush1.msra.mxu0 0.0
    %3542 = vmatprep.subr.mxu0 0.0
    %3543 = vmatpush1.msra.mxu0 0.0
    %3544 = vmatprep.subr.mxu0 0.0
    %3545 = vmatpush1.msra.mxu0 0.0
    %3546 = vmatprep.subr.mxu0 0.0
    %3547 = vmatpush1.msra.mxu0 0.0
    %3548 = vmatprep.subr.mxu0 0.0
    %3549 = vmatpush1.msra.mxu0 0.0
    %3550 = vmatprep.subr.mxu0 0.0
    %3551 = vmatpush1.msra.mxu0 0.0
    %3552 = vmatprep.subr.mxu0 0.0
    %3553 = vmatpush1.msra.mxu0 0.0
    %3554 = vmatprep.subr.mxu0 0.0
    %3555 = vmatpush1.msra.mxu0 0.0
    %3556 = vmatprep.subr.mxu0 0.0
    %3557 = vmatpush1.msra.mxu0 0.0
    %3558 = vmatprep.subr.mxu0 0.0
    %3559 = vmatpush1.msra.mxu0 0.0
    %3560 = vmatprep.subr.mxu0 0.0
    %3561 = vmatpush1.msra.mxu0 0.0
    %3562 = vmatprep.subr.mxu0 0.0
    %3563 = vmatpush1.msra.mxu0 0.0
    %3564 = vmatprep.subr.mxu0 0.0
    %3565 = vmatpush1.msra.mxu0 0.0
    %3566 = vmatprep.subr.mxu0 0.0
    %3567 = vmatpush1.msra.mxu0 0.0
    %3568 = vmatprep.subr.mxu0 0.0
    %3569 = vmatpush1.msra.mxu0 0.0
    %3570 = vmatprep.subr.mxu0 0.0
    %3571 = vmatpush1.msra.mxu0 0.0
    %3572 = vmatprep.subr.mxu0 0.0
    %3573 = vmatpush1.msra.mxu0 0.0
    %3574 = vmatprep.subr.mxu0 0.0
    %3575 = vmatpush1.msra.mxu0 0.0
    %3576 = vmatprep.subr.mxu0 0.0
    %3577 = vmatpush1.msra.mxu0 0.0
    %3578 = vmatprep.subr.mxu0 0.0
    %3579 = vmatpush1.msra.mxu0 0.0
    %3580 = vmatprep.subr.mxu0 0.0
    %3581 = vmatpush1.msra.mxu0 0.0
    %3582 = vmatprep.subr.mxu0 0.0
    %3583 = vmatpush1.msra.mxu0 0.0
    %3584 = vmatprep.subr.mxu0 0.0
    %3585 = vmatpush1.msra.mxu0 0.0
    %3586 = vmatprep.subr.mxu0 0.0
    %3587 = vmatpush1.msra.mxu0 0.0
    %3588 = vmatprep.subr.mxu0 0.0
    %3589 = vmatpush1.msra.mxu0 0.0
    %3590 = vmatprep.subr.mxu0 0.0
    %3591 = vmatpush1.msra.mxu0 0.0
    %3592 = vmatprep.subr.mxu0 0.0
    %3593 = vmatpush1.msra.mxu0 0.0
    %3594 = vmatprep.mubr.f32.mxu0 0.0
    %3595 = vmatmul.mubr.f32.gmra.mrb[0].mxu0 %v3528
    %v3596 = vpop.f32.mrb[0].mxu0
    %v3597 = vadd.f32 0.0, %v3596
    %v3598 = vpop.f32.mrb[0].mxu0
    %3599 = vdwg.mxu0
    %v3601 = vsel %vm153, %v3357, 0
    %3603 = vmatprep.subr.mxu0 0.0
    %3604 = vmatpush1.msra.mxu0 %v2141
    %3605 = vmatprep.subr.mxu0 0.0
    %3606 = vmatpush1.msra.mxu0 0.0
    %3607 = vmatprep.subr.mxu0 0.0
    %3608 = vmatpush1.msra.mxu0 0.0
    %3609 = vmatprep.subr.mxu0 0.0
    %3610 = vmatpush1.msra.mxu0 0.0
    %3611 = vmatprep.subr.mxu0 0.0
    %3612 = vmatpush1.msra.mxu0 0.0
    %3613 = vmatprep.subr.mxu0 0.0
    %3614 = vmatpush1.msra.mxu0 0.0
    %3615 = vmatprep.subr.mxu0 0.0
    %3616 = vmatpush1.msra.mxu0 0.0
    %3617 = vmatprep.subr.mxu0 0.0
    %3618 = vmatpush1.msra.mxu0 0.0
    %3619 = vmatprep.subr.mxu0 0.0
    %3620 = vmatpush1.msra.mxu0 0.0
    %3621 = vmatprep.subr.mxu0 0.0
    %3622 = vmatpush1.msra.mxu0 0.0
    %3623 = vmatprep.subr.mxu0 0.0
    %3624 = vmatpush1.msra.mxu0 0.0
    %3625 = vmatprep.subr.mxu0 0.0
    %3626 = vmatpush1.msra.mxu0 0.0
    %3627 = vmatprep.subr.mxu0 0.0
    %3628 = vmatpush1.msra.mxu0 0.0
    %3629 = vmatprep.subr.mxu0 0.0
    %3630 = vmatpush1.msra.mxu0 0.0
    %3631 = vmatprep.subr.mxu0 0.0
    %3632 = vmatpush1.msra.mxu0 0.0
    %3633 = vmatprep.subr.mxu0 0.0
    %3634 = vmatpush1.msra.mxu0 0.0
    %3635 = vmatprep.subr.mxu0 0.0
    %3636 = vmatpush1.msra.mxu0 0.0
    %3637 = vmatprep.subr.mxu0 0.0
    %3638 = vmatpush1.msra.mxu0 0.0
    %3639 = vmatprep.subr.mxu0 0.0
    %3640 = vmatpush1.msra.mxu0 0.0
    %3641 = vmatprep.subr.mxu0 0.0
    %3642 = vmatpush1.msra.mxu0 0.0
    %3643 = vmatprep.subr.mxu0 0.0
    %3644 = vmatpush1.msra.mxu0 0.0
    %3645 = vmatprep.subr.mxu0 0.0
    %3646 = vmatpush1.msra.mxu0 0.0
    %3647 = vmatprep.subr.mxu0 0.0
    %3648 = vmatpush1.msra.mxu0 0.0
    %3649 = vmatprep.subr.mxu0 0.0
    %3650 = vmatpush1.msra.mxu0 0.0
    %3651 = vmatprep.subr.mxu0 0.0
    %3652 = vmatpush1.msra.mxu0 0.0
    %3653 = vmatprep.subr.mxu0 0.0
    %3654 = vmatpush1.msra.mxu0 0.0
    %3655 = vmatprep.subr.mxu0 0.0
    %3656 = vmatpush1.msra.mxu0 0.0
    %3657 = vmatprep.subr.mxu0 0.0
    %3658 = vmatpush1.msra.mxu0 0.0
    %3659 = vmatprep.subr.mxu0 0.0
    %3660 = vmatpush1.msra.mxu0 0.0
    %3661 = vmatprep.subr.mxu0 0.0
    %3662 = vmatpush1.msra.mxu0 0.0
    %3663 = vmatprep.subr.mxu0 0.0
    %3664 = vmatpush1.msra.mxu0 0.0
    %3665 = vmatprep.subr.mxu0 0.0
    %3666 = vmatpush1.msra.mxu0 0.0
    %3667 = vmatprep.mubr.f32.mxu0 0.0
    %3668 = vmatmul.mubr.f32.gmra.mrb[0].mxu0 %v3601
    %v3669 = vpop.f32.mrb[0].mxu0
    %v3670 = vadd.f32 %v3597, %v3669
    %v3671 = vpop.f32.mrb[0].mxu0
    %3672 = vdwg.mxu0
    %3673 = vrot.lane.b32.xlu0 %v2230, 112
    %v3674 = vpop.permute.xlu0 %3673
    %3675 = vrot.lane.b32.xlu0 %v2230, 80
    %v3676 = vpop.permute.xlu0 %3675
    %v3677 = vsel %vm153, %v3674, 0
    %v3679 = vsel %vm153, %v3676, 0
    %3681 = vmatprep.subr.mxu0 0.0
    %3682 = vmatpush1.xpose.msra.mxu0 %v3679
    %3683 = vmatprep.subr.mxu0 0.0
    %3684 = vmatpush1.xpose.msra.mxu0 0.0
    %3685 = vmatprep.subr.mxu0 0.0
    %3686 = vmatpush1.xpose.msra.mxu0 0.0
    %3687 = vmatprep.subr.mxu0 0.0
    %3688 = vmatpush1.xpose.msra.mxu0 0.0
    %3689 = vmatprep.subr.mxu0 0.0
    %3690 = vmatpush1.xpose.msra.mxu0 0.0
    %3691 = vmatprep.subr.mxu0 0.0
    %3692 = vmatpush1.xpose.msra.mxu0 0.0
    %3693 = vmatprep.subr.mxu0 0.0
    %3694 = vmatpush1.xpose.msra.mxu0 0.0
    %3695 = vmatprep.subr.mxu0 0.0
    %3696 = vmatpush1.xpose.msra.mxu0 0.0
    %3697 = vmatprep.subr.mxu0 0.0
    %3698 = vmatpush1.xpose.msra.mxu0 0.0
    %3699 = vmatprep.subr.mxu0 0.0
    %3700 = vmatpush1.xpose.msra.mxu0 0.0
    %3701 = vmatprep.subr.mxu0 0.0
    %3702 = vmatpush1.xpose.msra.mxu0 0.0
    %3703 = vmatprep.subr.mxu0 0.0
    %3704 = vmatpush1.xpose.msra.mxu0 0.0
    %3705 = vmatprep.subr.mxu0 0.0
    %3706 = vmatpush1.xpose.msra.mxu0 0.0
    %3707 = vmatprep.subr.mxu0 0.0
    %3708 = vmatpush1.xpose.msra.mxu0 0.0
    %3709 = vmatprep.subr.mxu0 0.0
    %3710 = vmatpush1.xpose.msra.mxu0 0.0
    %3711 = vmatprep.subr.mxu0 0.0
    %3712 = vmatpush1.xpose.msra.mxu0 0.0
    %3713 = vmatprep.subr.mxu0 0.0
    %3714 = vmatpush1.xpose.msra.mxu0 0.0
    %3715 = vmatprep.subr.mxu0 0.0
    %3716 = vmatpush1.xpose.msra.mxu0 0.0
    %3717 = vmatprep.subr.mxu0 0.0
    %3718 = vmatpush1.xpose.msra.mxu0 0.0
    %3719 = vmatprep.subr.mxu0 0.0
    %3720 = vmatpush1.xpose.msra.mxu0 0.0
    %3721 = vmatprep.subr.mxu0 0.0
    %3722 = vmatpush1.xpose.msra.mxu0 0.0
    %3723 = vmatprep.subr.mxu0 0.0
    %3724 = vmatpush1.xpose.msra.mxu0 0.0
    %3725 = vmatprep.subr.mxu0 0.0
    %3726 = vmatpush1.xpose.msra.mxu0 0.0
    %3727 = vmatprep.subr.mxu0 0.0
    %3728 = vmatpush1.xpose.msra.mxu0 0.0
    %3729 = vmatprep.subr.mxu0 0.0
    %3730 = vmatpush1.xpose.msra.mxu0 0.0
    %3731 = vmatprep.subr.mxu0 0.0
    %3732 = vmatpush1.xpose.msra.mxu0 0.0
    %3733 = vmatprep.subr.mxu0 0.0
    %3734 = vmatpush1.xpose.msra.mxu0 0.0
    %3735 = vmatprep.subr.mxu0 0.0
    %3736 = vmatpush1.xpose.msra.mxu0 0.0
    %3737 = vmatprep.subr.mxu0 0.0
    %3738 = vmatpush1.xpose.msra.mxu0 0.0
    %3739 = vmatprep.subr.mxu0 0.0
    %3740 = vmatpush1.xpose.msra.mxu0 0.0
    %3741 = vmatprep.subr.mxu0 0.0
    %3742 = vmatpush1.xpose.msra.mxu0 0.0
    %3743 = vmatprep.subr.mxu0 0.0
    %3744 = vmatpush1.xpose.msra.mxu0 0.0
    %3745 = vmatprep.mubr.f32.mxu0 0.0
    %3746 = vmatmul.mubr.f32.gmra.mrb[0].mxu0 %v3677
    %v3747 = vpop.f32.mrb[0].mxu0
    %v3748 = vadd.f32 0.0, %v3747
    %v3749 = vpop.f32.mrb[0].mxu0
    %3750 = vdwg.mxu0
    %v3751 = vmul.f32 %v3748, 0.35355338
    %v3752 = vadd.f32 %v3751, %v1200
    %v3753 = vsel %vm153, %v3752, -inf
    %3754 = vmax.xlane.f32.xlu0 %v3753
    %v3755 = vpop.xlane.xlu0 %3754
    %v3756 = vsub.f32 %v3752, %v3755
    %v3757 = vmul.f32 %v3756, 1.442695
    %v3758 = vpow.pop %v3757
    %v3759 = vsel %vm153, %v3758, 0.0
    %3760 = vadd.xlane.f32.xlu0 %v3759
    %v3761 = vpop.xlane.xlu0 %3760
    %v3762 = vrcp.pop %v3761
    %v3763 = vmul.f32 %v3758, %v3762
    %3764 = vrot.lane.b32.xlu0 %v2230, 48
    %v3765 = vpop.permute.xlu0 %3764
    %v3768 = vsel %vm153, %v3763, 0
    %3770 = vmatprep.subr.mxu0 0.0
    %3771 = vmatpush1.msra.mxu0 %v3765
    %3772 = vmatprep.subr.mxu0 0.0
    %3773 = vmatpush1.msra.mxu0 0.0
    %3774 = vmatprep.subr.mxu0 0.0
    %3775 = vmatpush1.msra.mxu0 0.0
    %3776 = vmatprep.subr.mxu0 0.0
    %3777 = vmatpush1.msra.mxu0 0.0
    %3778 = vmatprep.subr.mxu0 0.0
    %3779 = vmatpush1.msra.mxu0 0.0
    %3780 = vmatprep.subr.mxu0 0.0
    %3781 = vmatpush1.msra.mxu0 0.0
    %3782 = vmatprep.subr.mxu0 0.0
    %3783 = vmatpush1.msra.mxu0 0.0
    %3784 = vmatprep.subr.mxu0 0.0
    %3785 = vmatpush1.msra.mxu0 0.0
    %3786 = vmatprep.subr.mxu0 0.0
    %3787 = vmatpush1.msra.mxu0 0.0
    %3788 = vmatprep.subr.mxu0 0.0
    %3789 = vmatpush1.msra.mxu0 0.0
    %3790 = vmatprep.subr.mxu0 0.0
    %3791 = vmatpush1.msra.mxu0 0.0
    %3792 = vmatprep.subr.mxu0 0.0
    %3793 = vmatpush1.msra.mxu0 0.0
    %3794 = vmatprep.subr.mxu0 0.0
    %3795 = vmatpush1.msra.mxu0 0.0
    %3796 = vmatprep.subr.mxu0 0.0
    %3797 = vmatpush1.msra.mxu0 0.0
    %3798 = vmatprep.subr.mxu0 0.0
    %3799 = vmatpush1.msra.mxu0 0.0
    %3800 = vmatprep.subr.mxu0 0.0
    %3801 = vmatpush1.msra.mxu0 0.0
    %3802 = vmatprep.subr.mxu0 0.0
    %3803 = vmatpush1.msra.mxu0 0.0
    %3804 = vmatprep.subr.mxu0 0.0
    %3805 = vmatpush1.msra.mxu0 0.0
    %3806 = vmatprep.subr.mxu0 0.0
    %3807 = vmatpush1.msra.mxu0 0.0
    %3808 = vmatprep.subr.mxu0 0.0
    %3809 = vmatpush1.msra.mxu0 0.0
    %3810 = vmatprep.subr.mxu0 0.0
    %3811 = vmatpush1.msra.mxu0 0.0
    %3812 = vmatprep.subr.mxu0 0.0
    %3813 = vmatpush1.msra.mxu0 0.0
    %3814 = vmatprep.subr.mxu0 0.0
    %3815 = vmatpush1.msra.mxu0 0.0
    %3816 = vmatprep.subr.mxu0 0.0
    %3817 = vmatpush1.msra.mxu0 0.0
    %3818 = vmatprep.subr.mxu0 0.0
    %3819 = vmatpush1.msra.mxu0 0.0
    %3820 = vmatprep.subr.mxu0 0.0
    %3821 = vmatpush1.msra.mxu0 0.0
    %3822 = vmatprep.subr.mxu0 0.0
    %3823 = vmatpush1.msra.mxu0 0.0
    %3824 = vmatprep.subr.mxu0 0.0
    %3825 = vmatpush1.msra.mxu0 0.0
    %3826 = vmatprep.subr.mxu0 0.0
    %3827 = vmatpush1.msra.mxu0 0.0
    %3828 = vmatprep.subr.mxu0 0.0
    %3829 = vmatpush1.msra.mxu0 0.0
    %3830 = vmatprep.subr.mxu0 0.0
    %3831 = vmatpush1.msra.mxu0 0.0
    %3832 = vmatprep.subr.mxu0 0.0
    %3833 = vmatpush1.msra.mxu0 0.0
    %3834 = vmatprep.mubr.f32.mxu0 0.0
    %3835 = vmatmul.mubr.f32.gmra.mrb[0].mxu0 %v3768
    %v3836 = vpop.f32.mrb[0].mxu0
    %v3837 = vadd.f32 0.0, %v3836
    %v3838 = vpop.f32.mrb[0].mxu0
    %3839 = vdwg.mxu0
    %v3841 = vsel %vm153, %v3837, 0
    %3843 = vmatprep.subr.mxu0 0.0
    %3844 = vmatpush1.msra.mxu0 %v2143
    %3845 = vmatprep.subr.mxu0 0.0
    %3846 = vmatpush1.msra.mxu0 0.0
    %3847 = vmatprep.subr.mxu0 0.0
    %3848 = vmatpush1.msra.mxu0 0.0
    %3849 = vmatprep.subr.mxu0 0.0
    %3850 = vmatpush1.msra.mxu0 0.0
    %3851 = vmatprep.subr.mxu0 0.0
    %3852 = vmatpush1.msra.mxu0 0.0
    %3853 = vmatprep.subr.mxu0 0.0
    %3854 = vmatpush1.msra.mxu0 0.0
    %3855 = vmatprep.subr.mxu0 0.0
    %3856 = vmatpush1.msra.mxu0 0.0
    %3857 = vmatprep.subr.mxu0 0.0
    %3858 = vmatpush1.msra.mxu0 0.0
    %3859 = vmatprep.subr.mxu0 0.0
    %3860 = vmatpush1.msra.mxu0 0.0
    %3861 = vmatprep.subr.mxu0 0.0
    %3862 = vmatpush1.msra.mxu0 0.0
    %3863 = vmatprep.subr.mxu0 0.0
    %3864 = vmatpush1.msra.mxu0 0.0
    %3865 = vmatprep.subr.mxu0 0.0
    %3866 = vmatpush1.msra.mxu0 0.0
    %3867 = vmatprep.subr.mxu0 0.0
    %3868 = vmatpush1.msra.mxu0 0.0
    %3869 = vmatprep.subr.mxu0 0.0
    %3870 = vmatpush1.msra.mxu0 0.0
    %3871 = vmatprep.subr.mxu0 0.0
    %3872 = vmatpush1.msra.mxu0 0.0
    %3873 = vmatprep.subr.mxu0 0.0
    %3874 = vmatpush1.msra.mxu0 0.0
    %3875 = vmatprep.subr.mxu0 0.0
    %3876 = vmatpush1.msra.mxu0 0.0
    %3877 = vmatprep.subr.mxu0 0.0
    %3878 = vmatpush1.msra.mxu0 0.0
    %3879 = vmatprep.subr.mxu0 0.0
    %3880 = vmatpush1.msra.mxu0 0.0
    %3881 = vmatprep.subr.mxu0 0.0
    %3882 = vmatpush1.msra.mxu0 0.0
    %3883 = vmatprep.subr.mxu0 0.0
    %3884 = vmatpush1.msra.mxu0 0.0
    %3885 = vmatprep.subr.mxu0 0.0
    %3886 = vmatpush1.msra.mxu0 0.0
    %3887 = vmatprep.subr.mxu0 0.0
    %3888 = vmatpush1.msra.mxu0 0.0
    %3889 = vmatprep.subr.mxu0 0.0
    %3890 = vmatpush1.msra.mxu0 0.0
    %3891 = vmatprep.subr.mxu0 0.0
    %3892 = vmatpush1.msra.mxu0 0.0
    %3893 = vmatprep.subr.mxu0 0.0
    %3894 = vmatpush1.msra.mxu0 0.0
    %3895 = vmatprep.subr.mxu0 0.0
    %3896 = vmatpush1.msra.mxu0 0.0
    %3897 = vmatprep.subr.mxu0 0.0
    %3898 = vmatpush1.msra.mxu0 0.0
    %3899 = vmatprep.subr.mxu0 0.0
    %3900 = vmatpush1.msra.mxu0 0.0
    %3901 = vmatprep.subr.mxu0 0.0
    %3902 = vmatpush1.msra.mxu0 0.0
    %3903 = vmatprep.subr.mxu0 0.0
    %3904 = vmatpush1.msra.mxu0 0.0
    %3905 = vmatprep.subr.mxu0 0.0
    %3906 = vmatpush1.msra.mxu0 0.0
    %3907 = vmatprep.mubr.f32.mxu0 0.0
    %3908 = vmatmul.mubr.f32.gmra.mrb[0].mxu0 %v3841
    %v3909 = vpop.f32.mrb[0].mxu0
    %v3910 = vadd.f32 0.0, %v3909
    %v3911 = vpop.f32.mrb[0].mxu0
    %3912 = vdwg.mxu0
    %v3913 = vadd.f32 %v3670, %v3910
    %3914 = vrot.lane.b32.xlu0 %v2230, 104
    %v3915 = vpop.permute.xlu0 %3914
    %3916 = vrot.lane.b32.xlu0 %v2230, 72
    %v3917 = vpop.permute.xlu0 %3916
    %v3918 = vsel %vm153, %v3915, 0
    %v3920 = vsel %vm153, %v3917, 0
    %3922 = vmatprep.subr.mxu0 0.0
    %3923 = vmatpush1.xpose.msra.mxu0 %v3920
    %3924 = vmatprep.subr.mxu0 0.0
    %3925 = vmatpush1.xpose.msra.mxu0 0.0
    %3926 = vmatprep.subr.mxu0 0.0
    %3927 = vmatpush1.xpose.msra.mxu0 0.0
    %3928 = vmatprep.subr.mxu0 0.0
    %3929 = vmatpush1.xpose.msra.mxu0 0.0
    %3930 = vmatprep.subr.mxu0 0.0
    %3931 = vmatpush1.xpose.msra.mxu0 0.0
    %3932 = vmatprep.subr.mxu0 0.0
    %3933 = vmatpush1.xpose.msra.mxu0 0.0
    %3934 = vmatprep.subr.mxu0 0.0
    %3935 = vmatpush1.xpose.msra.mxu0 0.0
    %3936 = vmatprep.subr.mxu0 0.0
    %3937 = vmatpush1.xpose.msra.mxu0 0.0
    %3938 = vmatprep.subr.mxu0 0.0
    %3939 = vmatpush1.xpose.msra.mxu0 0.0
    %3940 = vmatprep.subr.mxu0 0.0
    %3941 = vmatpush1.xpose.msra.mxu0 0.0
    %3942 = vmatprep.subr.mxu0 0.0
    %3943 = vmatpush1.xpose.msra.mxu0 0.0
    %3944 = vmatprep.subr.mxu0 0.0
    %3945 = vmatpush1.xpose.msra.mxu0 0.0
    %3946 = vmatprep.subr.mxu0 0.0
    %3947 = vmatpush1.xpose.msra.mxu0 0.0
    %3948 = vmatprep.subr.mxu0 0.0
    %3949 = vmatpush1.xpose.msra.mxu0 0.0
    %3950 = vmatprep.subr.mxu0 0.0
    %3951 = vmatpush1.xpose.msra.mxu0 0.0
    %3952 = vmatprep.subr.mxu0 0.0
    %3953 = vmatpush1.xpose.msra.mxu0 0.0
    %3954 = vmatprep.subr.mxu0 0.0
    %3955 = vmatpush1.xpose.msra.mxu0 0.0
    %3956 = vmatprep.subr.mxu0 0.0
    %3957 = vmatpush1.xpose.msra.mxu0 0.0
    %3958 = vmatprep.subr.mxu0 0.0
    %3959 = vmatpush1.xpose.msra.mxu0 0.0
    %3960 = vmatprep.subr.mxu0 0.0
    %3961 = vmatpush1.xpose.msra.mxu0 0.0
    %3962 = vmatprep.subr.mxu0 0.0
    %3963 = vmatpush1.xpose.msra.mxu0 0.0
    %3964 = vmatprep.subr.mxu0 0.0
    %3965 = vmatpush1.xpose.msra.mxu0 0.0
    %3966 = vmatprep.subr.mxu0 0.0
    %3967 = vmatpush1.xpose.msra.mxu0 0.0
    %3968 = vmatprep.subr.mxu0 0.0
    %3969 = vmatpush1.xpose.msra.mxu0 0.0
    %3970 = vmatprep.subr.mxu0 0.0
    %3971 = vmatpush1.xpose.msra.mxu0 0.0
    %3972 = vmatprep.subr.mxu0 0.0
    %3973 = vmatpush1.xpose.msra.mxu0 0.0
    %3974 = vmatprep.subr.mxu0 0.0
    %3975 = vmatpush1.xpose.msra.mxu0 0.0
    %3976 = vmatprep.subr.mxu0 0.0
    %3977 = vmatpush1.xpose.msra.mxu0 0.0
    %3978 = vmatprep.subr.mxu0 0.0
    %3979 = vmatpush1.xpose.msra.mxu0 0.0
    %3980 = vmatprep.subr.mxu0 0.0
    %3981 = vmatpush1.xpose.msra.mxu0 0.0
    %3982 = vmatprep.subr.mxu0 0.0
    %3983 = vmatpush1.xpose.msra.mxu0 0.0
    %3984 = vmatprep.subr.mxu0 0.0
    %3985 = vmatpush1.xpose.msra.mxu0 0.0
    %3986 = vmatprep.mubr.f32.mxu0 0.0
    %3987 = vmatmul.mubr.f32.gmra.mrb[0].mxu0 %v3918
    %v3988 = vpop.f32.mrb[0].mxu0
    %v3989 = vadd.f32 0.0, %v3988
    %v3990 = vpop.f32.mrb[0].mxu0
    %3991 = vdwg.mxu0
    %v3992 = vmul.f32 %v3989, 0.35355338
    %v3993 = vadd.f32 %v3992, %v1200
    %v3994 = vsel %vm153, %v3993, -inf
    %3995 = vmax.xlane.f32.xlu0 %v3994
    %v3996 = vpop.xlane.xlu0 %3995
    %v3997 = vsub.f32 %v3993, %v3996
    %v3998 = vmul.f32 %v3997, 1.442695
    %v3999 = vpow.pop %v3998
    %v4000 = vsel %vm153, %v3999, 0.0
    %4001 = vadd.xlane.f32.xlu0 %v4000
    %v4002 = vpop.xlane.xlu0 %4001
    %v4003 = vrcp.pop %v4002
    %v4004 = vmul.f32 %v3999, %v4003
    %4005 = vrot.lane.b32.xlu0 %v2230, 40
    %v4006 = vpop.permute.xlu0 %4005
    %v4009 = vsel %vm153, %v4004, 0
    %4011 = vmatprep.subr.mxu0 0.0
    %4012 = vmatpush1.msra.mxu0 %v4006
    %4013 = vmatprep.subr.mxu0 0.0
    %4014 = vmatpush1.msra.mxu0 0.0
    %4015 = vmatprep.subr.mxu0 0.0
    %4016 = vmatpush1.msra.mxu0 0.0
    %4017 = vmatprep.subr.mxu0 0.0
    %4018 = vmatpush1.msra.mxu0 0.0
    %4019 = vmatprep.subr.mxu0 0.0
    %4020 = vmatpush1.msra.mxu0 0.0
    %4021 = vmatprep.subr.mxu0 0.0
    %4022 = vmatpush1.msra.mxu0 0.0
    %4023 = vmatprep.subr.mxu0 0.0
    %4024 = vmatpush1.msra.mxu0 0.0
    %4025 = vmatprep.subr.mxu0 0.0
    %4026 = vmatpush1.msra.mxu0 0.0
    %4027 = vmatprep.subr.mxu0 0.0
    %4028 = vmatpush1.msra.mxu0 0.0
    %4029 = vmatprep.subr.mxu0 0.0
    %4030 = vmatpush1.msra.mxu0 0.0
    %4031 = vmatprep.subr.mxu0 0.0
    %4032 = vmatpush1.msra.mxu0 0.0
    %4033 = vmatprep.subr.mxu0 0.0
    %4034 = vmatpush1.msra.mxu0 0.0
    %4035 = vmatprep.subr.mxu0 0.0
    %4036 = vmatpush1.msra.mxu0 0.0
    %4037 = vmatprep.subr.mxu0 0.0
    %4038 = vmatpush1.msra.mxu0 0.0
    %4039 = vmatprep.subr.mxu0 0.0
    %4040 = vmatpush1.msra.mxu0 0.0
    %4041 = vmatprep.subr.mxu0 0.0
    %4042 = vmatpush1.msra.mxu0 0.0
    %4043 = vmatprep.subr.mxu0 0.0
    %4044 = vmatpush1.msra.mxu0 0.0
    %4045 = vmatprep.subr.mxu0 0.0
    %4046 = vmatpush1.msra.mxu0 0.0
    %4047 = vmatprep.subr.mxu0 0.0
    %4048 = vmatpush1.msra.mxu0 0.0
    %4049 = vmatprep.subr.mxu0 0.0
    %4050 = vmatpush1.msra.mxu0 0.0
    %4051 = vmatprep.subr.mxu0 0.0
    %4052 = vmatpush1.msra.mxu0 0.0
    %4053 = vmatprep.subr.mxu0 0.0
    %4054 = vmatpush1.msra.mxu0 0.0
    %4055 = vmatprep.subr.mxu0 0.0
    %4056 = vmatpush1.msra.mxu0 0.0
    %4057 = vmatprep.subr.mxu0 0.0
    %4058 = vmatpush1.msra.mxu0 0.0
    %4059 = vmatprep.subr.mxu0 0.0
    %4060 = vmatpush1.msra.mxu0 0.0
    %4061 = vmatprep.subr.mxu0 0.0
    %4062 = vmatpush1.msra.mxu0 0.0
    %4063 = vmatprep.subr.mxu0 0.0
    %4064 = vmatpush1.msra.mxu0 0.0
    %4065 = vmatprep.subr.mxu0 0.0
    %4066 = vmatpush1.msra.mxu0 0.0
    %4067 = vmatprep.subr.mxu0 0.0
    %4068 = vmatpush1.msra.mxu0 0.0
    %4069 = vmatprep.subr.mxu0 0.0
    %4070 = vmatpush1.msra.mxu0 0.0
    %4071 = vmatprep.subr.mxu0 0.0
    %4072 = vmatpush1.msra.mxu0 0.0
    %4073 = vmatprep.subr.mxu0 0.0
    %4074 = vmatpush1.msra.mxu0 0.0
    %4075 = vmatprep.mubr.f32.mxu0 0.0
    %4076 = vmatmul.mubr.f32.gmra.mrb[0].mxu0 %v4009
    %v4077 = vpop.f32.mrb[0].mxu0
    %v4078 = vadd.f32 0.0, %v4077
    %v4079 = vpop.f32.mrb[0].mxu0
    %4080 = vdwg.mxu0
    %v4082 = vsel %vm153, %v4078, 0
    %4084 = vmatprep.subr.mxu0 0.0
    %4085 = vmatpush1.msra.mxu0 %v2144
    %4086 = vmatprep.subr.mxu0 0.0
    %4087 = vmatpush1.msra.mxu0 0.0
    %4088 = vmatprep.subr.mxu0 0.0
    %4089 = vmatpush1.msra.mxu0 0.0
    %4090 = vmatprep.subr.mxu0 0.0
    %4091 = vmatpush1.msra.mxu0 0.0
    %4092 = vmatprep.subr.mxu0 0.0
    %4093 = vmatpush1.msra.mxu0 0.0
    %4094 = vmatprep.subr.mxu0 0.0
    %4095 = vmatpush1.msra.mxu0 0.0
    %4096 = vmatprep.subr.mxu0 0.0
    %4097 = vmatpush1.msra.mxu0 0.0
    %4098 = vmatprep.subr.mxu0 0.0
    %4099 = vmatpush1.msra.mxu0 0.0
    %4100 = vmatprep.subr.mxu0 0.0
    %4101 = vmatpush1.msra.mxu0 0.0
    %4102 = vmatprep.subr.mxu0 0.0
    %4103 = vmatpush1.msra.mxu0 0.0
    %4104 = vmatprep.subr.mxu0 0.0
    %4105 = vmatpush1.msra.mxu0 0.0
    %4106 = vmatprep.subr.mxu0 0.0
    %4107 = vmatpush1.msra.mxu0 0.0
    %4108 = vmatprep.subr.mxu0 0.0
    %4109 = vmatpush1.msra.mxu0 0.0
    %4110 = vmatprep.subr.mxu0 0.0
    %4111 = vmatpush1.msra.mxu0 0.0
    %4112 = vmatprep.subr.mxu0 0.0
    %4113 = vmatpush1.msra.mxu0 0.0
    %4114 = vmatprep.subr.mxu0 0.0
    %4115 = vmatpush1.msra.mxu0 0.0
    %4116 = vmatprep.subr.mxu0 0.0
    %4117 = vmatpush1.msra.mxu0 0.0
    %4118 = vmatprep.subr.mxu0 0.0
    %4119 = vmatpush1.msra.mxu0 0.0
    %4120 = vmatprep.subr.mxu0 0.0
    %4121 = vmatpush1.msra.mxu0 0.0
    %4122 = vmatprep.subr.mxu0 0.0
    %4123 = vmatpush1.msra.mxu0 0.0
    %4124 = vmatprep.subr.mxu0 0.0
    %4125 = vmatpush1.msra.mxu0 0.0
    %4126 = vmatprep.subr.mxu0 0.0
    %4127 = vmatpush1.msra.mxu0 0.0
    %4128 = vmatprep.subr.mxu0 0.0
    %4129 = vmatpush1.msra.mxu0 0.0
    %4130 = vmatprep.subr.mxu0 0.0
    %4131 = vmatpush1.msra.mxu0 0.0
    %4132 = vmatprep.subr.mxu0 0.0
    %4133 = vmatpush1.msra.mxu0 0.0
    %4134 = vmatprep.subr.mxu0 0.0
    %4135 = vmatpush1.msra.mxu0 0.0
    %4136 = vmatprep.subr.mxu0 0.0
    %4137 = vmatpush1.msra.mxu0 0.0
    %4138 = vmatprep.subr.mxu0 0.0
    %4139 = vmatpush1.msra.mxu0 0.0
    %4140 = vmatprep.subr.mxu0 0.0
    %4141 = vmatpush1.msra.mxu0 0.0
    %4142 = vmatprep.subr.mxu0 0.0
    %4143 = vmatpush1.msra.mxu0 0.0
    %4144 = vmatprep.subr.mxu0 0.0
    %4145 = vmatpush1.msra.mxu0 0.0
    %4146 = vmatprep.subr.mxu0 0.0
    %4147 = vmatpush1.msra.mxu0 0.0
    %4148 = vmatprep.mubr.f32.mxu0 0.0
    %4149 = vmatmul.mubr.f32.gmra.mrb[0].mxu0 %v4082
    %v4150 = vpop.f32.mrb[0].mxu0
    %v4151 = vadd.f32 0.0, %v4150
    %v4152 = vpop.f32.mrb[0].mxu0
    %4153 = vdwg.mxu0
    %v4154 = vadd.f32 %v3913, %v4151
    %v4155 = vlaneseq
    %v4156 = vshrl.u32 %v4155, 7
    %v4157 = vsub.s32 0, %v4156
    %v4158 = vrot.slane %v2145, %v4157
    %v4159 = vadd.f32 %v3193, %v4158
    %v4160 = vadd.f32 %v4154, %v4158
    %v4161 = vadd.f32 %v2134, %v4159
    %v4162 = vadd.f32 %v2135, %v4160
    %v4163 = vsel %vm68, %v4161, 0.0
    %4164 = vadd.xlane.f32.xlu0 %v4163
    %v4165 = vpop.xlane.xlu0 %4164
    %v4166 = vsel %vm68, %v4162, 0.0
    %4167 = vadd.xlane.f32.xlu0 %v4166
    %v4168 = vpop.xlane.xlu0 %4167
    %v4169 = vmul.f32 %v4165, %v2099
    %v4170 = vmul.f32 %v4168, %v2099
    %v4171 = vmul.f32 %v4161, %v4161
    %v4172 = vmul.f32 %v4162, %v4162
    %v4173 = vsel %vm68, %v4171, 0.0
    %4174 = vadd.xlane.f32.xlu0 %v4173
    %v4175 = vpop.xlane.xlu0 %4174
    %v4176 = vsel %vm68, %v4172, 0.0
    %4177 = vadd.xlane.f32.xlu0 %v4176
    %v4178 = vpop.xlane.xlu0 %4177
    %v4179 = vmul.f32 %v4175, %v2099
    %v4180 = vmul.f32 %v4178, %v2099
    %v4181 = vmul.f32 %v4169, %v4169
    %v4182 = vmul.f32 %v4170, %v4170
    %v4183 = vsub.f32 %v4179, %v4181
    %v4184 = vsub.f32 %v4180, %v4182
    %v4185 = vsub.f32 %v4161, %v4169
    %v4186 = vsub.f32 %v4162, %v4170
    %v4187 = vadd.f32 %v4183, 1e-05
    %v4188 = vadd.f32 %v4184, 1e-05
    %v4189 = vrsqrt.pop %v4187
    %v4190 = vrsqrt.pop %v4188
    %v4191 = vmul.f32 %v4185, %v4189
    %v4192 = vmul.f32 %v4186, %v4190
    %v4193 = vlaneseq
    %v4194 = vshrl.u32 %v4193, 7
    %v4195 = vsub.s32 0, %v4194
    %v4196 = vrot.slane %v2146, %v4195
    %v4197 = vmul.f32 %v4191, %v4196
    %v4198 = vmul.f32 %v4192, %v4196
    %v4199 = vlaneseq
    %v4200 = vshrl.u32 %v4199, 7
    %v4201 = vsub.s32 0, %v4200
    %v4202 = vrot.slane %v2147, %v4201
    %v4203 = vadd.f32 %v4197, %v4202
    %v4204 = vadd.f32 %v4198, %v4202
    %v4205 = vld [vmem:[#allocation5 + $0xc8] sm:$0xff]
    %v4206 = vld [vmem:[#allocation5 + $0xd0] sm:$0xff]
    %v4207 = vld [vmem:[#allocation5 + $0xd8] sm:$0xff]
    %v4208 = vld [vmem:[#allocation5 + $0xe0] sm:$0xff]
    %v4209 = vld [vmem:[#allocation5 + $0xe8] sm:$0x1]
    %v4210 = vlaneseq
    %v4211 = vshrl.u32 %v4210, 7
    %v4212 = vsub.s32 0, %v4211
    %v4213 = vrot.slane %v4209, %v4212
    %v4215 = vsel %vm68, %v4203, 0
    %v4218 = vsel %vm68, %v4204, 0
    %4220 = vmatprep.subr.mxu0 0.0
    %4221 = vmatpush1.msra.mxu0 %v4205
    %4222 = vmatprep.subr.mxu0 0.0
    %4223 = vmatpush1.msra.mxu0 %v4206
    %4224 = vmatprep.subr.mxu0 0.0
    %4225 = vmatpush1.msra.mxu0 %v4207
    %4226 = vmatprep.subr.mxu0 0.0
    %4227 = vmatpush1.msra.mxu0 %v4208
    %4228 = vmatprep.subr.mxu0 0.0
    %4229 = vmatpush1.msra.mxu0 0.0
    %4230 = vmatprep.subr.mxu0 0.0
    %4231 = vmatpush1.msra.mxu0 0.0
    %4232 = vmatprep.subr.mxu0 0.0
    %4233 = vmatpush1.msra.mxu0 0.0
    %4234 = vmatprep.subr.mxu0 0.0
    %4235 = vmatpush1.msra.mxu0 0.0
    %4236 = vmatprep.subr.mxu0 0.0
    %4237 = vmatpush1.msra.mxu0 0.0
    %4238 = vmatprep.subr.mxu0 0.0
    %4239 = vmatpush1.msra.mxu0 0.0
    %4240 = vmatprep.subr.mxu0 0.0
    %4241 = vmatpush1.msra.mxu0 0.0
    %4242 = vmatprep.subr.mxu0 0.0
    %4243 = vmatpush1.msra.mxu0 0.0
    %4244 = vmatprep.subr.mxu0 0.0
    %4245 = vmatpush1.msra.mxu0 0.0
    %4246 = vmatprep.subr.mxu0 0.0
    %4247 = vmatpush1.msra.mxu0 0.0
    %4248 = vmatprep.subr.mxu0 0.0
    %4249 = vmatpush1.msra.mxu0 0.0
    %4250 = vmatprep.subr.mxu0 0.0
    %4251 = vmatpush1.msra.mxu0 0.0
    %4252 = vmatprep.subr.mxu0 0.0
    %4253 = vmatpush1.msra.mxu0 0.0
    %4254 = vmatprep.subr.mxu0 0.0
    %4255 = vmatpush1.msra.mxu0 0.0
    %4256 = vmatprep.subr.mxu0 0.0
    %4257 = vmatpush1.msra.mxu0 0.0
    %4258 = vmatprep.subr.mxu0 0.0
    %4259 = vmatpush1.msra.mxu0 0.0
    %4260 = vmatprep.subr.mxu0 0.0
    %4261 = vmatpush1.msra.mxu0 0.0
    %4262 = vmatprep.subr.mxu0 0.0
    %4263 = vmatpush1.msra.mxu0 0.0
    %4264 = vmatprep.subr.mxu0 0.0
    %4265 = vmatpush1.msra.mxu0 0.0
    %4266 = vmatprep.subr.mxu0 0.0
    %4267 = vmatpush1.msra.mxu0 0.0
    %4268 = vmatprep.subr.mxu0 0.0
    %4269 = vmatpush1.msra.mxu0 0.0
    %4270 = vmatprep.subr.mxu0 0.0
    %4271 = vmatpush1.msra.mxu0 0.0
    %4272 = vmatprep.subr.mxu0 0.0
    %4273 = vmatpush1.msra.mxu0 0.0
    %4274 = vmatprep.subr.mxu0 0.0
    %4275 = vmatpush1.msra.mxu0 0.0
    %4276 = vmatprep.subr.mxu0 0.0
    %4277 = vmatpush1.msra.mxu0 0.0
    %4278 = vmatprep.subr.mxu0 0.0
    %4279 = vmatpush1.msra.mxu0 0.0
    %4280 = vmatprep.subr.mxu0 0.0
    %4281 = vmatpush1.msra.mxu0 0.0
    %4282 = vmatprep.subr.mxu0 0.0
    %4283 = vmatpush1.msra.mxu0 0.0
    %4284 = vmatprep.mubr.f32.mxu0 0.0
    %4285 = vmatmul.mubr.f32.gmra.mrb[0].mxu0 %v4215
    %v4286 = vpop.f32.mrb[0].mxu0
    %v4287 = vadd.f32 %v4213, %v4286
    %v4288 = vpop.f32.mrb[0].mxu0
    %4289 = vmatprep.mubr.f32.mxu0 0.0
    %4290 = vmatmul.mubr.f32.gmra.mrb[0].mxu0 %v4218
    %v4291 = vpop.f32.mrb[0].mxu0
    %v4292 = vadd.f32 %v4213, %v4291
    %v4293 = vpop.f32.mrb[0].mxu0
    %4294 = vdwg.mxu0
    %v4295 = vadd.f32 %v4203, %v4287
    %v4296 = vadd.f32 %v4204, %v4292
    %v4297 = vld [vmem:[#allocation5 + $0xf0] sm:$0x1]
    %v4298 = vld [vmem:[#allocation5 + $0xf8] sm:$0x1]
    %v4299 = vsel %vm68, %v4295, 0.0
    %4300 = vadd.xlane.f32.xlu0 %v4299
    %v4301 = vpop.xlane.xlu0 %4300
    %v4302 = vsel %vm68, %v4296, 0.0
    %4303 = vadd.xlane.f32.xlu0 %v4302
    %v4304 = vpop.xlane.xlu0 %4303
    %v4305 = vmul.f32 %v4301, %v2099
    %v4306 = vmul.f32 %v4304, %v2099
    %v4307 = vmul.f32 %v4295, %v4295
    %v4308 = vmul.f32 %v4296, %v4296
    %v4309 = vsel %vm68, %v4307, 0.0
    %4310 = vadd.xlane.f32.xlu0 %v4309
    %v4311 = vpop.xlane.xlu0 %4310
    %v4312 = vsel %vm68, %v4308, 0.0
    %4313 = vadd.xlane.f32.xlu0 %v4312
    %v4314 = vpop.xlane.xlu0 %4313
    %v4315 = vmul.f32 %v4311, %v2099
    %v4316 = vmul.f32 %v4314, %v2099
    %v4317 = vmul.f32 %v4305, %v4305
    %v4318 = vmul.f32 %v4306, %v4306
    %v4319 = vsub.f32 %v4315, %v4317
    %v4320 = vsub.f32 %v4316, %v4318
    %v4321 = vsub.f32 %v4295, %v4305
    %v4322 = vsub.f32 %v4296, %v4306
    %v4323 = vadd.f32 %v4319, 1e-05
    %v4324 = vadd.f32 %v4320, 1e-05
    %v4325 = vrsqrt.pop %v4323
    %v4326 = vrsqrt.pop %v4324
    %v4327 = vmul.f32 %v4321, %v4325
    %v4328 = vmul.f32 %v4322, %v4326
    %v4329 = vlaneseq
    %v4330 = vshrl.u32 %v4329, 7
    %v4331 = vsub.s32 0, %v4330
    %v4332 = vrot.slane %v4297, %v4331
    %v4333 = vmul.f32 %v4327, %v4332
    %v4334 = vmul.f32 %v4328, %v4332
    %v4335 = vlaneseq
    %v4336 = vshrl.u32 %v4335, 7
    %v4337 = vsub.s32 0, %v4336
    %v4338 = vrot.slane %v4298, %v4337
    %v4339 = vadd.f32 %v4333, %v4338
    %v4340 = vadd.f32 %v4334, %v4338
    %v4341 = vld [vmem:[#allocation5 + $0x100] sm:$0xff]
    %v4342 = vld [vmem:[#allocation5 + $0x108] sm:$0xff]
    %v4343 = vld [vmem:[#allocation5 + $0x110] sm:$0xff]
    %v4344 = vld [vmem:[#allocation5 + $0x118] sm:$0xff]
    %v4345 = vld [vmem:[#allocation5 + $0x120] sm:$0x1]
    %v4346 = vlaneseq
    %v4347 = vshrl.u32 %v4346, 7
    %v4348 = vsub.s32 0, %v4347
    %v4349 = vrot.slane %v4345, %v4348
    %v4351 = vsel %vm68, %v4339, 0
    %v4354 = vsel %vm68, %v4340, 0
    %4356 = vmatprep.subr.mxu0 0.0
    %4357 = vmatpush1.msra.mxu0 %v4341
    %4358 = vmatprep.subr.mxu0 0.0
    %4359 = vmatpush1.msra.mxu0 %v4342
    %4360 = vmatprep.subr.mxu0 0.0
    %4361 = vmatpush1.msra.mxu0 %v4343
    %4362 = vmatprep.subr.mxu0 0.0
    %4363 = vmatpush1.msra.mxu0 %v4344
    %4364 = vmatprep.subr.mxu0 0.0
    %4365 = vmatpush1.msra.mxu0 0.0
    %4366 = vmatprep.subr.mxu0 0.0
    %4367 = vmatpush1.msra.mxu0 0.0
    %4368 = vmatprep.subr.mxu0 0.0
    %4369 = vmatpush1.msra.mxu0 0.0
    %4370 = vmatprep.subr.mxu0 0.0
    %4371 = vmatpush1.msra.mxu0 0.0
    %4372 = vmatprep.subr.mxu0 0.0
    %4373 = vmatpush1.msra.mxu0 0.0
    %4374 = vmatprep.subr.mxu0 0.0
    %4375 = vmatpush1.msra.mxu0 0.0
    %4376 = vmatprep.subr.mxu0 0.0
    %4377 = vmatpush1.msra.mxu0 0.0
    %4378 = vmatprep.subr.mxu0 0.0
    %4379 = vmatpush1.msra.mxu0 0.0
    %4380 = vmatprep.subr.mxu0 0.0
    %4381 = vmatpush1.msra.mxu0 0.0
    %4382 = vmatprep.subr.mxu0 0.0
    %4383 = vmatpush1.msra.mxu0 0.0
    %4384 = vmatprep.subr.mxu0 0.0
    %4385 = vmatpush1.msra.mxu0 0.0
    %4386 = vmatprep.subr.mxu0 0.0
    %4387 = vmatpush1.msra.mxu0 0.0
    %4388 = vmatprep.subr.mxu0 0.0
    %4389 = vmatpush1.msra.mxu0 0.0
    %4390 = vmatprep.subr.mxu0 0.0
    %4391 = vmatpush1.msra.mxu0 0.0
    %4392 = vmatprep.subr.mxu0 0.0
    %4393 = vmatpush1.msra.mxu0 0.0
    %4394 = vmatprep.subr.mxu0 0.0
    %4395 = vmatpush1.msra.mxu0 0.0
    %4396 = vmatprep.subr.mxu0 0.0
    %4397 = vmatpush1.msra.mxu0 0.0
    %4398 = vmatprep.subr.mxu0 0.0
    %4399 = vmatpush1.msra.mxu0 0.0
    %4400 = vmatprep.subr.mxu0 0.0
    %4401 = vmatpush1.msra.mxu0 0.0
    %4402 = vmatprep.subr.mxu0 0.0
    %4403 = vmatpush1.msra.mxu0 0.0
    %4404 = vmatprep.subr.mxu0 0.0
    %4405 = vmatpush1.msra.mxu0 0.0
    %4406 = vmatprep.subr.mxu0 0.0
    %4407 = vmatpush1.msra.mxu0 0.0
    %4408 = vmatprep.subr.mxu0 0.0
    %4409 = vmatpush1.msra.mxu0 0.0
    %4410 = vmatprep.subr.mxu0 0.0
    %4411 = vmatpush1.msra.mxu0 0.0
    %4412 = vmatprep.subr.mxu0 0.0
    %4413 = vmatpush1.msra.mxu0 0.0
    %4414 = vmatprep.subr.mxu0 0.0
    %4415 = vmatpush1.msra.mxu0 0.0
    %4416 = vmatprep.subr.mxu0 0.0
    %4417 = vmatpush1.msra.mxu0 0.0
    %4418 = vmatprep.subr.mxu0 0.0
    %4419 = vmatpush1.msra.mxu0 0.0
    %4420 = vmatprep.mubr.f32.mxu0 0.0
    %4421 = vmatmul.mubr.f32.gmra.mrb[0].mxu0 %v4351
    %v4422 = vpop.f32.mrb[0].mxu0
    %v4423 = vadd.f32 %v4349, %v4422
    %v4424 = vpop.f32.mrb[0].mxu0
    %4425 = vmatprep.mubr.f32.mxu0 0.0
    %4426 = vmatmul.mubr.f32.gmra.mrb[0].mxu0 %v4354
    %v4427 = vpop.f32.mrb[0].mxu0
    %v4428 = vadd.f32 %v4349, %v4427
    %v4429 = vpop.f32.mrb[0].mxu0
    %4430 = vdwg.mxu0
    %v4431 = vtanh.pop %v4423
    %v4432 = vtanh.pop %v4428
    %v4433 = vld [vmem:[#allocation5 + $0x128] sm:$0xff]
    %v4434 = vld [vmem:[#allocation5 + $0x130] sm:$0xff]
    %v4435 = vld [vmem:[#allocation5 + $0x138] sm:$0xff]
    %v4436 = vld [vmem:[#allocation5 + $0x140] sm:$0xff]
    %v4437 = vld [vmem:[#allocation5 + $0x148] sm:$0x1]
    %v4438 = vlaneseq
    %v4439 = vshrl.u32 %v4438, 7
    %v4440 = vsub.s32 0, %v4439
    %v4441 = vrot.slane %v4437, %v4440
    %v4443 = vsel %vm68, %v4431, 0
    %v4446 = vsel %vm68, %v4432, 0
    %4448 = vmatprep.subr.mxu0 0.0
    %4449 = vmatpush1.msra.mxu0 %v4433
    %4450 = vmatprep.subr.mxu0 0.0
    %4451 = vmatpush1.msra.mxu0 %v4434
    %4452 = vmatprep.subr.mxu0 0.0
    %4453 = vmatpush1.msra.mxu0 %v4435
    %4454 = vmatprep.subr.mxu0 0.0
    %4455 = vmatpush1.msra.mxu0 %v4436
    %4456 = vmatprep.subr.mxu0 0.0
    %4457 = vmatpush1.msra.mxu0 0.0
    %4458 = vmatprep.subr.mxu0 0.0
    %4459 = vmatpush1.msra.mxu0 0.0
    %4460 = vmatprep.subr.mxu0 0.0
    %4461 = vmatpush1.msra.mxu0 0.0
    %4462 = vmatprep.subr.mxu0 0.0
    %4463 = vmatpush1.msra.mxu0 0.0
    %4464 = vmatprep.subr.mxu0 0.0
    %4465 = vmatpush1.msra.mxu0 0.0
    %4466 = vmatprep.subr.mxu0 0.0
    %4467 = vmatpush1.msra.mxu0 0.0
    %4468 = vmatprep.subr.mxu0 0.0
    %4469 = vmatpush1.msra.mxu0 0.0
    %4470 = vmatprep.subr.mxu0 0.0
    %4471 = vmatpush1.msra.mxu0 0.0
    %4472 = vmatprep.subr.mxu0 0.0
    %4473 = vmatpush1.msra.mxu0 0.0
    %4474 = vmatprep.subr.mxu0 0.0
    %4475 = vmatpush1.msra.mxu0 0.0
    %4476 = vmatprep.subr.mxu0 0.0
    %4477 = vmatpush1.msra.mxu0 0.0
    %4478 = vmatprep.subr.mxu0 0.0
    %4479 = vmatpush1.msra.mxu0 0.0
    %4480 = vmatprep.subr.mxu0 0.0
    %4481 = vmatpush1.msra.mxu0 0.0
    %4482 = vmatprep.subr.mxu0 0.0
    %4483 = vmatpush1.msra.mxu0 0.0
    %4484 = vmatprep.subr.mxu0 0.0
    %4485 = vmatpush1.msra.mxu0 0.0
    %4486 = vmatprep.subr.mxu0 0.0
    %4487 = vmatpush1.msra.mxu0 0.0
    %4488 = vmatprep.subr.mxu0 0.0
    %4489 = vmatpush1.msra.mxu0 0.0
    %4490 = vmatprep.subr.mxu0 0.0
    %4491 = vmatpush1.msra.mxu0 0.0
    %4492 = vmatprep.subr.mxu0 0.0
    %4493 = vmatpush1.msra.mxu0 0.0
    %4494 = vmatprep.subr.mxu0 0.0
    %4495 = vmatpush1.msra.mxu0 0.0
    %4496 = vmatprep.subr.mxu0 0.0
    %4497 = vmatpush1.msra.mxu0 0.0
    %4498 = vmatprep.subr.mxu0 0.0
    %4499 = vmatpush1.msra.mxu0 0.0
    %4500 = vmatprep.subr.mxu0 0.0
    %4501 = vmatpush1.msra.mxu0 0.0
    %4502 = vmatprep.subr.mxu0 0.0
    %4503 = vmatpush1.msra.mxu0 0.0
    %4504 = vmatprep.subr.mxu0 0.0
    %4505 = vmatpush1.msra.mxu0 0.0
    %4506 = vmatprep.subr.mxu0 0.0
    %4507 = vmatpush1.msra.mxu0 0.0
    %4508 = vmatprep.subr.mxu0 0.0
    %4509 = vmatpush1.msra.mxu0 0.0
    %4510 = vmatprep.subr.mxu0 0.0
    %4511 = vmatpush1.msra.mxu0 0.0
    %4512 = vmatprep.mubr.f32.mxu0 0.0
    %4513 = vmatmul.mubr.f32.gmra.mrb[0].mxu0 %v4443
    %v4514 = vpop.f32.mrb[0].mxu0
    %v4515 = vadd.f32 %v4441, %v4514
    %v4516 = vpop.f32.mrb[0].mxu0
    %4517 = vmatprep.mubr.f32.mxu0 0.0
    %4518 = vmatmul.mubr.f32.gmra.mrb[0].mxu0 %v4446
    %v4519 = vpop.f32.mrb[0].mxu0
    %v4520 = vadd.f32 %v4441, %v4519
    %v4521 = vpop.f32.mrb[0].mxu0
    %4522 = vdwg.mxu0
    %vm4523 = vcmask 7168
    %v4524 = vsel %vm4523, %v4515, -inf
    %v4525 = vrot.slane %v4524, 4
    %v4526 = vmax.f32 %v4524, %v4525
    %v4527 = vrot.slane %v4526, 2
    %v4528 = vmax.f32 %v4526, %v4527
    %v4529 = vrot.slane %v4528, 1
    %v4530 = vmax.f32 %v4528, %v4529
    %v4531 = vsub.f32 %v4515, %v4530
    %v4532 = vmul.f32 %v4531, 1.442695
    %v4533 = vpow.pop %v4532
    %v4534 = vsel %vm4523, %v4533, 0.0
    %v4535 = vrot.slane %v4534, 4
    %v4536 = vadd.f32 %v4534, %v4535
    %v4537 = vrot.slane %v4536, 2
    %v4538 = vadd.f32 %v4536, %v4537
    %v4539 = vrot.slane %v4538, 1
    %v4540 = vadd.f32 %v4538, %v4539
    %v4541 = vrcp.pop %v4540
    %v4542 = vmul.f32 %v4533, %v4541
    %4544 = vset.pattern.permute.xlu0 0
    %4545 = vperm.xlu0 %4544, %v4542
    %v4546 = vpop.permute.xlu0 %4545
    %v4548 = vmul.f32 %v4546, %v4339
    %v4549 = vsel %vm68, %v4548, 0.0
    %v4550 = vrot.slane %v4549, 4
    %v4551 = vadd.f32 %v4549, %v4550
    %v4552 = vrot.slane %v4551, 2
    %v4553 = vadd.f32 %v4551, %v4552
    %v4554 = vrot.slane %v4553, 1
    %v4555 = vadd.f32 %v4553, %v4554
    %v4556 = vsel %vm4523, %v4520, -inf
    %v4557 = vrot.slane %v4556, 4
    %v4558 = vmax.f32 %v4556, %v4557
    %v4559 = vrot.slane %v4558, 2
    %v4560 = vmax.f32 %v4558, %v4559
    %v4561 = vrot.slane %v4560, 1
    %v4562 = vmax.f32 %v4560, %v4561
    %v4563 = vsub.f32 %v4520, %v4562
    %v4564 = vmul.f32 %v4563, 1.442695
    %v4565 = vpow.pop %v4564
    %v4566 = vsel %vm4523, %v4565, 0.0
    %v4567 = vrot.slane %v4566, 4
    %v4568 = vadd.f32 %v4566, %v4567
    %v4569 = vrot.slane %v4568, 2
    %v4570 = vadd.f32 %v4568, %v4569
    %v4571 = vrot.slane %v4570, 1
    %v4572 = vadd.f32 %v4570, %v4571
    %v4573 = vrcp.pop %v4572
    %v4574 = vmul.f32 %v4565, %v4573
    %4576 = vset.pattern.permute.xlu0 0
    %4577 = vperm.xlu0 %4576, %v4574
    %v4578 = vpop.permute.xlu0 %4577
    %v4580 = vmul.f32 %v4578, %v4340
    %v4581 = vsel %vm68, %v4580, 0.0
    %v4582 = vrot.slane %v4581, 4
    %v4583 = vadd.f32 %v4581, %v4582
    %v4584 = vrot.slane %v4583, 2
    %v4585 = vadd.f32 %v4583, %v4584
    %v4586 = vrot.slane %v4585, 1
    %v4587 = vadd.f32 %v4585, %v4586
    %vm4588 = vcmask 1040384
    %v4589 = vsel %vm4588, %v4555, %v4587
    %v4590 = vld [vmem:[#allocation5 + $0x150] sm:$0xff]
    %v4591 = vld [vmem:[#allocation5 + $0x158] sm:$0xff]
    %v4592 = vld [vmem:[#allocation5 + $0x160] sm:$0xff]
    %v4593 = vld [vmem:[#allocation5 + $0x168] sm:$0xff]
    %v4594 = vld [vmem:[#allocation5 + $0x170] sm:$0x1]
    %v4595 = vlaneseq
    %v4596 = vshrl.u32 %v4595, 7
    %v4597 = vsub.s32 0, %v4596
    %v4598 = vrot.slane %v4594, %v4597
    %v4600 = vsel %vm68, %v4589, 0
    %4602 = vmatprep.subr.mxu0 0.0
    %4603 = vmatpush1.msra.mxu0 %v4590
    %4604 = vmatprep.subr.mxu0 0.0
    %4605 = vmatpush1.msra.mxu0 %v4591
    %4606 = vmatprep.subr.mxu0 0.0
    %4607 = vmatpush1.msra.mxu0 %v4592
    %4608 = vmatprep.subr.mxu0 0.0
    %4609 = vmatpush1.msra.mxu0 %v4593
    %4610 = vmatprep.subr.mxu0 0.0
    %4611 = vmatpush1.msra.mxu0 0.0
    %4612 = vmatprep.subr.mxu0 0.0
    %4613 = vmatpush1.msra.mxu0 0.0
    %4614 = vmatprep.subr.mxu0 0.0
    %4615 = vmatpush1.msra.mxu0 0.0
    %4616 = vmatprep.subr.mxu0 0.0
    %4617 = vmatpush1.msra.mxu0 0.0
    %4618 = vmatprep.subr.mxu0 0.0
    %4619 = vmatpush1.msra.mxu0 0.0
    %4620 = vmatprep.subr.mxu0 0.0
    %4621 = vmatpush1.msra.mxu0 0.0
    %4622 = vmatprep.subr.mxu0 0.0
    %4623 = vmatpush1.msra.mxu0 0.0
    %4624 = vmatprep.subr.mxu0 0.0
    %4625 = vmatpush1.msra.mxu0 0.0
    %4626 = vmatprep.subr.mxu0 0.0
    %4627 = vmatpush1.msra.mxu0 0.0
    %4628 = vmatprep.subr.mxu0 0.0
    %4629 = vmatpush1.msra.mxu0 0.0
    %4630 = vmatprep.subr.mxu0 0.0
    %4631 = vmatpush1.msra.mxu0 0.0
    %4632 = vmatprep.subr.mxu0 0.0
    %4633 = vmatpush1.msra.mxu0 0.0
    %4634 = vmatprep.subr.mxu0 0.0
    %4635 = vmatpush1.msra.mxu0 0.0
    %4636 = vmatprep.subr.mxu0 0.0
    %4637 = vmatpush1.msra.mxu0 0.0
    %4638 = vmatprep.subr.mxu0 0.0
    %4639 = vmatpush1.msra.mxu0 0.0
    %4640 = vmatprep.subr.mxu0 0.0
    %4641 = vmatpush1.msra.mxu0 0.0
    %4642 = vmatprep.subr.mxu0 0.0
    %4643 = vmatpush1.msra.mxu0 0.0
    %4644 = vmatprep.subr.mxu0 0.0
    %4645 = vmatpush1.msra.mxu0 0.0
    %4646 = vmatprep.subr.mxu0 0.0
    %4647 = vmatpush1.msra.mxu0 0.0
    %4648 = vmatprep.subr.mxu0 0.0
    %4649 = vmatpush1.msra.mxu0 0.0
    %4650 = vmatprep.subr.mxu0 0.0
    %4651 = vmatpush1.msra.mxu0 0.0
    %4652 = vmatprep.subr.mxu0 0.0
    %4653 = vmatpush1.msra.mxu0 0.0
    %4654 = vmatprep.subr.mxu0 0.0
    %4655 = vmatpush1.msra.mxu0 0.0
    %4656 = vmatprep.subr.mxu0 0.0
    %4657 = vmatpush1.msra.mxu0 0.0
    %4658 = vmatprep.subr.mxu0 0.0
    %4659 = vmatpush1.msra.mxu0 0.0
    %4660 = vmatprep.subr.mxu0 0.0
    %4661 = vmatpush1.msra.mxu0 0.0
    %4662 = vmatprep.subr.mxu0 0.0
    %4663 = vmatpush1.msra.mxu0 0.0
    %4664 = vmatprep.subr.mxu0 0.0
    %4665 = vmatpush1.msra.mxu0 0.0
    %4666 = vmatprep.mubr.f32.mxu0 0.0
    %4667 = vmatmul.mubr.f32.gmra.mrb[0].mxu0 %v4600
    %v4668 = vpop.f32.mrb[0].mxu0
    %v4669 = vadd.f32 %v4598, %v4668
    %v4670 = vpop.f32.mrb[0].mxu0
    %4671 = vdwg.mxu0
    %v4672 = vmax.f32 %v4669, 0.0
    %v4673 = vld [vmem:[#allocation5 + $0x178] sm:$0xff]
    %v4674 = vld [vmem:[#allocation5 + $0x180] sm:$0xff]
    %v4675 = vld [vmem:[#allocation5 + $0x188] sm:$0x1]
    %v4676 = vlaneseq
    %v4677 = vshrl.u32 %v4676, 7
    %v4678 = vsub.s32 0, %v4677
    %v4679 = vrot.slane %v4675, %v4678
    %vm4680 = vcmask 130048
    %v4682 = vsel %vm4680, %v4672, 0
    %4684 = vmatprep.subr.mxu0 0.0
    %4685 = vmatpush1.msra.mxu0 %v4673
    %4686 = vmatprep.subr.mxu0 0.0
    %4687 = vmatpush1.msra.mxu0 %v4674
    %4688 = vmatprep.subr.mxu0 0.0
    %4689 = vmatpush1.msra.mxu0 0.0
    %4690 = vmatprep.subr.mxu0 0.0
    %4691 = vmatpush1.msra.mxu0 0.0
    %4692 = vmatprep.subr.mxu0 0.0
    %4693 = vmatpush1.msra.mxu0 0.0
    %4694 = vmatprep.subr.mxu0 0.0
    %4695 = vmatpush1.msra.mxu0 0.0
    %4696 = vmatprep.subr.mxu0 0.0
    %4697 = vmatpush1.msra.mxu0 0.0
    %4698 = vmatprep.subr.mxu0 0.0
    %4699 = vmatpush1.msra.mxu0 0.0
    %4700 = vmatprep.subr.mxu0 0.0
    %4701 = vmatpush1.msra.mxu0 0.0
    %4702 = vmatprep.subr.mxu0 0.0
    %4703 = vmatpush1.msra.mxu0 0.0
    %4704 = vmatprep.subr.mxu0 0.0
    %4705 = vmatpush1.msra.mxu0 0.0
    %4706 = vmatprep.subr.mxu0 0.0
    %4707 = vmatpush1.msra.mxu0 0.0
    %4708 = vmatprep.subr.mxu0 0.0
    %4709 = vmatpush1.msra.mxu0 0.0
    %4710 = vmatprep.subr.mxu0 0.0
    %4711 = vmatpush1.msra.mxu0 0.0
    %4712 = vmatprep.subr.mxu0 0.0
    %4713 = vmatpush1.msra.mxu0 0.0
    %4714 = vmatprep.subr.mxu0 0.0
    %4715 = vmatpush1.msra.mxu0 0.0
    %4716 = vmatprep.subr.mxu0 0.0
    %4717 = vmatpush1.msra.mxu0 0.0
    %4718 = vmatprep.subr.mxu0 0.0
    %4719 = vmatpush1.msra.mxu0 0.0
    %4720 = vmatprep.subr.mxu0 0.0
    %4721 = vmatpush1.msra.mxu0 0.0
    %4722 = vmatprep.subr.mxu0 0.0
    %4723 = vmatpush1.msra.mxu0 0.0
    %4724 = vmatprep.subr.mxu0 0.0
    %4725 = vmatpush1.msra.mxu0 0.0
    %4726 = vmatprep.subr.mxu0 0.0
    %4727 = vmatpush1.msra.mxu0 0.0
    %4728 = vmatprep.subr.mxu0 0.0
    %4729 = vmatpush1.msra.mxu0 0.0
    %4730 = vmatprep.subr.mxu0 0.0
    %4731 = vmatpush1.msra.mxu0 0.0
    %4732 = vmatprep.subr.mxu0 0.0
    %4733 = vmatpush1.msra.mxu0 0.0
    %4734 = vmatprep.subr.mxu0 0.0
    %4735 = vmatpush1.msra.mxu0 0.0
    %4736 = vmatprep.subr.mxu0 0.0
    %4737 = vmatpush1.msra.mxu0 0.0
    %4738 = vmatprep.subr.mxu0 0.0
    %4739 = vmatpush1.msra.mxu0 0.0
    %4740 = vmatprep.subr.mxu0 0.0
    %4741 = vmatpush1.msra.mxu0 0.0
    %4742 = vmatprep.subr.mxu0 0.0
    %4743 = vmatpush1.msra.mxu0 0.0
    %4744 = vmatprep.subr.mxu0 0.0
    %4745 = vmatpush1.msra.mxu0 0.0
    %4746 = vmatprep.subr.mxu0 0.0
    %4747 = vmatpush1.msra.mxu0 0.0
    %4748 = vmatprep.mubr.f32.mxu0 0.0
    %4749 = vmatmul.mubr.f32.gmra.mrb[0].mxu0 %v4682
    %v4750 = vpop.f32.mrb[0].mxu0
    %v4751 = vadd.f32 %v4679, %v4750
    %v4752 = vpop.f32.mrb[0].mxu0
    %4753 = vdwg.mxu0
    %vm4754 = vcmask 254976
    %4755 = vst.msk [vmem:[#allocation7] sm:$0x3] %vm4754, %v4751
    // Predicated region
    $region22: #{tpu_custom_call.1} parent=1 // pred_check
      _
    $region23: #{tpu_custom_call.1} parent=1 // pred_check_branch
      %4757 = sbr.rel (0) target = $region25
    $region24: #{tpu_custom_call.1} parent=1 // pred_region
      %s4759 = ssub.s32 32, 32
      %4760 = vsyncadd [#allocation4], %s4759
      %s4762 = sshll.u32 [#allocation7], 4
      %s4763 = int_to_ptr.vmem [resolvable:$true] %s4762
      %4765 = dma.vmem_to_hbm [thread:$0]  %s4763, 32, %s3, [#allocation4]
    $region25: #{tpu_custom_call.1} parent=1 // pred_fallthru
      _
    // Predicated region
    $region26: #{tpu_custom_call.1} parent=1 // pred_check
      _
    $region27: #{tpu_custom_call.1} parent=1 // pred_check_branch
      %4767 = sbr.rel (0) target = $region29
    $region28: #{tpu_custom_call.1} parent=1 // pred_region
      %4768 = dma.done [#allocation4], 32
    $region29: #{tpu_custom_call.1} parent=1 // pred_fallthru
      _
    %4769 = vsyncpa [#allocation3], 1
    %4770 = vsyncpa [#allocation6], 1
    %4771 = vsyncpa [#allocation4], 1

</llo_original>
